<compile_context>
chip_gen: v6e
topology: v6e:2x2x1
jax: 0.10.0
libtpu: 0.0.40
codegen_flags: <defaults>
</compile_context>

<pallas_src>
import functools

import jax
import jax.numpy as jnp
from jax.experimental import pallas as pl
from jax.experimental.pallas import tpu as pltpu


# ---------------------------------------------------------------------------
# Fused forward kernel
# ---------------------------------------------------------------------------
def _cnn_fused_kernel(x_ref, w1_ref, b1_ref, w2_ref, b2_ref, w3_ref, b3_ref,
                      wd1_ref, bd1_ref, wd2_ref, bd2_ref,
                      out_ref, h1_ref, h2_ref, flat_ref, *, tb):
    """One batch tile (tb images) end-to-end: all activations stay in VMEM."""
    w1 = w1_ref[...]
    b1 = b1_ref[...]
    w2 = w2_ref[...]
    b2 = b2_ref[...]
    w3 = w3_ref[...]
    b3 = b3_ref[...]

    for n in range(tb):
        # ---- conv1: (169, 9) @ (9, 32), bias + ReLU ------------------------
        c1 = jnp.dot(x_ref[0, n], w1, preferred_element_type=jnp.float32)
        h1_ref[...] = jnp.maximum(c1 + b1, 0.0).astype(h1_ref.dtype)

        # ---- conv2: 13x13x32 -> 6x6x64 (3x3, stride 2), fused im2col -------
        # h1 rows are ordered (h, even-w block [7 rows], odd-w block [6 rows]),
        # so every tap (i, j) of output row `oh` is a contiguous 6-row slice.
        for oh in range(6):
            taps = []
            for i in range(3):
                for j in range(3):
                    base = (2 * oh + i) * 13 + (7 + j // 2 if j % 2 else j // 2)
                    taps.append(h1_ref[base:base + 6, :])
            cols = jnp.concatenate(taps, axis=-1)                  # (6, 288)
            c2 = jnp.dot(cols, w2, preferred_element_type=jnp.float32)
            h2_ref[oh * 6:(oh + 1) * 6, :] = (
                jnp.maximum(c2 + b2, 0.0).astype(h2_ref.dtype))

        # ---- conv3: 6x6x64 -> 2x2x128, fused im2col + (h, w, c) flatten ----
        feats = []
        for oh3 in range(2):
            for ow3 in range(2):
                taps = []
                for i in range(3):
                    for j in range(3):
                        r = (2 * oh3 + i) * 6 + (2 * ow3 + j)
                        taps.append(h2_ref[r:r + 1, :])
                cols = jnp.concatenate(taps, axis=-1)              # (1, 576)
                c3 = jnp.dot(cols, w3, preferred_element_type=jnp.float32)
                feats.append(jnp.maximum(c3 + b3, 0.0))            # (1, 128)
        flat_ref[n:n + 1, :] = (
            jnp.concatenate(feats, axis=-1).astype(flat_ref.dtype))  # (1, 512)

    # ---- dense head: Linear(512->512)+ReLU, Linear(512->num_class) --------
    # TODO(synk): train-mode Dropout(0.2) not implemented (identity at inference).
    h = jnp.dot(flat_ref[...], wd1_ref[...], preferred_element_type=jnp.float32)
    h = jnp.maximum(h + bd1_ref[...], 0.0)
    logits = jnp.dot(h.astype(wd2_ref.dtype), wd2_ref[...],
                     preferred_element_type=jnp.float32)
    out_ref[0] = (logits + bd2_ref[...]).astype(out_ref.dtype)


def _pick_batch_tile(n, tb_max=8):
    # Ensure >=2 grid steps whenever n >= 2 (keeps both v7x TensorCores busy).
    return max(1, min(tb_max, n // 2))


def cnn_forward(kp, x, num_class=10, tb_max=8):
    """x: (N, 1, 28, 28) float32 NCHW.  Returns (N, num_class) float32 logits."""
    n = x.shape[0]
    # C == 1, so NCHW -> (N, H, W) is a pure reshape (no transpose).
    xi = x.reshape(n, 28, 28).astype(jnp.bfloat16)

    # conv1 im2col in the wrapper (tiny, unpadded: (N, 169, 9) bf16).  Output
    # positions are ordered (h, even-w, odd-w) so the in-kernel stride-2 taps
    # of conv2 become contiguous slices.
    taps = [xi[:, i:i + 26:2, j:j + 26:2] for i in range(3) for j in range(3)]
    cols1 = jnp.stack(taps, axis=-1)                                # (N,13,13,9)
    w_order = jnp.array([0, 2, 4, 6, 8, 10, 12, 1, 3, 5, 7, 9, 11], jnp.int32)
    cols1 = cols1[:, :, w_order, :].reshape(n, 169, 9)

    tb = _pick_batch_tile(n, tb_max)
    g = pl.cdiv(n, tb)
    n_pad = g * tb
    if n_pad != n:
        cols1 = jnp.pad(cols1, ((0, n_pad - n), (0, 0), (0, 0)))
    cols1 = cols1.reshape(g, tb, 169, 9)

    flops = 2 * n_pad * (169 * 9 * 32 + 36 * 288 * 64 + 4 * 576 * 128
                         + 512 * 512 + 512 * num_class)
    bytes_acc = int(cols1.size) * 2 + n_pad * num_class * 4 + sum(
        int(v.size) * v.dtype.itemsize for v in kp.values())

    out = pl.pallas_call(
        functools.partial(_cnn_fused_kernel, tb=tb),
        out_shape=jax.ShapeDtypeStruct((g, tb, num_class), jnp.float32),
        grid=(g,),
        in_specs=[
            pl.BlockSpec((1, tb, 169, 9), lambda i: (i, 0, 0, 0)),   # cols1
            pl.BlockSpec((9, 32), lambda i: (0, 0)),                 # conv1 w
            pl.BlockSpec((1, 32), lambda i: (0, 0)),                 # conv1 b
            pl.BlockSpec((288, 64), lambda i: (0, 0)),               # conv2 w
            pl.BlockSpec((1, 64), lambda i: (0, 0)),                 # conv2 b
            pl.BlockSpec((576, 128), lambda i: (0, 0)),              # conv3 w
            pl.BlockSpec((1, 128), lambda i: (0, 0)),                # conv3 b
            pl.BlockSpec((512, 512), lambda i: (0, 0)),              # dense1 w
            pl.BlockSpec((1, 512), lambda i: (0, 0)),                # dense1 b
            pl.BlockSpec((512, num_class), lambda i: (0, 0)),        # dense2 w
            pl.BlockSpec((1, num_class), lambda i: (0, 0)),          # dense2 b
        ],
        out_specs=pl.BlockSpec((1, tb, num_class), lambda i: (i, 0, 0)),
        scratch_shapes=[
            pltpu.VMEM((169, 32), jnp.bfloat16),   # conv1 activation (1 image)
            pltpu.VMEM((36, 64), jnp.bfloat16),    # conv2 activation (1 image)
            pltpu.VMEM((tb, 512), jnp.bfloat16),   # flattened conv features
        ],
        compiler_params=pltpu.CompilerParams(dimension_semantics=("parallel",)),
        cost_estimate=pl.CostEstimate(flops=flops, transcendentals=0,
                                      bytes_accessed=bytes_acc),
    )(cols1, kp["c1_w"], kp["c1_b"], kp["c2_w"], kp["c2_b"],
      kp["c3_w"], kp["c3_b"], kp["d1_w"], kp["d1_b"], kp["d2_w"], kp["d2_b"])

    return out.reshape(n_pad, num_class)[:n]


# ---------------------------------------------------------------------------
# Parameters: PyTorch-layout init + one-time conversion to kernel layout
# ---------------------------------------------------------------------------
def init_params(key, num_class=10):
    ks = jax.random.split(key, 10)

    def conv_w(k, oc, ic, kh, kw):
        fan_in = ic * kh * kw
        return jax.random.normal(k, (oc, ic, kh, kw), jnp.float32) / jnp.sqrt(fan_in)

    def lin_w(k, out, inp):
        return jax.random.normal(k, (out, inp), jnp.float32) / jnp.sqrt(inp)

    return {
        "c1_w": conv_w(ks[0], 32, 1, 3, 3),
        "c1_b": jax.random.normal(ks[1], (32,), jnp.float32) * 0.01,
        "c2_w": conv_w(ks[2], 64, 32, 3, 3),
        "c2_b": jax.random.normal(ks[3], (64,), jnp.float32) * 0.01,
        "c3_w": conv_w(ks[4], 128, 64, 3, 3),
        "c3_b": jax.random.normal(ks[5], (128,), jnp.float32) * 0.01,
        "d1_w": lin_w(ks[6], 512, 128 * 2 * 2),
        "d1_b": jax.random.normal(ks[7], (512,), jnp.float32) * 0.01,
        "d2_w": lin_w(ks[8], num_class, 512),
        "d2_b": jax.random.normal(ks[9], (num_class,), jnp.float32) * 0.01,
    }


def prepare_params(p):
    """One-time conversion: conv weights -> (kh*kw*ic, oc) with K order
    (kh, kw, ic); linear weights pre-transposed (flatten order permuted);
    bf16 matmul operands, f32 (1, C) biases.  No zero padding anywhere."""
    def conv(w, b):
        oc, ic, kh, kw = w.shape
        wt = jnp.transpose(w, (2, 3, 1, 0)).reshape(kh * kw * ic, oc)
        return wt.astype(jnp.bfloat16), b.reshape(1, oc).astype(jnp.float32)

    c1_w, c1_b = conv(p["c1_w"], p["c1_b"])
    c2_w, c2_b = conv(p["c2_w"], p["c2_b"])
    c3_w, c3_b = conv(p["c3_w"], p["c3_b"])

    # d1: PyTorch flatten order is (c, h, w); the kernel flattens (h, w, c).
    d1_w = (p["d1_w"].reshape(512, 128, 2, 2).transpose(0, 2, 3, 1)
            .reshape(512, 512).T.astype(jnp.bfloat16))
    d1_b = p["d1_b"].reshape(1, 512).astype(jnp.float32)
    nc = p["d2_w"].shape[0]
    d2_w = p["d2_w"].T.astype(jnp.bfloat16)
    d2_b = p["d2_b"].reshape(1, nc).astype(jnp.float32)

    return {"c1_w": c1_w, "c1_b": c1_b, "c2_w": c2_w, "c2_b": c2_b,
            "c3_w": c3_w, "c3_b": c3_b, "d1_w": d1_w, "d1_b": d1_b,
            "d2_w": d2_w, "d2_b": d2_b}


# ---------------------------------------------------------------------------
# Pure-JAX f32 reference (PyTorch semantics)
# ---------------------------------------------------------------------------
def cnn_reference(p, x):
    out = x
    for wn, bn in (("c1_w", "c1_b"), ("c2_w", "c2_b"), ("c3_w", "c3_b")):
        out = jax.lax.conv_general_dilated(
            out, p[wn], window_strides=(2, 2), padding="VALID",
            dimension_numbers=("NCHW", "OIHW", "NCHW"))
        out = jnp.maximum(out + p[bn][None, :, None, None], 0.0)
    out = out.reshape(out.shape[0], -1)
    out = jnp.maximum(out @ p["d1_w"].T + p["d1_b"], 0.0)
    return out @ p["d2_w"].T + p["d2_b"]


if __name__ == "__main__":
    num_class = 10
    key = jax.random.PRNGKey(0)
    kx, kp = jax.random.split(key)
    # FashionMNIST geometry: three stride-2 valid 3x3 convs need 28x28x1 input
    # (28 -> 13 -> 6 -> 2, flatten = 512).
    x = jax.random.normal(kx, (2, 1, 28, 28), jnp.float32)

    params = init_params(kp, num_class)
    kparams = prepare_params(params)

    fwd = jax.jit(functools.partial(cnn_forward, num_class=num_class))
    logits = fwd(kparams, x)
    jax.block_until_ready(logits)

    assert logits.shape == (2, num_class) and logits.dtype == jnp.float32
    assert bool(jnp.all(jnp.isfinite(logits)))
    ref = cnn_reference(params, x)
    assert float(jnp.max(jnp.abs(logits - ref))) < 0.25   # bf16-MXU tolerance
    print("KERNEL_OK")
</pallas_src>

<mosaic_0001>
module attributes {stable_mosaic.version = 11 : i64} {
  func.func @_cnn_fused_kernel(%arg0: i32, %arg1: memref<1x1x169x9xbf16, #tpu.memory_space<vmem>>, %arg2: memref<9x32xbf16, #tpu.memory_space<vmem>>, %arg3: memref<1x32xf32, #tpu.memory_space<vmem>>, %arg4: memref<288x64xbf16, #tpu.memory_space<vmem>>, %arg5: memref<1x64xf32, #tpu.memory_space<vmem>>, %arg6: memref<576x128xbf16, #tpu.memory_space<vmem>>, %arg7: memref<1x128xf32, #tpu.memory_space<vmem>>, %arg8: memref<512x512xbf16, #tpu.memory_space<vmem>>, %arg9: memref<1x512xf32, #tpu.memory_space<vmem>>, %arg10: memref<512x10xbf16, #tpu.memory_space<vmem>>, %arg11: memref<1x10xf32, #tpu.memory_space<vmem>>, %arg12: memref<1x1x10xf32, #tpu.memory_space<vmem>>, %arg13: memref<169x32xbf16, #tpu.memory_space<vmem>>, %arg14: memref<36x64xbf16, #tpu.memory_space<vmem>>, %arg15: memref<1x512xbf16, #tpu.memory_space<vmem>>) attributes {dimension_semantics = [#tpu.dimension_semantics<parallel>], iteration_bounds = array<i64: 2>, scalar_prefetch = 0 : i64, scratch_operands = 3 : i64, tpu.core_type = #tpu.core_type<tc>, window_params = [{transform_indices = @transform_0, window_bounds = array<i64: 1, 1, 169, 9>}, {pipeline_mode = #tpu.pipeline_mode<synchronous>, transform_indices = @transform_1, window_bounds = array<i64: 9, 32>}, {pipeline_mode = #tpu.pipeline_mode<synchronous>, transform_indices = @transform_2, window_bounds = array<i64: 1, 32>}, {pipeline_mode = #tpu.pipeline_mode<synchronous>, transform_indices = @transform_3, window_bounds = array<i64: 288, 64>}, {pipeline_mode = #tpu.pipeline_mode<synchronous>, transform_indices = @transform_4, window_bounds = array<i64: 1, 64>}, {pipeline_mode = #tpu.pipeline_mode<synchronous>, transform_indices = @transform_5, window_bounds = array<i64: 576, 128>}, {pipeline_mode = #tpu.pipeline_mode<synchronous>, transform_indices = @transform_6, window_bounds = array<i64: 1, 128>}, {pipeline_mode = #tpu.pipeline_mode<synchronous>, transform_indices = @transform_7, window_bounds = array<i64: 512, 512>}, {pipeline_mode = #tpu.pipeline_mode<synchronous>, transform_indices = @transform_8, window_bounds = array<i64: 1, 512>}, {pipeline_mode = #tpu.pipeline_mode<synchronous>, transform_indices = @transform_9, window_bounds = array<i64: 512, 10>}, {pipeline_mode = #tpu.pipeline_mode<synchronous>, transform_indices = @transform_10, window_bounds = array<i64: 1, 10>}, {transform_indices = @transform_11, window_bounds = array<i64: 1, 1, 10>}]} {
    %c0 = arith.constant 0 : index
    %c0_0 = arith.constant 0 : index
    %0 = vector.load %arg2[%c0, %c0_0] : memref<9x32xbf16, #tpu.memory_space<vmem>>, vector<9x32xbf16>
    %c0_1 = arith.constant 0 : index
    %c0_2 = arith.constant 0 : index
    %1 = vector.load %arg3[%c0_1, %c0_2] : memref<1x32xf32, #tpu.memory_space<vmem>>, vector<1x32xf32>
    %c0_3 = arith.constant 0 : index
    %c0_4 = arith.constant 0 : index
    %2 = vector.load %arg4[%c0_3, %c0_4] : memref<288x64xbf16, #tpu.memory_space<vmem>>, vector<288x64xbf16>
    %c0_5 = arith.constant 0 : index
    %c0_6 = arith.constant 0 : index
    %3 = vector.load %arg5[%c0_5, %c0_6] : memref<1x64xf32, #tpu.memory_space<vmem>>, vector<1x64xf32>
    %c0_7 = arith.constant 0 : index
    %c0_8 = arith.constant 0 : index
    %4 = vector.load %arg6[%c0_7, %c0_8] : memref<576x128xbf16, #tpu.memory_space<vmem>>, vector<576x128xbf16>
    %c0_9 = arith.constant 0 : index
    %c0_10 = arith.constant 0 : index
    %5 = vector.load %arg7[%c0_9, %c0_10] : memref<1x128xf32, #tpu.memory_space<vmem>>, vector<1x128xf32>
    %c0_11 = arith.constant 0 : index
    %c0_12 = arith.constant 0 : index
    %c0_13 = arith.constant 0 : index
    %c0_14 = arith.constant 0 : index
    %6 = vector.load %arg1[%c0_11, %c0_12, %c0_13, %c0_14] : memref<1x1x169x9xbf16, #tpu.memory_space<vmem>>, vector<1x1x169x9xbf16>
    %7 = vector.shape_cast %6 : vector<1x1x169x9xbf16> to vector<169x9xbf16>
    %cst = arith.constant dense<0.000000e+00> : vector<169x32xf32>
    %8 = tpu.matmul %7, %0, %cst {dimension_numbers = #tpu.dot_dimension_numbers<[1], [0], [0], [1], [0, 0, 1, 1], [], []>} : vector<169x9xbf16>, vector<9x32xbf16>, vector<169x32xf32> -> vector<169x32xf32>
    %9 = vector.broadcast %1 : vector<1x32xf32> to vector<169x32xf32>
    %10 = arith.addf %8, %9 : vector<169x32xf32>
    %cst_15 = arith.constant 0.000000e+00 : f32
    %11 = vector.broadcast %cst_15 : f32 to vector<169x32xf32>
    %12 = arith.maximumf %10, %11 : vector<169x32xf32>
    %13 = arith.truncf %12 : vector<169x32xf32> to vector<169x32xbf16>
    %c0_16 = arith.constant 0 : index
    %c0_17 = arith.constant 0 : index
    %14 = vector.load %arg13[%c0_16, %c0_17] : memref<169x32xbf16, #tpu.memory_space<vmem>>, vector<169x32xbf16>
    tpu.vector_store %arg13[%c0_16, %c0_17], %13 {strides = array<i32>} : memref<169x32xbf16, #tpu.memory_space<vmem>>, vector<169x32xbf16>,
    %c0_18 = arith.constant 0 : index
    %c0_19 = arith.constant 0 : index
    %15 = vector.load %arg13[%c0_18, %c0_19] : memref<169x32xbf16, #tpu.memory_space<vmem>>, vector<6x32xbf16>
    %c7 = arith.constant 7 : index
    %c0_20 = arith.constant 0 : index
    %16 = vector.load %arg13[%c7, %c0_20] : memref<169x32xbf16, #tpu.memory_space<vmem>>, vector<6x32xbf16>
    %c1 = arith.constant 1 : index
    %c0_21 = arith.constant 0 : index
    %17 = vector.load %arg13[%c1, %c0_21] : memref<169x32xbf16, #tpu.memory_space<vmem>>, vector<6x32xbf16>
    %c13 = arith.constant 13 : index
    %c0_22 = arith.constant 0 : index
    %18 = vector.load %arg13[%c13, %c0_22] : memref<169x32xbf16, #tpu.memory_space<vmem>>, vector<6x32xbf16>
    %c20 = arith.constant 20 : index
    %c0_23 = arith.constant 0 : index
    %19 = vector.load %arg13[%c20, %c0_23] : memref<169x32xbf16, #tpu.memory_space<vmem>>, vector<6x32xbf16>
    %c14 = arith.constant 14 : index
    %c0_24 = arith.constant 0 : index
    %20 = vector.load %arg13[%c14, %c0_24] : memref<169x32xbf16, #tpu.memory_space<vmem>>, vector<6x32xbf16>
    %c26 = arith.constant 26 : index
    %c0_25 = arith.constant 0 : index
    %21 = vector.load %arg13[%c26, %c0_25] : memref<169x32xbf16, #tpu.memory_space<vmem>>, vector<6x32xbf16>
    %c33 = arith.constant 33 : index
    %c0_26 = arith.constant 0 : index
    %22 = vector.load %arg13[%c33, %c0_26] : memref<169x32xbf16, #tpu.memory_space<vmem>>, vector<6x32xbf16>
    %c27 = arith.constant 27 : index
    %c0_27 = arith.constant 0 : index
    %23 = vector.load %arg13[%c27, %c0_27] : memref<169x32xbf16, #tpu.memory_space<vmem>>, vector<6x32xbf16>
    %24 = tpu.concatenate %15, %16, %17, %18, %19, %20, %21, %22, %23 in 1 : vector<6x32xbf16>, vector<6x32xbf16>, vector<6x32xbf16>, vector<6x32xbf16>, vector<6x32xbf16>, vector<6x32xbf16>, vector<6x32xbf16>, vector<6x32xbf16>, vector<6x32xbf16> -> vector<6x288xbf16>
    %cst_28 = arith.constant dense<0.000000e+00> : vector<6x64xf32>
    %25 = tpu.matmul %24, %2, %cst_28 {dimension_numbers = #tpu.dot_dimension_numbers<[1], [0], [0], [1], [0, 0, 1, 1], [], []>} : vector<6x288xbf16>, vector<288x64xbf16>, vector<6x64xf32> -> vector<6x64xf32>
    %26 = vector.broadcast %3 : vector<1x64xf32> to vector<6x64xf32>
    %27 = arith.addf %25, %26 : vector<6x64xf32>
    %cst_29 = arith.constant 0.000000e+00 : f32
    %28 = vector.broadcast %cst_29 : f32 to vector<6x64xf32>
    %29 = arith.maximumf %27, %28 : vector<6x64xf32>
    %30 = arith.truncf %29 : vector<6x64xf32> to vector<6x64xbf16>
    %c0_30 = arith.constant 0 : index
    %c0_31 = arith.constant 0 : index
    %31 = vector.load %arg14[%c0_30, %c0_31] : memref<36x64xbf16, #tpu.memory_space<vmem>>, vector<6x64xbf16>
    tpu.vector_store %arg14[%c0_30, %c0_31], %30 {strides = array<i32>} : memref<36x64xbf16, #tpu.memory_space<vmem>>, vector<6x64xbf16>,
    %c26_32 = arith.constant 26 : index
    %c0_33 = arith.constant 0 : index
    %32 = vector.load %arg13[%c26_32, %c0_33] : memref<169x32xbf16, #tpu.memory_space<vmem>>, vector<6x32xbf16>
    %c33_34 = arith.constant 33 : index
    %c0_35 = arith.constant 0 : index
    %33 = vector.load %arg13[%c33_34, %c0_35] : memref<169x32xbf16, #tpu.memory_space<vmem>>, vector<6x32xbf16>
    %c27_36 = arith.constant 27 : index
    %c0_37 = arith.constant 0 : index
    %34 = vector.load %arg13[%c27_36, %c0_37] : memref<169x32xbf16, #tpu.memory_space<vmem>>, vector<6x32xbf16>
    %c39 = arith.constant 39 : index
    %c0_38 = arith.constant 0 : index
    %35 = vector.load %arg13[%c39, %c0_38] : memref<169x32xbf16, #tpu.memory_space<vmem>>, vector<6x32xbf16>
    %c46 = arith.constant 46 : index
    %c0_39 = arith.constant 0 : index
    %36 = vector.load %arg13[%c46, %c0_39] : memref<169x32xbf16, #tpu.memory_space<vmem>>, vector<6x32xbf16>
    %c40 = arith.constant 40 : index
    %c0_40 = arith.constant 0 : index
    %37 = vector.load %arg13[%c40, %c0_40] : memref<169x32xbf16, #tpu.memory_space<vmem>>, vector<6x32xbf16>
    %c52 = arith.constant 52 : index
    %c0_41 = arith.constant 0 : index
    %38 = vector.load %arg13[%c52, %c0_41] : memref<169x32xbf16, #tpu.memory_space<vmem>>, vector<6x32xbf16>
    %c59 = arith.constant 59 : index
    %c0_42 = arith.constant 0 : index
    %39 = vector.load %arg13[%c59, %c0_42] : memref<169x32xbf16, #tpu.memory_space<vmem>>, vector<6x32xbf16>
    %c53 = arith.constant 53 : index
    %c0_43 = arith.constant 0 : index
    %40 = vector.load %arg13[%c53, %c0_43] : memref<169x32xbf16, #tpu.memory_space<vmem>>, vector<6x32xbf16>
    %41 = tpu.concatenate %32, %33, %34, %35, %36, %37, %38, %39, %40 in 1 : vector<6x32xbf16>, vector<6x32xbf16>, vector<6x32xbf16>, vector<6x32xbf16>, vector<6x32xbf16>, vector<6x32xbf16>, vector<6x32xbf16>, vector<6x32xbf16>, vector<6x32xbf16> -> vector<6x288xbf16>
    %cst_44 = arith.constant dense<0.000000e+00> : vector<6x64xf32>
    %42 = tpu.matmul %41, %2, %cst_44 {dimension_numbers = #tpu.dot_dimension_numbers<[1], [0], [0], [1], [0, 0, 1, 1], [], []>} : vector<6x288xbf16>, vector<288x64xbf16>, vector<6x64xf32> -> vector<6x64xf32>
    %43 = vector.broadcast %3 : vector<1x64xf32> to vector<6x64xf32>
    %44 = arith.addf %42, %43 : vector<6x64xf32>
    %cst_45 = arith.constant 0.000000e+00 : f32
    %45 = vector.broadcast %cst_45 : f32 to vector<6x64xf32>
    %46 = arith.maximumf %44, %45 : vector<6x64xf32>
    %47 = arith.truncf %46 : vector<6x64xf32> to vector<6x64xbf16>
    %c6 = arith.constant 6 : index
    %c0_46 = arith.constant 0 : index
    %48 = vector.load %arg14[%c6, %c0_46] : memref<36x64xbf16, #tpu.memory_space<vmem>>, vector<6x64xbf16>
    tpu.vector_store %arg14[%c6, %c0_46], %47 {strides = array<i32>} : memref<36x64xbf16, #tpu.memory_space<vmem>>, vector<6x64xbf16>,
    %c52_47 = arith.constant 52 : index
    %c0_48 = arith.constant 0 : index
    %49 = vector.load %arg13[%c52_47, %c0_48] : memref<169x32xbf16, #tpu.memory_space<vmem>>, vector<6x32xbf16>
    %c59_49 = arith.constant 59 : index
    %c0_50 = arith.constant 0 : index
    %50 = vector.load %arg13[%c59_49, %c0_50] : memref<169x32xbf16, #tpu.memory_space<vmem>>, vector<6x32xbf16>
    %c53_51 = arith.constant 53 : index
    %c0_52 = arith.constant 0 : index
    %51 = vector.load %arg13[%c53_51, %c0_52] : memref<169x32xbf16, #tpu.memory_space<vmem>>, vector<6x32xbf16>
    %c65 = arith.constant 65 : index
    %c0_53 = arith.constant 0 : index
    %52 = vector.load %arg13[%c65, %c0_53] : memref<169x32xbf16, #tpu.memory_space<vmem>>, vector<6x32xbf16>
    %c72 = arith.constant 72 : index
    %c0_54 = arith.constant 0 : index
    %53 = vector.load %arg13[%c72, %c0_54] : memref<169x32xbf16, #tpu.memory_space<vmem>>, vector<6x32xbf16>
    %c66 = arith.constant 66 : index
    %c0_55 = arith.constant 0 : index
    %54 = vector.load %arg13[%c66, %c0_55] : memref<169x32xbf16, #tpu.memory_space<vmem>>, vector<6x32xbf16>
    %c78 = arith.constant 78 : index
    %c0_56 = arith.constant 0 : index
    %55 = vector.load %arg13[%c78, %c0_56] : memref<169x32xbf16, #tpu.memory_space<vmem>>, vector<6x32xbf16>
    %c85 = arith.constant 85 : index
    %c0_57 = arith.constant 0 : index
    %56 = vector.load %arg13[%c85, %c0_57] : memref<169x32xbf16, #tpu.memory_space<vmem>>, vector<6x32xbf16>
    %c79 = arith.constant 79 : index
    %c0_58 = arith.constant 0 : index
    %57 = vector.load %arg13[%c79, %c0_58] : memref<169x32xbf16, #tpu.memory_space<vmem>>, vector<6x32xbf16>
    %58 = tpu.concatenate %49, %50, %51, %52, %53, %54, %55, %56, %57 in 1 : vector<6x32xbf16>, vector<6x32xbf16>, vector<6x32xbf16>, vector<6x32xbf16>, vector<6x32xbf16>, vector<6x32xbf16>, vector<6x32xbf16>, vector<6x32xbf16>, vector<6x32xbf16> -> vector<6x288xbf16>
    %cst_59 = arith.constant dense<0.000000e+00> : vector<6x64xf32>
    %59 = tpu.matmul %58, %2, %cst_59 {dimension_numbers = #tpu.dot_dimension_numbers<[1], [0], [0], [1], [0, 0, 1, 1], [], []>} : vector<6x288xbf16>, vector<288x64xbf16>, vector<6x64xf32> -> vector<6x64xf32>
    %60 = vector.broadcast %3 : vector<1x64xf32> to vector<6x64xf32>
    %61 = arith.addf %59, %60 : vector<6x64xf32>
    %cst_60 = arith.constant 0.000000e+00 : f32
    %62 = vector.broadcast %cst_60 : f32 to vector<6x64xf32>
    %63 = arith.maximumf %61, %62 : vector<6x64xf32>
    %64 = arith.truncf %63 : vector<6x64xf32> to vector<6x64xbf16>
    %c12 = arith.constant 12 : index
    %c0_61 = arith.constant 0 : index
    %65 = vector.load %arg14[%c12, %c0_61] : memref<36x64xbf16, #tpu.memory_space<vmem>>, vector<6x64xbf16>
    tpu.vector_store %arg14[%c12, %c0_61], %64 {strides = array<i32>} : memref<36x64xbf16, #tpu.memory_space<vmem>>, vector<6x64xbf16>,
    %c78_62 = arith.constant 78 : index
    %c0_63 = arith.constant 0 : index
    %66 = vector.load %arg13[%c78_62, %c0_63] : memref<169x32xbf16, #tpu.memory_space<vmem>>, vector<6x32xbf16>
    %c85_64 = arith.constant 85 : index
    %c0_65 = arith.constant 0 : index
    %67 = vector.load %arg13[%c85_64, %c0_65] : memref<169x32xbf16, #tpu.memory_space<vmem>>, vector<6x32xbf16>
    %c79_66 = arith.constant 79 : index
    %c0_67 = arith.constant 0 : index
    %68 = vector.load %arg13[%c79_66, %c0_67] : memref<169x32xbf16, #tpu.memory_space<vmem>>, vector<6x32xbf16>
    %c91 = arith.constant 91 : index
    %c0_68 = arith.constant 0 : index
    %69 = vector.load %arg13[%c91, %c0_68] : memref<169x32xbf16, #tpu.memory_space<vmem>>, vector<6x32xbf16>
    %c98 = arith.constant 98 : index
    %c0_69 = arith.constant 0 : index
    %70 = vector.load %arg13[%c98, %c0_69] : memref<169x32xbf16, #tpu.memory_space<vmem>>, vector<6x32xbf16>
    %c92 = arith.constant 92 : index
    %c0_70 = arith.constant 0 : index
    %71 = vector.load %arg13[%c92, %c0_70] : memref<169x32xbf16, #tpu.memory_space<vmem>>, vector<6x32xbf16>
    %c104 = arith.constant 104 : index
    %c0_71 = arith.constant 0 : index
    %72 = vector.load %arg13[%c104, %c0_71] : memref<169x32xbf16, #tpu.memory_space<vmem>>, vector<6x32xbf16>
    %c111 = arith.constant 111 : index
    %c0_72 = arith.constant 0 : index
    %73 = vector.load %arg13[%c111, %c0_72] : memref<169x32xbf16, #tpu.memory_space<vmem>>, vector<6x32xbf16>
    %c105 = arith.constant 105 : index
    %c0_73 = arith.constant 0 : index
    %74 = vector.load %arg13[%c105, %c0_73] : memref<169x32xbf16, #tpu.memory_space<vmem>>, vector<6x32xbf16>
    %75 = tpu.concatenate %66, %67, %68, %69, %70, %71, %72, %73, %74 in 1 : vector<6x32xbf16>, vector<6x32xbf16>, vector<6x32xbf16>, vector<6x32xbf16>, vector<6x32xbf16>, vector<6x32xbf16>, vector<6x32xbf16>, vector<6x32xbf16>, vector<6x32xbf16> -> vector<6x288xbf16>
    %cst_74 = arith.constant dense<0.000000e+00> : vector<6x64xf32>
    %76 = tpu.matmul %75, %2, %cst_74 {dimension_numbers = #tpu.dot_dimension_numbers<[1], [0], [0], [1], [0, 0, 1, 1], [], []>} : vector<6x288xbf16>, vector<288x64xbf16>, vector<6x64xf32> -> vector<6x64xf32>
    %77 = vector.broadcast %3 : vector<1x64xf32> to vector<6x64xf32>
    %78 = arith.addf %76, %77 : vector<6x64xf32>
    %cst_75 = arith.constant 0.000000e+00 : f32
    %79 = vector.broadcast %cst_75 : f32 to vector<6x64xf32>
    %80 = arith.maximumf %78, %79 : vector<6x64xf32>
    %81 = arith.truncf %80 : vector<6x64xf32> to vector<6x64xbf16>
    %c18 = arith.constant 18 : index
    %c0_76 = arith.constant 0 : index
    %82 = vector.load %arg14[%c18, %c0_76] : memref<36x64xbf16, #tpu.memory_space<vmem>>, vector<6x64xbf16>
    tpu.vector_store %arg14[%c18, %c0_76], %81 {strides = array<i32>} : memref<36x64xbf16, #tpu.memory_space<vmem>>, vector<6x64xbf16>,
    %c104_77 = arith.constant 104 : index
    %c0_78 = arith.constant 0 : index
    %83 = vector.load %arg13[%c104_77, %c0_78] : memref<169x32xbf16, #tpu.memory_space<vmem>>, vector<6x32xbf16>
    %c111_79 = arith.constant 111 : index
    %c0_80 = arith.constant 0 : index
    %84 = vector.load %arg13[%c111_79, %c0_80] : memref<169x32xbf16, #tpu.memory_space<vmem>>, vector<6x32xbf16>
    %c105_81 = arith.constant 105 : index
    %c0_82 = arith.constant 0 : index
    %85 = vector.load %arg13[%c105_81, %c0_82] : memref<169x32xbf16, #tpu.memory_space<vmem>>, vector<6x32xbf16>
    %c117 = arith.constant 117 : index
    %c0_83 = arith.constant 0 : index
    %86 = vector.load %arg13[%c117, %c0_83] : memref<169x32xbf16, #tpu.memory_space<vmem>>, vector<6x32xbf16>
    %c124 = arith.constant 124 : index
    %c0_84 = arith.constant 0 : index
    %87 = vector.load %arg13[%c124, %c0_84] : memref<169x32xbf16, #tpu.memory_space<vmem>>, vector<6x32xbf16>
    %c118 = arith.constant 118 : index
    %c0_85 = arith.constant 0 : index
    %88 = vector.load %arg13[%c118, %c0_85] : memref<169x32xbf16, #tpu.memory_space<vmem>>, vector<6x32xbf16>
    %c130 = arith.constant 130 : index
    %c0_86 = arith.constant 0 : index
    %89 = vector.load %arg13[%c130, %c0_86] : memref<169x32xbf16, #tpu.memory_space<vmem>>, vector<6x32xbf16>
    %c137 = arith.constant 137 : index
    %c0_87 = arith.constant 0 : index
    %90 = vector.load %arg13[%c137, %c0_87] : memref<169x32xbf16, #tpu.memory_space<vmem>>, vector<6x32xbf16>
    %c131 = arith.constant 131 : index
    %c0_88 = arith.constant 0 : index
    %91 = vector.load %arg13[%c131, %c0_88] : memref<169x32xbf16, #tpu.memory_space<vmem>>, vector<6x32xbf16>
    %92 = tpu.concatenate %83, %84, %85, %86, %87, %88, %89, %90, %91 in 1 : vector<6x32xbf16>, vector<6x32xbf16>, vector<6x32xbf16>, vector<6x32xbf16>, vector<6x32xbf16>, vector<6x32xbf16>, vector<6x32xbf16>, vector<6x32xbf16>, vector<6x32xbf16> -> vector<6x288xbf16>
    %cst_89 = arith.constant dense<0.000000e+00> : vector<6x64xf32>
    %93 = tpu.matmul %92, %2, %cst_89 {dimension_numbers = #tpu.dot_dimension_numbers<[1], [0], [0], [1], [0, 0, 1, 1], [], []>} : vector<6x288xbf16>, vector<288x64xbf16>, vector<6x64xf32> -> vector<6x64xf32>
    %94 = vector.broadcast %3 : vector<1x64xf32> to vector<6x64xf32>
    %95 = arith.addf %93, %94 : vector<6x64xf32>
    %cst_90 = arith.constant 0.000000e+00 : f32
    %96 = vector.broadcast %cst_90 : f32 to vector<6x64xf32>
    %97 = arith.maximumf %95, %96 : vector<6x64xf32>
    %98 = arith.truncf %97 : vector<6x64xf32> to vector<6x64xbf16>
    %c24 = arith.constant 24 : index
    %c0_91 = arith.constant 0 : index
    %99 = vector.load %arg14[%c24, %c0_91] : memref<36x64xbf16, #tpu.memory_space<vmem>>, vector<6x64xbf16>
    tpu.vector_store %arg14[%c24, %c0_91], %98 {strides = array<i32>} : memref<36x64xbf16, #tpu.memory_space<vmem>>, vector<6x64xbf16>,
    %c130_92 = arith.constant 130 : index
    %c0_93 = arith.constant 0 : index
    %100 = vector.load %arg13[%c130_92, %c0_93] : memref<169x32xbf16, #tpu.memory_space<vmem>>, vector<6x32xbf16>
    %c137_94 = arith.constant 137 : index
    %c0_95 = arith.constant 0 : index
    %101 = vector.load %arg13[%c137_94, %c0_95] : memref<169x32xbf16, #tpu.memory_space<vmem>>, vector<6x32xbf16>
    %c131_96 = arith.constant 131 : index
    %c0_97 = arith.constant 0 : index
    %102 = vector.load %arg13[%c131_96, %c0_97] : memref<169x32xbf16, #tpu.memory_space<vmem>>, vector<6x32xbf16>
    %c143 = arith.constant 143 : index
    %c0_98 = arith.constant 0 : index
    %103 = vector.load %arg13[%c143, %c0_98] : memref<169x32xbf16, #tpu.memory_space<vmem>>, vector<6x32xbf16>
    %c150 = arith.constant 150 : index
    %c0_99 = arith.constant 0 : index
    %104 = vector.load %arg13[%c150, %c0_99] : memref<169x32xbf16, #tpu.memory_space<vmem>>, vector<6x32xbf16>
    %c144 = arith.constant 144 : index
    %c0_100 = arith.constant 0 : index
    %105 = vector.load %arg13[%c144, %c0_100] : memref<169x32xbf16, #tpu.memory_space<vmem>>, vector<6x32xbf16>
    %c156 = arith.constant 156 : index
    %c0_101 = arith.constant 0 : index
    %106 = vector.load %arg13[%c156, %c0_101] : memref<169x32xbf16, #tpu.memory_space<vmem>>, vector<6x32xbf16>
    %c163 = arith.constant 163 : index
    %c0_102 = arith.constant 0 : index
    %107 = vector.load %arg13[%c163, %c0_102] : memref<169x32xbf16, #tpu.memory_space<vmem>>, vector<6x32xbf16>
    %c157 = arith.constant 157 : index
    %c0_103 = arith.constant 0 : index
    %108 = vector.load %arg13[%c157, %c0_103] : memref<169x32xbf16, #tpu.memory_space<vmem>>, vector<6x32xbf16>
    %109 = tpu.concatenate %100, %101, %102, %103, %104, %105, %106, %107, %108 in 1 : vector<6x32xbf16>, vector<6x32xbf16>, vector<6x32xbf16>, vector<6x32xbf16>, vector<6x32xbf16>, vector<6x32xbf16>, vector<6x32xbf16>, vector<6x32xbf16>, vector<6x32xbf16> -> vector<6x288xbf16>
    %cst_104 = arith.constant dense<0.000000e+00> : vector<6x64xf32>
    %110 = tpu.matmul %109, %2, %cst_104 {dimension_numbers = #tpu.dot_dimension_numbers<[1], [0], [0], [1], [0, 0, 1, 1], [], []>} : vector<6x288xbf16>, vector<288x64xbf16>, vector<6x64xf32> -> vector<6x64xf32>
    %111 = vector.broadcast %3 : vector<1x64xf32> to vector<6x64xf32>
    %112 = arith.addf %110, %111 : vector<6x64xf32>
    %cst_105 = arith.constant 0.000000e+00 : f32
    %113 = vector.broadcast %cst_105 : f32 to vector<6x64xf32>
    %114 = arith.maximumf %112, %113 : vector<6x64xf32>
    %115 = arith.truncf %114 : vector<6x64xf32> to vector<6x64xbf16>
    %c30 = arith.constant 30 : index
    %c0_106 = arith.constant 0 : index
    %116 = vector.load %arg14[%c30, %c0_106] : memref<36x64xbf16, #tpu.memory_space<vmem>>, vector<6x64xbf16>
    tpu.vector_store %arg14[%c30, %c0_106], %115 {strides = array<i32>} : memref<36x64xbf16, #tpu.memory_space<vmem>>, vector<6x64xbf16>,
    %c0_107 = arith.constant 0 : index
    %c0_108 = arith.constant 0 : index
    %117 = vector.load %arg14[%c0_107, %c0_108] : memref<36x64xbf16, #tpu.memory_space<vmem>>, vector<1x64xbf16>
    %c1_109 = arith.constant 1 : index
    %c0_110 = arith.constant 0 : index
    %118 = vector.load %arg14[%c1_109, %c0_110] : memref<36x64xbf16, #tpu.memory_space<vmem>>, vector<1x64xbf16>
    %c2 = arith.constant 2 : index
    %c0_111 = arith.constant 0 : index
    %119 = vector.load %arg14[%c2, %c0_111] : memref<36x64xbf16, #tpu.memory_space<vmem>>, vector<1x64xbf16>
    %c6_112 = arith.constant 6 : index
    %c0_113 = arith.constant 0 : index
    %120 = vector.load %arg14[%c6_112, %c0_113] : memref<36x64xbf16, #tpu.memory_space<vmem>>, vector<1x64xbf16>
    %c7_114 = arith.constant 7 : index
    %c0_115 = arith.constant 0 : index
    %121 = vector.load %arg14[%c7_114, %c0_115] : memref<36x64xbf16, #tpu.memory_space<vmem>>, vector<1x64xbf16>
    %c8 = arith.constant 8 : index
    %c0_116 = arith.constant 0 : index
    %122 = vector.load %arg14[%c8, %c0_116] : memref<36x64xbf16, #tpu.memory_space<vmem>>, vector<1x64xbf16>
    %c12_117 = arith.constant 12 : index
    %c0_118 = arith.constant 0 : index
    %123 = vector.load %arg14[%c12_117, %c0_118] : memref<36x64xbf16, #tpu.memory_space<vmem>>, vector<1x64xbf16>
    %c13_119 = arith.constant 13 : index
    %c0_120 = arith.constant 0 : index
    %124 = vector.load %arg14[%c13_119, %c0_120] : memref<36x64xbf16, #tpu.memory_space<vmem>>, vector<1x64xbf16>
    %c14_121 = arith.constant 14 : index
    %c0_122 = arith.constant 0 : index
    %125 = vector.load %arg14[%c14_121, %c0_122] : memref<36x64xbf16, #tpu.memory_space<vmem>>, vector<1x64xbf16>
    %126 = tpu.concatenate %117, %118, %119, %120, %121, %122, %123, %124, %125 in 1 : vector<1x64xbf16>, vector<1x64xbf16>, vector<1x64xbf16>, vector<1x64xbf16>, vector<1x64xbf16>, vector<1x64xbf16>, vector<1x64xbf16>, vector<1x64xbf16>, vector<1x64xbf16> -> vector<1x576xbf16>
    %cst_123 = arith.constant dense<0.000000e+00> : vector<1x128xf32>
    %127 = tpu.matmul %126, %4, %cst_123 {dimension_numbers = #tpu.dot_dimension_numbers<[1], [0], [0], [1], [0, 0, 1, 1], [], []>} : vector<1x576xbf16>, vector<576x128xbf16>, vector<1x128xf32> -> vector<1x128xf32>
    %128 = arith.addf %127, %5 : vector<1x128xf32>
    %cst_124 = arith.constant 0.000000e+00 : f32
    %129 = vector.broadcast %cst_124 : f32 to vector<1x128xf32>
    %130 = arith.maximumf %128, %129 : vector<1x128xf32>
    %c2_125 = arith.constant 2 : index
    %c0_126 = arith.constant 0 : index
    %131 = vector.load %arg14[%c2_125, %c0_126] : memref<36x64xbf16, #tpu.memory_space<vmem>>, vector<1x64xbf16>
    %c3 = arith.constant 3 : index
    %c0_127 = arith.constant 0 : index
    %132 = vector.load %arg14[%c3, %c0_127] : memref<36x64xbf16, #tpu.memory_space<vmem>>, vector<1x64xbf16>
    %c4 = arith.constant 4 : index
    %c0_128 = arith.constant 0 : index
    %133 = vector.load %arg14[%c4, %c0_128] : memref<36x64xbf16, #tpu.memory_space<vmem>>, vector<1x64xbf16>
    %c8_129 = arith.constant 8 : index
    %c0_130 = arith.constant 0 : index
    %134 = vector.load %arg14[%c8_129, %c0_130] : memref<36x64xbf16, #tpu.memory_space<vmem>>, vector<1x64xbf16>
    %c9 = arith.constant 9 : index
    %c0_131 = arith.constant 0 : index
    %135 = vector.load %arg14[%c9, %c0_131] : memref<36x64xbf16, #tpu.memory_space<vmem>>, vector<1x64xbf16>
    %c10 = arith.constant 10 : index
    %c0_132 = arith.constant 0 : index
    %136 = vector.load %arg14[%c10, %c0_132] : memref<36x64xbf16, #tpu.memory_space<vmem>>, vector<1x64xbf16>
    %c14_133 = arith.constant 14 : index
    %c0_134 = arith.constant 0 : index
    %137 = vector.load %arg14[%c14_133, %c0_134] : memref<36x64xbf16, #tpu.memory_space<vmem>>, vector<1x64xbf16>
    %c15 = arith.constant 15 : index
    %c0_135 = arith.constant 0 : index
    %138 = vector.load %arg14[%c15, %c0_135] : memref<36x64xbf16, #tpu.memory_space<vmem>>, vector<1x64xbf16>
    %c16 = arith.constant 16 : index
    %c0_136 = arith.constant 0 : index
    %139 = vector.load %arg14[%c16, %c0_136] : memref<36x64xbf16, #tpu.memory_space<vmem>>, vector<1x64xbf16>
    %140 = tpu.concatenate %131, %132, %133, %134, %135, %136, %137, %138, %139 in 1 : vector<1x64xbf16>, vector<1x64xbf16>, vector<1x64xbf16>, vector<1x64xbf16>, vector<1x64xbf16>, vector<1x64xbf16>, vector<1x64xbf16>, vector<1x64xbf16>, vector<1x64xbf16> -> vector<1x576xbf16>
    %cst_137 = arith.constant dense<0.000000e+00> : vector<1x128xf32>
    %141 = tpu.matmul %140, %4, %cst_137 {dimension_numbers = #tpu.dot_dimension_numbers<[1], [0], [0], [1], [0, 0, 1, 1], [], []>} : vector<1x576xbf16>, vector<576x128xbf16>, vector<1x128xf32> -> vector<1x128xf32>
    %142 = arith.addf %141, %5 : vector<1x128xf32>
    %cst_138 = arith.constant 0.000000e+00 : f32
    %143 = vector.broadcast %cst_138 : f32 to vector<1x128xf32>
    %144 = arith.maximumf %142, %143 : vector<1x128xf32>
    %c12_139 = arith.constant 12 : index
    %c0_140 = arith.constant 0 : index
    %145 = vector.load %arg14[%c12_139, %c0_140] : memref<36x64xbf16, #tpu.memory_space<vmem>>, vector<1x64xbf16>
    %c13_141 = arith.constant 13 : index
    %c0_142 = arith.constant 0 : index
    %146 = vector.load %arg14[%c13_141, %c0_142] : memref<36x64xbf16, #tpu.memory_space<vmem>>, vector<1x64xbf16>
    %c14_143 = arith.constant 14 : index
    %c0_144 = arith.constant 0 : index
    %147 = vector.load %arg14[%c14_143, %c0_144] : memref<36x64xbf16, #tpu.memory_space<vmem>>, vector<1x64xbf16>
    %c18_145 = arith.constant 18 : index
    %c0_146 = arith.constant 0 : index
    %148 = vector.load %arg14[%c18_145, %c0_146] : memref<36x64xbf16, #tpu.memory_space<vmem>>, vector<1x64xbf16>
    %c19 = arith.constant 19 : index
    %c0_147 = arith.constant 0 : index
    %149 = vector.load %arg14[%c19, %c0_147] : memref<36x64xbf16, #tpu.memory_space<vmem>>, vector<1x64xbf16>
    %c20_148 = arith.constant 20 : index
    %c0_149 = arith.constant 0 : index
    %150 = vector.load %arg14[%c20_148, %c0_149] : memref<36x64xbf16, #tpu.memory_space<vmem>>, vector<1x64xbf16>
    %c24_150 = arith.constant 24 : index
    %c0_151 = arith.constant 0 : index
    %151 = vector.load %arg14[%c24_150, %c0_151] : memref<36x64xbf16, #tpu.memory_space<vmem>>, vector<1x64xbf16>
    %c25 = arith.constant 25 : index
    %c0_152 = arith.constant 0 : index
    %152 = vector.load %arg14[%c25, %c0_152] : memref<36x64xbf16, #tpu.memory_space<vmem>>, vector<1x64xbf16>
    %c26_153 = arith.constant 26 : index
    %c0_154 = arith.constant 0 : index
    %153 = vector.load %arg14[%c26_153, %c0_154] : memref<36x64xbf16, #tpu.memory_space<vmem>>, vector<1x64xbf16>
    %154 = tpu.concatenate %145, %146, %147, %148, %149, %150, %151, %152, %153 in 1 : vector<1x64xbf16>, vector<1x64xbf16>, vector<1x64xbf16>, vector<1x64xbf16>, vector<1x64xbf16>, vector<1x64xbf16>, vector<1x64xbf16>, vector<1x64xbf16>, vector<1x64xbf16> -> vector<1x576xbf16>
    %cst_155 = arith.constant dense<0.000000e+00> : vector<1x128xf32>
    %155 = tpu.matmul %154, %4, %cst_155 {dimension_numbers = #tpu.dot_dimension_numbers<[1], [0], [0], [1], [0, 0, 1, 1], [], []>} : vector<1x576xbf16>, vector<576x128xbf16>, vector<1x128xf32> -> vector<1x128xf32>
    %156 = arith.addf %155, %5 : vector<1x128xf32>
    %cst_156 = arith.constant 0.000000e+00 : f32
    %157 = vector.broadcast %cst_156 : f32 to vector<1x128xf32>
    %158 = arith.maximumf %156, %157 : vector<1x128xf32>
    %c14_157 = arith.constant 14 : index
    %c0_158 = arith.constant 0 : index
    %159 = vector.load %arg14[%c14_157, %c0_158] : memref<36x64xbf16, #tpu.memory_space<vmem>>, vector<1x64xbf16>
    %c15_159 = arith.constant 15 : index
    %c0_160 = arith.constant 0 : index
    %160 = vector.load %arg14[%c15_159, %c0_160] : memref<36x64xbf16, #tpu.memory_space<vmem>>, vector<1x64xbf16>
    %c16_161 = arith.constant 16 : index
    %c0_162 = arith.constant 0 : index
    %161 = vector.load %arg14[%c16_161, %c0_162] : memref<36x64xbf16, #tpu.memory_space<vmem>>, vector<1x64xbf16>
    %c20_163 = arith.constant 20 : index
    %c0_164 = arith.constant 0 : index
    %162 = vector.load %arg14[%c20_163, %c0_164] : memref<36x64xbf16, #tpu.memory_space<vmem>>, vector<1x64xbf16>
    %c21 = arith.constant 21 : index
    %c0_165 = arith.constant 0 : index
    %163 = vector.load %arg14[%c21, %c0_165] : memref<36x64xbf16, #tpu.memory_space<vmem>>, vector<1x64xbf16>
    %c22 = arith.constant 22 : index
    %c0_166 = arith.constant 0 : index
    %164 = vector.load %arg14[%c22, %c0_166] : memref<36x64xbf16, #tpu.memory_space<vmem>>, vector<1x64xbf16>
    %c26_167 = arith.constant 26 : index
    %c0_168 = arith.constant 0 : index
    %165 = vector.load %arg14[%c26_167, %c0_168] : memref<36x64xbf16, #tpu.memory_space<vmem>>, vector<1x64xbf16>
    %c27_169 = arith.constant 27 : index
    %c0_170 = arith.constant 0 : index
    %166 = vector.load %arg14[%c27_169, %c0_170] : memref<36x64xbf16, #tpu.memory_space<vmem>>, vector<1x64xbf16>
    %c28 = arith.constant 28 : index
    %c0_171 = arith.constant 0 : index
    %167 = vector.load %arg14[%c28, %c0_171] : memref<36x64xbf16, #tpu.memory_space<vmem>>, vector<1x64xbf16>
    %168 = tpu.concatenate %159, %160, %161, %162, %163, %164, %165, %166, %167 in 1 : vector<1x64xbf16>, vector<1x64xbf16>, vector<1x64xbf16>, vector<1x64xbf16>, vector<1x64xbf16>, vector<1x64xbf16>, vector<1x64xbf16>, vector<1x64xbf16>, vector<1x64xbf16> -> vector<1x576xbf16>
    %cst_172 = arith.constant dense<0.000000e+00> : vector<1x128xf32>
    %169 = tpu.matmul %168, %4, %cst_172 {dimension_numbers = #tpu.dot_dimension_numbers<[1], [0], [0], [1], [0, 0, 1, 1], [], []>} : vector<1x576xbf16>, vector<576x128xbf16>, vector<1x128xf32> -> vector<1x128xf32>
    %170 = arith.addf %169, %5 : vector<1x128xf32>
    %cst_173 = arith.constant 0.000000e+00 : f32
    %171 = vector.broadcast %cst_173 : f32 to vector<1x128xf32>
    %172 = arith.maximumf %170, %171 : vector<1x128xf32>
    %173 = tpu.concatenate %130, %144, %158, %172 in 1 : vector<1x128xf32>, vector<1x128xf32>, vector<1x128xf32>, vector<1x128xf32> -> vector<1x512xf32>
    %174 = arith.truncf %173 : vector<1x512xf32> to vector<1x512xbf16>
    %c0_174 = arith.constant 0 : index
    %c0_175 = arith.constant 0 : index
    %175 = vector.load %arg15[%c0_174, %c0_175] : memref<1x512xbf16, #tpu.memory_space<vmem>>, vector<1x512xbf16>
    tpu.vector_store %arg15[%c0_174, %c0_175], %174 {strides = array<i32>} : memref<1x512xbf16, #tpu.memory_space<vmem>>, vector<1x512xbf16>,
    %c0_176 = arith.constant 0 : index
    %c0_177 = arith.constant 0 : index
    %176 = vector.load %arg15[%c0_176, %c0_177] : memref<1x512xbf16, #tpu.memory_space<vmem>>, vector<1x512xbf16>
    %c0_178 = arith.constant 0 : index
    %c0_179 = arith.constant 0 : index
    %177 = vector.load %arg8[%c0_178, %c0_179] : memref<512x512xbf16, #tpu.memory_space<vmem>>, vector<512x512xbf16>
    %cst_180 = arith.constant dense<0.000000e+00> : vector<1x512xf32>
    %178 = tpu.matmul %176, %177, %cst_180 {dimension_numbers = #tpu.dot_dimension_numbers<[1], [0], [0], [1], [0, 0, 1, 1], [], []>} : vector<1x512xbf16>, vector<512x512xbf16>, vector<1x512xf32> -> vector<1x512xf32>
    %c0_181 = arith.constant 0 : index
    %c0_182 = arith.constant 0 : index
    %179 = vector.load %arg9[%c0_181, %c0_182] : memref<1x512xf32, #tpu.memory_space<vmem>>, vector<1x512xf32>
    %180 = arith.addf %178, %179 : vector<1x512xf32>
    %cst_183 = arith.constant 0.000000e+00 : f32
    %181 = vector.broadcast %cst_183 : f32 to vector<1x512xf32>
    %182 = arith.maximumf %180, %181 : vector<1x512xf32>
    %183 = arith.truncf %182 : vector<1x512xf32> to vector<1x512xbf16>
    %c0_184 = arith.constant 0 : index
    %c0_185 = arith.constant 0 : index
    %184 = vector.load %arg10[%c0_184, %c0_185] : memref<512x10xbf16, #tpu.memory_space<vmem>>, vector<512x10xbf16>
    %cst_186 = arith.constant dense<0.000000e+00> : vector<1x10xf32>
    %185 = tpu.matmul %183, %184, %cst_186 {dimension_numbers = #tpu.dot_dimension_numbers<[1], [0], [0], [1], [0, 0, 1, 1], [], []>} : vector<1x512xbf16>, vector<512x10xbf16>, vector<1x10xf32> -> vector<1x10xf32>
    %c0_187 = arith.constant 0 : index
    %c0_188 = arith.constant 0 : index
    %186 = vector.load %arg11[%c0_187, %c0_188] : memref<1x10xf32, #tpu.memory_space<vmem>>, vector<1x10xf32>
    %187 = arith.addf %185, %186 : vector<1x10xf32>
    %c0_189 = arith.constant 0 : index
    %c0_190 = arith.constant 0 : index
    %c0_191 = arith.constant 0 : index
    %188 = vector.load %arg12[%c0_189, %c0_190, %c0_191] : memref<1x1x10xf32, #tpu.memory_space<vmem>>, vector<1x1x10xf32>
    %189 = vector.shape_cast %188 : vector<1x1x10xf32> to vector<1x10xf32>
    %190 = vector.shape_cast %187 : vector<1x10xf32> to vector<1x1x10xf32>
    tpu.vector_store %arg12[%c0_189, %c0_190, %c0_191], %190 {strides = array<i32>} : memref<1x1x10xf32, #tpu.memory_space<vmem>>, vector<1x1x10xf32>,
    return
  }
  func.func @transform_0(%arg0: i32) -> (i32, i32, i32, i32) {
    %c0_i32 = arith.constant 0 : i32
    %c0_i32_0 = arith.constant 0 : i32
    %c0_i32_1 = arith.constant 0 : i32
    %c0_i32_2 = arith.constant 0 : i32
    return %arg0, %c0_i32, %c0_i32_0, %c0_i32_1 : i32, i32, i32, i32
  }
  func.func @transform_1(%arg0: i32) -> (i32, i32) {
    %c0_i32 = arith.constant 0 : i32
    %c0_i32_0 = arith.constant 0 : i32
    %c0_i32_1 = arith.constant 0 : i32
    return %c0_i32, %c0_i32_0 : i32, i32
  }
  func.func @transform_2(%arg0: i32) -> (i32, i32) {
    %c0_i32 = arith.constant 0 : i32
    %c0_i32_0 = arith.constant 0 : i32
    %c0_i32_1 = arith.constant 0 : i32
    return %c0_i32, %c0_i32_0 : i32, i32
  }
  func.func @transform_3(%arg0: i32) -> (i32, i32) {
    %c0_i32 = arith.constant 0 : i32
    %c0_i32_0 = arith.constant 0 : i32
    %c0_i32_1 = arith.constant 0 : i32
    return %c0_i32, %c0_i32_0 : i32, i32
  }
  func.func @transform_4(%arg0: i32) -> (i32, i32) {
    %c0_i32 = arith.constant 0 : i32
    %c0_i32_0 = arith.constant 0 : i32
    %c0_i32_1 = arith.constant 0 : i32
    return %c0_i32, %c0_i32_0 : i32, i32
  }
  func.func @transform_5(%arg0: i32) -> (i32, i32) {
    %c0_i32 = arith.constant 0 : i32
    %c0_i32_0 = arith.constant 0 : i32
    %c0_i32_1 = arith.constant 0 : i32
    return %c0_i32, %c0_i32_0 : i32, i32
  }
  func.func @transform_6(%arg0: i32) -> (i32, i32) {
    %c0_i32 = arith.constant 0 : i32
    %c0_i32_0 = arith.constant 0 : i32
    %c0_i32_1 = arith.constant 0 : i32
    return %c0_i32, %c0_i32_0 : i32, i32
  }
  func.func @transform_7(%arg0: i32) -> (i32, i32) {
    %c0_i32 = arith.constant 0 : i32
    %c0_i32_0 = arith.constant 0 : i32
    %c0_i32_1 = arith.constant 0 : i32
    return %c0_i32, %c0_i32_0 : i32, i32
  }
  func.func @transform_8(%arg0: i32) -> (i32, i32) {
    %c0_i32 = arith.constant 0 : i32
    %c0_i32_0 = arith.constant 0 : i32
    %c0_i32_1 = arith.constant 0 : i32
    return %c0_i32, %c0_i32_0 : i32, i32
  }
  func.func @transform_9(%arg0: i32) -> (i32, i32) {
    %c0_i32 = arith.constant 0 : i32
    %c0_i32_0 = arith.constant 0 : i32
    %c0_i32_1 = arith.constant 0 : i32
    return %c0_i32, %c0_i32_0 : i32, i32
  }
  func.func @transform_10(%arg0: i32) -> (i32, i32) {
    %c0_i32 = arith.constant 0 : i32
    %c0_i32_0 = arith.constant 0 : i32
    %c0_i32_1 = arith.constant 0 : i32
    return %c0_i32, %c0_i32_0 : i32, i32
  }
  func.func @transform_11(%arg0: i32) -> (i32, i32, i32) {
    %c0_i32 = arith.constant 0 : i32
    %c0_i32_0 = arith.constant 0 : i32
    %c0_i32_1 = arith.constant 0 : i32
    return %arg0, %c0_i32, %c0_i32_0 : i32, i32, i32
  }
}

</mosaic_0001>

<llo_original>
// kernel: cnn_forward.1
$region0: #{cnn_forward.1}
  #allocation0 [shape = 'u32[]', space=smem, size = 0x4, offset = 0x4, fixed_abs, tag = 'smem constant byte address 0x4 - core index']
  #allocation1 [shape = 'u32[144,128]{1,0:T(1,128)}', space=vmem, size = 0x12000, scoped, tag = 'internal scratch']
  #allocation2 [shape = 'bf16[169,32]{1,0:T(8,128)(2,1)}', space=vmem, size = 0xb000, scoped, tag = 'scratch operand']
  #allocation3 [shape = 'bf16[36,64]{1,0:T(8,128)(2,1)}', space=vmem, size = 0x2800, scoped, tag = 'scratch operand']
  #allocation4 [shape = 'bf16[1,512]{1,0:T(2,128)(2,1)}', space=vmem, size = 0x800, scoped, tag = 'scratch operand']
  %s0 = inlined_call_operand.vmem [shape: bf16[2,1,169,9], index: 0, kind: input, shape index: {}]
  %s1 = inlined_call_operand.vmem [shape: bf16[9,32], index: 1, kind: input, shape index: {}]
  %s2 = inlined_call_operand.vmem [shape: f32[1,32], index: 2, kind: input, shape index: {}]
  %s3 = inlined_call_operand.vmem [shape: bf16[288,64], index: 3, kind: input, shape index: {}]
  %s4 = inlined_call_operand.vmem [shape: f32[1,64], index: 4, kind: input, shape index: {}]
  %s5 = inlined_call_operand.vmem [shape: bf16[576,128], index: 5, kind: input, shape index: {}]
  %s6 = inlined_call_operand.vmem [shape: f32[1,128], index: 6, kind: input, shape index: {}]
  %s7 = inlined_call_operand.vmem [shape: bf16[512,512], index: 7, kind: input, shape index: {}]
  %s8 = inlined_call_operand.vmem [shape: f32[1,512], index: 8, kind: input, shape index: {}]
  %s9 = inlined_call_operand.vmem [shape: bf16[512,10], index: 9, kind: input, shape index: {}]
  %s10 = inlined_call_operand.vmem [shape: f32[1,10], index: 10, kind: input, shape index: {}]
  %s11 = inlined_call_operand.hbm [shape: f32[2,1,10], index: 11, kind: output, shape index: {}]
  %s12 = sld [smem:[#allocation0]]
  $region77: #{cnn_forward.1} parent=0
    _
  %s14 = ssub.s32 1, %s12
  %s15 = scalar_select 0, %s14, %s12
  $region1: #{cnn_forward.1} parent=0
    #allocation5 [shape = 'u8[1024]{0}', space=vmem, size = 0x400, scoped, tag = 'output window, operand 0']
    #allocation6 [shape = 's32[2]{0}', space=sflag, size = 0x8, scoped, tag = 'scoped memory for cnn_forward.1']
    %16 = vsyncpa [#allocation6], 0
    %s17 = scalar_lea.sflag [#allocation6], 1
    %18 = vsyncpa %s17, 0
    loop: start=0, step=1, limit=4
    $region2: #{cnn_forward.1} parent=1 // loop_pre_header
      _
    $region3: #{cnn_forward.1} parent=1 // loop_header
      %s20 = sphi 0, %s24
      %p21 = scmp.ge.s32.totalorder %s20, 4
      %s30 = sphi 0, %s32
      %s33 = sphi 0, %s30
      %s34 = sphi 0, %s33
      %s50 = sphi 0, %s34
      %s54 = sphi 0, %s54
      %s56 = sphi 0, %s54
      %s57 = sphi 0, %s56
      %s71 = sphi 0, %s57
      %s75 = sphi 0, %s75
      %s77 = sphi 0, %s75
      %s78 = sphi 0, %s77
      %s92 = sphi 0, %s78
      %s96 = sphi 0, %s96
      %s98 = sphi 0, %s96
      %s99 = sphi 0, %s98
      %s113 = sphi 0, %s99
      %s117 = sphi 0, %s117
      %s119 = sphi 0, %s117
      %s120 = sphi 0, %s119
      %s134 = sphi 0, %s120
      %s138 = sphi 0, %s138
      %s140 = sphi 0, %s138
      %s141 = sphi 0, %s140
      %s155 = sphi 0, %s141
      %s159 = sphi 0, %s159
      %s161 = sphi 0, %s159
      %s162 = sphi 0, %s161
      %s176 = sphi 0, %s162
      %s180 = sphi 0, %s180
      %s182 = sphi 0, %s180
      %s183 = sphi 0, %s182
      %s197 = sphi 0, %s183
      %s201 = sphi 0, %s201
      %s203 = sphi 0, %s201
      %s204 = sphi 0, %s203
      %s218 = sphi 0, %s204
      %s222 = sphi 0, %s222
      %s224 = sphi 0, %s222
      %s225 = sphi 0, %s224
      %s239 = sphi 0, %s225
      %s243 = sphi 0, %s243
      %s245 = sphi 0, %s243
      %s246 = sphi 0, %s245
      %s260 = sphi 0, %s246
      %s266 = sphi 0, %s268
      %s269 = sphi 0, %s266
      %s270 = sphi 0, %s269
      %s286 = sphi 0, %s270
    $region4: #{cnn_forward.1} parent=1 // loop_header_branch
      %23 = sbr.rel (%p21) target = $region8
    $region5: #{cnn_forward.1} parent=1 // loop_body
      %s25 = ssub.s32 %s20, 1
      %s26 = ssub.s32 %s20, 2
      %s27 = sadd.s32 %s20, 1
      %s28 = ssub.s32 %s20, %s27
      %p29 = scmp.eq.s32.totalorder %s28, 0
      %s31 = sadd.s32 %s30, 1
      %s32 = scalar_select %p29, %s30, %s31
      %p35 = pneg %p29
      %p36 = scmp.eq.s32.totalorder %s20, 1
      %p37 = por %p35, %p36
      %p38 = scmp.ne.s32.totalorder %s30, %s33
      %p39 = scmp.eq.s32.totalorder %s20, 0
      %p40 = por %p38, %p39
      %p41 = scmp.ne.s32.totalorder %s30, %s33
      %p42 = scmp.eq.s32.totalorder %s25, 1
      %p43 = por %p41, %p42
      %p44 = scmp.ne.s32.totalorder %s33, %s34
      %p45 = scmp.eq.s32.totalorder %s25, 0
      %p46 = por %p44, %p45
      %p47 = scmp.ne.s32.totalorder %s33, %s34
      %p48 = scmp.eq.s32.totalorder %s26, 1
      %p49 = por %p47, %p48
      %p51 = scmp.ne.s32.totalorder %s34, %s50
      %p52 = scmp.eq.s32.totalorder %s26, 0
      %p53 = por %p51, %p52
      %s55 = sadd.s32 %s54, 1
      %p58 = scmp.eq.s32.totalorder %s20, 1
      %p59 = scmp.ne.s32.totalorder %s54, %s56
      %p60 = scmp.eq.s32.totalorder %s20, 0
      %p61 = por %p59, %p60
      %p62 = scmp.ne.s32.totalorder %s54, %s56
      %p63 = scmp.eq.s32.totalorder %s25, 1
      %p64 = por %p62, %p63
      %p65 = scmp.ne.s32.totalorder %s56, %s57
      %p66 = scmp.eq.s32.totalorder %s25, 0
      %p67 = por %p65, %p66
      %p68 = scmp.ne.s32.totalorder %s56, %s57
      %p69 = scmp.eq.s32.totalorder %s26, 1
      %p70 = por %p68, %p69
      %p72 = scmp.ne.s32.totalorder %s57, %s71
      %p73 = scmp.eq.s32.totalorder %s26, 0
      %p74 = por %p72, %p73
      %s76 = sadd.s32 %s75, 1
      %p79 = scmp.eq.s32.totalorder %s20, 1
      %p80 = scmp.ne.s32.totalorder %s75, %s77
      %p81 = scmp.eq.s32.totalorder %s20, 0
      %p82 = por %p80, %p81
      %p83 = scmp.ne.s32.totalorder %s75, %s77
      %p84 = scmp.eq.s32.totalorder %s25, 1
      %p85 = por %p83, %p84
      %p86 = scmp.ne.s32.totalorder %s77, %s78
      %p87 = scmp.eq.s32.totalorder %s25, 0
      %p88 = por %p86, %p87
      %p89 = scmp.ne.s32.totalorder %s77, %s78
      %p90 = scmp.eq.s32.totalorder %s26, 1
      %p91 = por %p89, %p90
      %p93 = scmp.ne.s32.totalorder %s78, %s92
      %p94 = scmp.eq.s32.totalorder %s26, 0
      %p95 = por %p93, %p94
      %s97 = sadd.s32 %s96, 1
      %p100 = scmp.eq.s32.totalorder %s20, 1
      %p101 = scmp.ne.s32.totalorder %s96, %s98
      %p102 = scmp.eq.s32.totalorder %s20, 0
      %p103 = por %p101, %p102
      %p104 = scmp.ne.s32.totalorder %s96, %s98
      %p105 = scmp.eq.s32.totalorder %s25, 1
      %p106 = por %p104, %p105
      %p107 = scmp.ne.s32.totalorder %s98, %s99
      %p108 = scmp.eq.s32.totalorder %s25, 0
      %p109 = por %p107, %p108
      %p110 = scmp.ne.s32.totalorder %s98, %s99
      %p111 = scmp.eq.s32.totalorder %s26, 1
      %p112 = por %p110, %p111
      %p114 = scmp.ne.s32.totalorder %s99, %s113
      %p115 = scmp.eq.s32.totalorder %s26, 0
      %p116 = por %p114, %p115
      %s118 = sadd.s32 %s117, 1
      %p121 = scmp.eq.s32.totalorder %s20, 1
      %p122 = scmp.ne.s32.totalorder %s117, %s119
      %p123 = scmp.eq.s32.totalorder %s20, 0
      %p124 = por %p122, %p123
      %p125 = scmp.ne.s32.totalorder %s117, %s119
      %p126 = scmp.eq.s32.totalorder %s25, 1
      %p127 = por %p125, %p126
      %p128 = scmp.ne.s32.totalorder %s119, %s120
      %p129 = scmp.eq.s32.totalorder %s25, 0
      %p130 = por %p128, %p129
      %p131 = scmp.ne.s32.totalorder %s119, %s120
      %p132 = scmp.eq.s32.totalorder %s26, 1
      %p133 = por %p131, %p132
      %p135 = scmp.ne.s32.totalorder %s120, %s134
      %p136 = scmp.eq.s32.totalorder %s26, 0
      %p137 = por %p135, %p136
      %s139 = sadd.s32 %s138, 1
      %p142 = scmp.eq.s32.totalorder %s20, 1
      %p143 = scmp.ne.s32.totalorder %s138, %s140
      %p144 = scmp.eq.s32.totalorder %s20, 0
      %p145 = por %p143, %p144
      %p146 = scmp.ne.s32.totalorder %s138, %s140
      %p147 = scmp.eq.s32.totalorder %s25, 1
      %p148 = por %p146, %p147
      %p149 = scmp.ne.s32.totalorder %s140, %s141
      %p150 = scmp.eq.s32.totalorder %s25, 0
      %p151 = por %p149, %p150
      %p152 = scmp.ne.s32.totalorder %s140, %s141
      %p153 = scmp.eq.s32.totalorder %s26, 1
      %p154 = por %p152, %p153
      %p156 = scmp.ne.s32.totalorder %s141, %s155
      %p157 = scmp.eq.s32.totalorder %s26, 0
      %p158 = por %p156, %p157
      %s160 = sadd.s32 %s159, 1
      %p163 = scmp.eq.s32.totalorder %s20, 1
      %p164 = scmp.ne.s32.totalorder %s159, %s161
      %p165 = scmp.eq.s32.totalorder %s20, 0
      %p166 = por %p164, %p165
      %p167 = scmp.ne.s32.totalorder %s159, %s161
      %p168 = scmp.eq.s32.totalorder %s25, 1
      %p169 = por %p167, %p168
      %p170 = scmp.ne.s32.totalorder %s161, %s162
      %p171 = scmp.eq.s32.totalorder %s25, 0
      %p172 = por %p170, %p171
      %p173 = scmp.ne.s32.totalorder %s161, %s162
      %p174 = scmp.eq.s32.totalorder %s26, 1
      %p175 = por %p173, %p174
      %p177 = scmp.ne.s32.totalorder %s162, %s176
      %p178 = scmp.eq.s32.totalorder %s26, 0
      %p179 = por %p177, %p178
      %s181 = sadd.s32 %s180, 1
      %p184 = scmp.eq.s32.totalorder %s20, 1
      %p185 = scmp.ne.s32.totalorder %s180, %s182
      %p186 = scmp.eq.s32.totalorder %s20, 0
      %p187 = por %p185, %p186
      %p188 = scmp.ne.s32.totalorder %s180, %s182
      %p189 = scmp.eq.s32.totalorder %s25, 1
      %p190 = por %p188, %p189
      %p191 = scmp.ne.s32.totalorder %s182, %s183
      %p192 = scmp.eq.s32.totalorder %s25, 0
      %p193 = por %p191, %p192
      %p194 = scmp.ne.s32.totalorder %s182, %s183
      %p195 = scmp.eq.s32.totalorder %s26, 1
      %p196 = por %p194, %p195
      %p198 = scmp.ne.s32.totalorder %s183, %s197
      %p199 = scmp.eq.s32.totalorder %s26, 0
      %p200 = por %p198, %p199
      %s202 = sadd.s32 %s201, 1
      %p205 = scmp.eq.s32.totalorder %s20, 1
      %p206 = scmp.ne.s32.totalorder %s201, %s203
      %p207 = scmp.eq.s32.totalorder %s20, 0
      %p208 = por %p206, %p207
      %p209 = scmp.ne.s32.totalorder %s201, %s203
      %p210 = scmp.eq.s32.totalorder %s25, 1
      %p211 = por %p209, %p210
      %p212 = scmp.ne.s32.totalorder %s203, %s204
      %p213 = scmp.eq.s32.totalorder %s25, 0
      %p214 = por %p212, %p213
      %p215 = scmp.ne.s32.totalorder %s203, %s204
      %p216 = scmp.eq.s32.totalorder %s26, 1
      %p217 = por %p215, %p216
      %p219 = scmp.ne.s32.totalorder %s204, %s218
      %p220 = scmp.eq.s32.totalorder %s26, 0
      %p221 = por %p219, %p220
      %s223 = sadd.s32 %s222, 1
      %p226 = scmp.eq.s32.totalorder %s20, 1
      %p227 = scmp.ne.s32.totalorder %s222, %s224
      %p228 = scmp.eq.s32.totalorder %s20, 0
      %p229 = por %p227, %p228
      %p230 = scmp.ne.s32.totalorder %s222, %s224
      %p231 = scmp.eq.s32.totalorder %s25, 1
      %p232 = por %p230, %p231
      %p233 = scmp.ne.s32.totalorder %s224, %s225
      %p234 = scmp.eq.s32.totalorder %s25, 0
      %p235 = por %p233, %p234
      %p236 = scmp.ne.s32.totalorder %s224, %s225
      %p237 = scmp.eq.s32.totalorder %s26, 1
      %p238 = por %p236, %p237
      %p240 = scmp.ne.s32.totalorder %s225, %s239
      %p241 = scmp.eq.s32.totalorder %s26, 0
      %p242 = por %p240, %p241
      %s244 = sadd.s32 %s243, 1
      %p247 = scmp.eq.s32.totalorder %s20, 1
      %p248 = scmp.ne.s32.totalorder %s243, %s245
      %p249 = scmp.eq.s32.totalorder %s20, 0
      %p250 = por %p248, %p249
      %p251 = scmp.ne.s32.totalorder %s243, %s245
      %p252 = scmp.eq.s32.totalorder %s25, 1
      %p253 = por %p251, %p252
      %p254 = scmp.ne.s32.totalorder %s245, %s246
      %p255 = scmp.eq.s32.totalorder %s25, 0
      %p256 = por %p254, %p255
      %p257 = scmp.ne.s32.totalorder %s245, %s246
      %p258 = scmp.eq.s32.totalorder %s26, 1
      %p259 = por %p257, %p258
      %p261 = scmp.ne.s32.totalorder %s246, %s260
      %p262 = scmp.eq.s32.totalorder %s26, 0
      %p263 = por %p261, %p262
      %s264 = ssub.s32 %s20, %s27
      %p265 = scmp.eq.s32.totalorder %s264, 0
      %s267 = sadd.s32 %s266, 1
      %s268 = scalar_select %p265, %s266, %s267
      %p271 = pneg %p265
      %p272 = scmp.eq.s32.totalorder %s20, 1
      %p273 = por %p271, %p272
      %p274 = scmp.ne.s32.totalorder %s266, %s269
      %p275 = scmp.eq.s32.totalorder %s20, 0
      %p276 = por %p274, %p275
      %p277 = scmp.ne.s32.totalorder %s266, %s269
      %p278 = scmp.eq.s32.totalorder %s25, 1
      %p279 = por %p277, %p278
      %p280 = scmp.ne.s32.totalorder %s269, %s270
      %p281 = scmp.eq.s32.totalorder %s25, 0
      %p282 = por %p280, %p281
      %p283 = scmp.ne.s32.totalorder %s269, %s270
      %p284 = scmp.eq.s32.totalorder %s26, 1
      %p285 = por %p283, %p284
      %p287 = scmp.ne.s32.totalorder %s270, %s286
      %p288 = scmp.eq.s32.totalorder %s26, 0
      %p289 = por %p287, %p288
      %p290 = scmp.le.s32.totalorder 1, %s20
      %p291 = scmp.lt.s32.totalorder %s20, 3
      %p292 = pnand %p290, %p291
      %p293 = pneg %p292
      // Predicated region
      $region9: #{cnn_forward.1} parent=5 // pred_check
        _
      $region10: #{cnn_forward.1} parent=5 // pred_check_branch
        %295 = sbr.rel (%p292) target = $region12
      $region11: #{cnn_forward.1} parent=5 // pred_region
        %s296 = ssub.s32 %s20, 1
        // Predicated region
        $region13: #{cnn_forward.1} parent=11 // pred_check
          %p297 = pneg %p67
        $region14: #{cnn_forward.1} parent=11 // pred_check_branch
          %299 = sbr.rel (%p297) target = $region16
        $region15: #{cnn_forward.1} parent=11 // pred_region
          _
        $region16: #{cnn_forward.1} parent=11 // pred_fallthru
          _
        // Predicated region
        $region17: #{cnn_forward.1} parent=11 // pred_check
          %p300 = pneg %p88
        $region18: #{cnn_forward.1} parent=11 // pred_check_branch
          %302 = sbr.rel (%p300) target = $region20
        $region19: #{cnn_forward.1} parent=11 // pred_region
          _
        $region20: #{cnn_forward.1} parent=11 // pred_fallthru
          _
        // Predicated region
        $region21: #{cnn_forward.1} parent=11 // pred_check
          %p303 = pneg %p109
        $region22: #{cnn_forward.1} parent=11 // pred_check_branch
          %305 = sbr.rel (%p303) target = $region24
        $region23: #{cnn_forward.1} parent=11 // pred_region
          _
        $region24: #{cnn_forward.1} parent=11 // pred_fallthru
          _
        // Predicated region
        $region25: #{cnn_forward.1} parent=11 // pred_check
          %p306 = pneg %p130
        $region26: #{cnn_forward.1} parent=11 // pred_check_branch
          %308 = sbr.rel (%p306) target = $region28
        $region27: #{cnn_forward.1} parent=11 // pred_region
          _
        $region28: #{cnn_forward.1} parent=11 // pred_fallthru
          _
        // Predicated region
        $region29: #{cnn_forward.1} parent=11 // pred_check
          %p309 = pneg %p151
        $region30: #{cnn_forward.1} parent=11 // pred_check_branch
          %311 = sbr.rel (%p309) target = $region32
        $region31: #{cnn_forward.1} parent=11 // pred_region
          _
        $region32: #{cnn_forward.1} parent=11 // pred_fallthru
          _
        // Predicated region
        $region33: #{cnn_forward.1} parent=11 // pred_check
          %p312 = pneg %p172
        $region34: #{cnn_forward.1} parent=11 // pred_check_branch
          %314 = sbr.rel (%p312) target = $region36
        $region35: #{cnn_forward.1} parent=11 // pred_region
          _
        $region36: #{cnn_forward.1} parent=11 // pred_fallthru
          _
        // Predicated region
        $region37: #{cnn_forward.1} parent=11 // pred_check
          %p315 = pneg %p193
        $region38: #{cnn_forward.1} parent=11 // pred_check_branch
          %317 = sbr.rel (%p315) target = $region40
        $region39: #{cnn_forward.1} parent=11 // pred_region
          _
        $region40: #{cnn_forward.1} parent=11 // pred_fallthru
          _
        // Predicated region
        $region41: #{cnn_forward.1} parent=11 // pred_check
          %p318 = pneg %p214
        $region42: #{cnn_forward.1} parent=11 // pred_check_branch
          %320 = sbr.rel (%p318) target = $region44
        $region43: #{cnn_forward.1} parent=11 // pred_region
          _
        $region44: #{cnn_forward.1} parent=11 // pred_fallthru
          _
        // Predicated region
        $region45: #{cnn_forward.1} parent=11 // pred_check
          %p321 = pneg %p235
        $region46: #{cnn_forward.1} parent=11 // pred_check_branch
          %323 = sbr.rel (%p321) target = $region48
        $region47: #{cnn_forward.1} parent=11 // pred_region
          _
        $region48: #{cnn_forward.1} parent=11 // pred_fallthru
          _
        // Predicated region
        $region49: #{cnn_forward.1} parent=11 // pred_check
          %p324 = pneg %p256
        $region50: #{cnn_forward.1} parent=11 // pred_check_branch
          %326 = sbr.rel (%p324) target = $region52
        $region51: #{cnn_forward.1} parent=11 // pred_region
          _
        $region52: #{cnn_forward.1} parent=11 // pred_fallthru
          _
      $region12: #{cnn_forward.1} parent=5 // pred_fallthru
        _
      %p327 = scmp.lt.s32.totalorder %s20, 2
      // Predicated region
      $region53: #{cnn_forward.1} parent=5 // pred_check
        %p328 = pneg %p327
      $region54: #{cnn_forward.1} parent=5 // pred_check_branch
        %330 = sbr.rel (%p328) target = $region56
      $region55: #{cnn_forward.1} parent=5 // pred_region
        // Predicated region
        $region57: #{cnn_forward.1} parent=55 // pred_check
          %p331 = pneg %p40
        $region58: #{cnn_forward.1} parent=55 // pred_check_branch
          %333 = sbr.rel (%p331) target = $region60
        $region59: #{cnn_forward.1} parent=55 // pred_region
          %p334 = scmp.lt.s32.totalorder %s20, 1
          %s335 = scalar_select %p334, %s20, 1
          %s336 = smul.addr %s335, 22
          %s337 = smul.addr %s336, 4
          %s338 = scalar_lea.vmem %s0, %s337
        $region60: #{cnn_forward.1} parent=55 // pred_fallthru
          _
      $region56: #{cnn_forward.1} parent=5 // pred_fallthru
        _
      %p339 = scmp.le.s32.totalorder 1, %s20
      %p340 = scmp.lt.s32.totalorder %s20, 3
      %p341 = pnand %p339, %p340
      %p342 = pneg %p341
      // Predicated region
      $region61: #{cnn_forward.1} parent=5 // pred_check
        _
      $region62: #{cnn_forward.1} parent=5 // pred_check_branch
        %344 = sbr.rel (%p341) target = $region64
      $region63: #{cnn_forward.1} parent=5 // pred_region
        %s345 = ssub.s32 %s20, 1
        %p346 = scmp.lt.s32.totalorder %s25, 1
        %s347 = scalar_select %p346, %s25, 1
        %s348 = smul.addr %s347, 22
        %s349 = smul.addr %s348, 4
        %s350 = scalar_lea.vmem %s0, %s349
        %p351 = pneg %p46
        %p352 = pneg %p43
        %p353 = pneg %p67
        %p354 = pneg %p64
        %p355 = pneg %p88
        %p356 = pneg %p85
        %p357 = pneg %p109
        %p358 = pneg %p106
        %p359 = pneg %p130
        %p360 = pneg %p127
        %p361 = pneg %p151
        %p362 = pneg %p148
        %p363 = pneg %p172
        %p364 = pneg %p169
        %p365 = pneg %p193
        %p366 = pneg %p190
        %p367 = pneg %p214
        %p368 = pneg %p211
        %p369 = pneg %p235
        %p370 = pneg %p232
        %p371 = pneg %p256
        %p372 = pneg %p253
        %p373 = pneg %p282
        %p374 = pneg %p279
        %s375 = sand.u32 %s269, 1
        %s376 = scalar_lea.sflag [#allocation6], %s375
        %s377 = sand.u32 %s269, 1
        %s378 = scalar_lea.vmem [#allocation5], %s377
        %p379 = scmp.lt.s32.totalorder %s25, 1
        %s380 = scalar_select %p379, %s25, 1
        %s381 = smul.addr %s380, 22
        %s382 = smul.addr %s381, 4
        %s383 = scalar_lea.vmem %s0, %s382
        %v385 = vld [vmem:[%s1] sm:$0xf]
        %v386 = vld [vmem:[%s1 + $0x4] sm:$0x1]
        %v387 = vld [vmem:[%s2] sm:$0x1]
        %v388 = vld [vmem:[%s3] sm:$0xf]
        %v389 = vld [vmem:[%s3 + $0x4] sm:$0xf]
        %v390 = vld [vmem:[%s3 + $0x8] sm:$0xf]
        %v391 = vld [vmem:[%s3 + $0xc] sm:$0xf]
        %v392 = vld [vmem:[%s3 + $0x10] sm:$0xf]
        %v393 = vld [vmem:[%s3 + $0x14] sm:$0xf]
        %v394 = vld [vmem:[%s3 + $0x18] sm:$0xf]
        %v395 = vld [vmem:[%s3 + $0x1c] sm:$0xf]
        %v396 = vld [vmem:[%s3 + $0x20] sm:$0xf]
        %v397 = vld [vmem:[%s3 + $0x24] sm:$0xf]
        %v398 = vld [vmem:[%s3 + $0x28] sm:$0xf]
        %v399 = vld [vmem:[%s3 + $0x2c] sm:$0xf]
        %v400 = vld [vmem:[%s3 + $0x30] sm:$0xf]
        %v401 = vld [vmem:[%s3 + $0x34] sm:$0xf]
        %v402 = vld [vmem:[%s3 + $0x38] sm:$0xf]
        %v403 = vld [vmem:[%s3 + $0x3c] sm:$0xf]
        %v404 = vld [vmem:[%s3 + $0x40] sm:$0xf]
        %v405 = vld [vmem:[%s3 + $0x44] sm:$0xf]
        %v406 = vld [vmem:[%s3 + $0x48] sm:$0xf]
        %v407 = vld [vmem:[%s3 + $0x4c] sm:$0xf]
        %v408 = vld [vmem:[%s3 + $0x50] sm:$0xf]
        %v409 = vld [vmem:[%s3 + $0x54] sm:$0xf]
        %v410 = vld [vmem:[%s3 + $0x58] sm:$0xf]
        %v411 = vld [vmem:[%s3 + $0x5c] sm:$0xf]
        %v412 = vld [vmem:[%s3 + $0x60] sm:$0xf]
        %v413 = vld [vmem:[%s3 + $0x64] sm:$0xf]
        %v414 = vld [vmem:[%s3 + $0x68] sm:$0xf]
        %v415 = vld [vmem:[%s3 + $0x6c] sm:$0xf]
        %v416 = vld [vmem:[%s3 + $0x70] sm:$0xf]
        %v417 = vld [vmem:[%s3 + $0x74] sm:$0xf]
        %v418 = vld [vmem:[%s3 + $0x78] sm:$0xf]
        %v419 = vld [vmem:[%s3 + $0x7c] sm:$0xf]
        %v420 = vld [vmem:[%s3 + $0x80] sm:$0xf]
        %v421 = vld [vmem:[%s3 + $0x84] sm:$0xf]
        %v422 = vld [vmem:[%s3 + $0x88] sm:$0xf]
        %v423 = vld [vmem:[%s3 + $0x8c] sm:$0xf]
        %v424 = vld [vmem:[%s4] sm:$0x1]
        %v425 = vld [vmem:[%s5] sm:$0xf]
        %v426 = vld [vmem:[%s5 + $0x4] sm:$0xf]
        %v427 = vld [vmem:[%s5 + $0x8] sm:$0xf]
        %v428 = vld [vmem:[%s5 + $0xc] sm:$0xf]
        %v429 = vld [vmem:[%s5 + $0x10] sm:$0xf]
        %v430 = vld [vmem:[%s5 + $0x14] sm:$0xf]
        %v431 = vld [vmem:[%s5 + $0x18] sm:$0xf]
        %v432 = vld [vmem:[%s5 + $0x1c] sm:$0xf]
        %v433 = vld [vmem:[%s5 + $0x20] sm:$0xf]
        %v434 = vld [vmem:[%s5 + $0x24] sm:$0xf]
        %v435 = vld [vmem:[%s5 + $0x28] sm:$0xf]
        %v436 = vld [vmem:[%s5 + $0x2c] sm:$0xf]
        %v437 = vld [vmem:[%s5 + $0x30] sm:$0xf]
        %v438 = vld [vmem:[%s5 + $0x34] sm:$0xf]
        %v439 = vld [vmem:[%s5 + $0x38] sm:$0xf]
        %v440 = vld [vmem:[%s5 + $0x3c] sm:$0xf]
        %v441 = vld [vmem:[%s5 + $0x40] sm:$0xf]
        %v442 = vld [vmem:[%s5 + $0x44] sm:$0xf]
        %v443 = vld [vmem:[%s5 + $0x48] sm:$0xf]
        %v444 = vld [vmem:[%s5 + $0x4c] sm:$0xf]
        %v445 = vld [vmem:[%s5 + $0x50] sm:$0xf]
        %v446 = vld [vmem:[%s5 + $0x54] sm:$0xf]
        %v447 = vld [vmem:[%s5 + $0x58] sm:$0xf]
        %v448 = vld [vmem:[%s5 + $0x5c] sm:$0xf]
        %v449 = vld [vmem:[%s5 + $0x60] sm:$0xf]
        %v450 = vld [vmem:[%s5 + $0x64] sm:$0xf]
        %v451 = vld [vmem:[%s5 + $0x68] sm:$0xf]
        %v452 = vld [vmem:[%s5 + $0x6c] sm:$0xf]
        %v453 = vld [vmem:[%s5 + $0x70] sm:$0xf]
        %v454 = vld [vmem:[%s5 + $0x74] sm:$0xf]
        %v455 = vld [vmem:[%s5 + $0x78] sm:$0xf]
        %v456 = vld [vmem:[%s5 + $0x7c] sm:$0xf]
        %v457 = vld [vmem:[%s5 + $0x80] sm:$0xf]
        %v458 = vld [vmem:[%s5 + $0x84] sm:$0xf]
        %v459 = vld [vmem:[%s5 + $0x88] sm:$0xf]
        %v460 = vld [vmem:[%s5 + $0x8c] sm:$0xf]
        %v461 = vld [vmem:[%s5 + $0x90] sm:$0xf]
        %v462 = vld [vmem:[%s5 + $0x94] sm:$0xf]
        %v463 = vld [vmem:[%s5 + $0x98] sm:$0xf]
        %v464 = vld [vmem:[%s5 + $0x9c] sm:$0xf]
        %v465 = vld [vmem:[%s5 + $0xa0] sm:$0xf]
        %v466 = vld [vmem:[%s5 + $0xa4] sm:$0xf]
        %v467 = vld [vmem:[%s5 + $0xa8] sm:$0xf]
        %v468 = vld [vmem:[%s5 + $0xac] sm:$0xf]
        %v469 = vld [vmem:[%s5 + $0xb0] sm:$0xf]
        %v470 = vld [vmem:[%s5 + $0xb4] sm:$0xf]
        %v471 = vld [vmem:[%s5 + $0xb8] sm:$0xf]
        %v472 = vld [vmem:[%s5 + $0xbc] sm:$0xf]
        %v473 = vld [vmem:[%s5 + $0xc0] sm:$0xf]
        %v474 = vld [vmem:[%s5 + $0xc4] sm:$0xf]
        %v475 = vld [vmem:[%s5 + $0xc8] sm:$0xf]
        %v476 = vld [vmem:[%s5 + $0xcc] sm:$0xf]
        %v477 = vld [vmem:[%s5 + $0xd0] sm:$0xf]
        %v478 = vld [vmem:[%s5 + $0xd4] sm:$0xf]
        %v479 = vld [vmem:[%s5 + $0xd8] sm:$0xf]
        %v480 = vld [vmem:[%s5 + $0xdc] sm:$0xf]
        %v481 = vld [vmem:[%s5 + $0xe0] sm:$0xf]
        %v482 = vld [vmem:[%s5 + $0xe4] sm:$0xf]
        %v483 = vld [vmem:[%s5 + $0xe8] sm:$0xf]
        %v484 = vld [vmem:[%s5 + $0xec] sm:$0xf]
        %v485 = vld [vmem:[%s5 + $0xf0] sm:$0xf]
        %v486 = vld [vmem:[%s5 + $0xf4] sm:$0xf]
        %v487 = vld [vmem:[%s5 + $0xf8] sm:$0xf]
        %v488 = vld [vmem:[%s5 + $0xfc] sm:$0xf]
        %v489 = vld [vmem:[%s5 + $0x100] sm:$0xf]
        %v490 = vld [vmem:[%s5 + $0x104] sm:$0xf]
        %v491 = vld [vmem:[%s5 + $0x108] sm:$0xf]
        %v492 = vld [vmem:[%s5 + $0x10c] sm:$0xf]
        %v493 = vld [vmem:[%s5 + $0x110] sm:$0xf]
        %v494 = vld [vmem:[%s5 + $0x114] sm:$0xf]
        %v495 = vld [vmem:[%s5 + $0x118] sm:$0xf]
        %v496 = vld [vmem:[%s5 + $0x11c] sm:$0xf]
        %v497 = vld [vmem:[%s6] sm:$0x1]
        %v498 = vld [vmem:[%s383] sm:$0xf]
        %v499 = vld [vmem:[%s383 + $0x4] sm:$0xf]
        %v500 = vld [vmem:[%s383 + $0x8] sm:$0xf]
        %v501 = vld [vmem:[%s383 + $0xc] sm:$0xf]
        %v502 = vld [vmem:[%s383 + $0x10] sm:$0xf]
        %v503 = vld [vmem:[%s383 + $0x14] sm:$0xf]
        %v504 = vld [vmem:[%s383 + $0x18] sm:$0xf]
        %v505 = vld [vmem:[%s383 + $0x1c] sm:$0xf]
        %v506 = vld [vmem:[%s383 + $0x20] sm:$0xf]
        %v507 = vld [vmem:[%s383 + $0x24] sm:$0xf]
        %v508 = vld [vmem:[%s383 + $0x28] sm:$0xf]
        %v509 = vld [vmem:[%s383 + $0x2c] sm:$0xf]
        %v510 = vld [vmem:[%s383 + $0x30] sm:$0xf]
        %v511 = vld [vmem:[%s383 + $0x34] sm:$0xf]
        %v512 = vld [vmem:[%s383 + $0x38] sm:$0xf]
        %v513 = vld [vmem:[%s383 + $0x3c] sm:$0xf]
        %v514 = vld [vmem:[%s383 + $0x40] sm:$0xf]
        %v515 = vld [vmem:[%s383 + $0x44] sm:$0xf]
        %v516 = vld [vmem:[%s383 + $0x48] sm:$0xf]
        %v517 = vld [vmem:[%s383 + $0x4c] sm:$0xf]
        %v518 = vld [vmem:[%s383 + $0x50] sm:$0xf]
        %v519 = vld [vmem:[%s383 + $0x54] sm:$0x1]
        %v521 = vlaneseq
        %v522 = vshrl.u32 %v521, 7
        %v523 = vsub.s32 0, %v522
        %v524 = vrot.slane %v387, %v523
        %v548 = vunpack.c.l.b16 %v498
        %v549 = vunpack.c.l.b16 %v499
        %v550 = vunpack.c.l.b16 %v500
        %v551 = vunpack.c.l.b16 %v501
        %v552 = vunpack.c.l.b16 %v502
        %v553 = vunpack.c.l.b16 %v503
        %v554 = vunpack.c.l.b16 %v504
        %v555 = vunpack.c.l.b16 %v505
        %v556 = vunpack.c.l.b16 %v506
        %v557 = vunpack.c.l.b16 %v507
        %v558 = vunpack.c.l.b16 %v508
        %v559 = vunpack.c.l.b16 %v509
        %v560 = vunpack.c.l.b16 %v510
        %v561 = vunpack.c.l.b16 %v511
        %v562 = vunpack.c.l.b16 %v512
        %v563 = vunpack.c.l.b16 %v513
        %v564 = vunpack.c.l.b16 %v514
        %v565 = vunpack.c.l.b16 %v515
        %v566 = vunpack.c.l.b16 %v516
        %v567 = vunpack.c.l.b16 %v517
        %v568 = vunpack.c.l.b16 %v518
        %v569 = vunpack.c.l.b16 %v519
        %v570 = vpack.c.b16 %v549, %v548
        %v571 = vpack.c.b16 %v551, %v550
        %v572 = vpack.c.b16 %v553, %v552
        %v573 = vpack.c.b16 %v555, %v554
        %v574 = vpack.c.b16 %v557, %v556
        %v575 = vpack.c.b16 %v559, %v558
        %v576 = vpack.c.b16 %v561, %v560
        %v577 = vpack.c.b16 %v563, %v562
        %v578 = vpack.c.b16 %v565, %v564
        %v579 = vpack.c.b16 %v567, %v566
        %v580 = vpack.c.b16 %v569, %v568
        %v583 = vunpack.c.l.b16 %v385
        %v584 = vunpack.c.l.b16 %v386
        %v585 = vpack.c.b16 %v584, %v583
        %vm586 = vcmask 72704
        %v588 = vsel %vm586, %v570, 0
        %v591 = vsel %vm586, %v571, 0
        %v594 = vsel %vm586, %v572, 0
        %v597 = vsel %vm586, %v573, 0
        %v600 = vsel %vm586, %v574, 0
        %v603 = vsel %vm586, %v575, 0
        %v606 = vsel %vm586, %v576, 0
        %v609 = vsel %vm586, %v577, 0
        %v612 = vsel %vm586, %v578, 0
        %v615 = vsel %vm586, %v579, 0
        %v618 = vsel %vm586, %v580, 0
        %vm620 = vcmask 1043456
        %vm621 = vcmask 1044480
        %v622 = vsel %vm620, 4294967295, 65535
        %v623 = vsel %vm621, %v622, 0
        %v625 = vand.u32 %v585, %v623
        %627 = vmatprep.subr.bf16.mxu0 0
        %628 = vmatpush1.bf16.msra.mxu0 0
        %629 = vmatprep.subr.bf16.mxu0 0
        %630 = vmatpush1.bf16.msra.mxu0 0
        %631 = vmatprep.subr.bf16.mxu0 0
        %632 = vmatpush1.bf16.msra.mxu0 0
        %633 = vmatprep.subr.bf16.mxu0 0
        %634 = vmatpush1.bf16.msra.mxu0 0
        %635 = vmatprep.subr.bf16.mxu0 0
        %636 = vmatpush1.bf16.msra.mxu0 0
        %637 = vmatprep.subr.bf16.mxu0 0
        %638 = vmatpush1.bf16.msra.mxu0 0
        %639 = vmatprep.subr.bf16.mxu0 0
        %640 = vmatpush1.bf16.msra.mxu0 0
        %641 = vmatprep.subr.bf16.mxu0 0
        %642 = vmatpush1.bf16.msra.mxu0 %v625
        %643 = vmatprep.subr.bf16.mxu0 0
        %644 = vmatpush2.bf16.msra.mxu0 0
        %645 = vmatprep.subr.bf16.mxu0 0
        %646 = vmatpush2.bf16.msra.mxu0 0
        %647 = vmatprep.subr.bf16.mxu0 0
        %648 = vmatpush2.bf16.msra.mxu0 0
        %649 = vmatprep.subr.bf16.mxu0 0
        %650 = vmatpush2.bf16.msra.mxu0 0
        %651 = vmatprep.subr.bf16.mxu0 0
        %652 = vmatpush2.bf16.msra.mxu0 0
        %653 = vmatprep.subr.bf16.mxu0 0
        %654 = vmatpush2.bf16.msra.mxu0 0
        %655 = vmatprep.subr.bf16.mxu0 0
        %656 = vmatpush2.bf16.msra.mxu0 0
        %657 = vmatprep.subr.bf16.mxu0 0
        %658 = vmatpush2.bf16.msra.mxu0 0
        %659 = vmatprep.mubr.bf16.mxu0 0
        %660 = vmatmul.mubr.bf16.gmra.mxu0 %v588
        %v661 = vpop.f32.mrf.mxu0
        %v662 = vadd.f32 %v524, %v661
        %v663 = vpop.f32.mrf.mxu0
        %v664 = vpop.f32.mrf.mxu0
        %v665 = vadd.f32 %v524, %v664
        %v666 = vpop.f32.mrf.mxu0
        %667 = vmatprep.mubr.bf16.mxu0 0
        %668 = vmatmul.mubr.bf16.gmra.mxu0 %v591
        %v669 = vpop.f32.mrf.mxu0
        %v670 = vadd.f32 %v524, %v669
        %v671 = vpop.f32.mrf.mxu0
        %v672 = vpop.f32.mrf.mxu0
        %v673 = vadd.f32 %v524, %v672
        %v674 = vpop.f32.mrf.mxu0
        %675 = vmatprep.mubr.bf16.mxu0 0
        %676 = vmatmul.mubr.bf16.gmra.mxu0 %v594
        %v677 = vpop.f32.mrf.mxu0
        %v678 = vadd.f32 %v524, %v677
        %v679 = vpop.f32.mrf.mxu0
        %v680 = vpop.f32.mrf.mxu0
        %v681 = vadd.f32 %v524, %v680
        %v682 = vpop.f32.mrf.mxu0
        %683 = vmatprep.mubr.bf16.mxu0 0
        %684 = vmatmul.mubr.bf16.gmra.mxu0 %v597
        %v685 = vpop.f32.mrf.mxu0
        %v686 = vadd.f32 %v524, %v685
        %v687 = vpop.f32.mrf.mxu0
        %v688 = vpop.f32.mrf.mxu0
        %v689 = vadd.f32 %v524, %v688
        %v690 = vpop.f32.mrf.mxu0
        %691 = vmatprep.mubr.bf16.mxu0 0
        %692 = vmatmul.mubr.bf16.gmra.mxu0 %v600
        %v693 = vpop.f32.mrf.mxu0
        %v694 = vadd.f32 %v524, %v693
        %v695 = vpop.f32.mrf.mxu0
        %v696 = vpop.f32.mrf.mxu0
        %v697 = vadd.f32 %v524, %v696
        %v698 = vpop.f32.mrf.mxu0
        %699 = vmatprep.mubr.bf16.mxu0 0
        %700 = vmatmul.mubr.bf16.gmra.mxu0 %v603
        %v701 = vpop.f32.mrf.mxu0
        %v702 = vadd.f32 %v524, %v701
        %v703 = vpop.f32.mrf.mxu0
        %v704 = vpop.f32.mrf.mxu0
        %v705 = vadd.f32 %v524, %v704
        %v706 = vpop.f32.mrf.mxu0
        %707 = vmatprep.mubr.bf16.mxu0 0
        %708 = vmatmul.mubr.bf16.gmra.mxu0 %v606
        %v709 = vpop.f32.mrf.mxu0
        %v710 = vadd.f32 %v524, %v709
        %v711 = vpop.f32.mrf.mxu0
        %v712 = vpop.f32.mrf.mxu0
        %v713 = vadd.f32 %v524, %v712
        %v714 = vpop.f32.mrf.mxu0
        %715 = vmatprep.mubr.bf16.mxu0 0
        %716 = vmatmul.mubr.bf16.gmra.mxu0 %v609
        %v717 = vpop.f32.mrf.mxu0
        %v718 = vadd.f32 %v524, %v717
        %v719 = vpop.f32.mrf.mxu0
        %v720 = vpop.f32.mrf.mxu0
        %v721 = vadd.f32 %v524, %v720
        %v722 = vpop.f32.mrf.mxu0
        %723 = vmatprep.mubr.bf16.mxu0 0
        %724 = vmatmul.mubr.bf16.gmra.mxu0 %v612
        %v725 = vpop.f32.mrf.mxu0
        %v726 = vadd.f32 %v524, %v725
        %v727 = vpop.f32.mrf.mxu0
        %v728 = vpop.f32.mrf.mxu0
        %v729 = vadd.f32 %v524, %v728
        %v730 = vpop.f32.mrf.mxu0
        %731 = vmatprep.mubr.bf16.mxu0 0
        %732 = vmatmul.mubr.bf16.gmra.mxu0 %v615
        %v733 = vpop.f32.mrf.mxu0
        %v734 = vadd.f32 %v524, %v733
        %v735 = vpop.f32.mrf.mxu0
        %v736 = vpop.f32.mrf.mxu0
        %v737 = vadd.f32 %v524, %v736
        %v738 = vpop.f32.mrf.mxu0
        %739 = vmatprep.mubr.bf16.mxu0 0
        %740 = vmatmul.mubr.bf16.gmra.mxu0 %v618
        %v741 = vpop.f32.mrf.mxu0
        %v742 = vadd.f32 %v524, %v741
        %v743 = vpop.f32.mrf.mxu0
        %v744 = vpop.f32.mrf.mxu0
        %v745 = vadd.f32 %v524, %v744
        %v746 = vpop.f32.mrf.mxu0
        %747 = vdwg.mxu0
        %v748 = vmax.f32 %v662, 0.0
        %v749 = vmax.f32 %v665, 0.0
        %v750 = vmax.f32 %v670, 0.0
        %v751 = vmax.f32 %v673, 0.0
        %v752 = vmax.f32 %v678, 0.0
        %v753 = vmax.f32 %v681, 0.0
        %v754 = vmax.f32 %v686, 0.0
        %v755 = vmax.f32 %v689, 0.0
        %v756 = vmax.f32 %v694, 0.0
        %v757 = vmax.f32 %v697, 0.0
        %v758 = vmax.f32 %v702, 0.0
        %v759 = vmax.f32 %v705, 0.0
        %v760 = vmax.f32 %v710, 0.0
        %v761 = vmax.f32 %v713, 0.0
        %v762 = vmax.f32 %v718, 0.0
        %v763 = vmax.f32 %v721, 0.0
        %v764 = vmax.f32 %v726, 0.0
        %v765 = vmax.f32 %v729, 0.0
        %v766 = vmax.f32 %v734, 0.0
        %v767 = vmax.f32 %v737, 0.0
        %v768 = vmax.f32 %v742, 0.0
        %v769 = vmax.f32 %v745, 0.0
        %v770 = vpack.c.bf16 %v749, %v748
        %v771 = vpack.c.bf16 %v751, %v750
        %v772 = vpack.c.bf16 %v753, %v752
        %v773 = vpack.c.bf16 %v755, %v754
        %v774 = vpack.c.bf16 %v757, %v756
        %v775 = vpack.c.bf16 %v759, %v758
        %v776 = vpack.c.bf16 %v761, %v760
        %v777 = vpack.c.bf16 %v763, %v762
        %v778 = vpack.c.bf16 %v765, %v764
        %v779 = vpack.c.bf16 %v767, %v766
        %v780 = vpack.c.bf16 %v769, %v768
        %v792 = vunpack.c.l.b16 %v770
        %v793 = vunpack.c.h.b16 %v770
        %v794 = vunpack.c.l.b16 %v771
        %v795 = vunpack.c.h.b16 %v771
        %v796 = vunpack.c.l.b16 %v772
        %v797 = vunpack.c.h.b16 %v772
        %v798 = vunpack.c.l.b16 %v773
        %v799 = vunpack.c.h.b16 %v773
        %v800 = vunpack.c.l.b16 %v774
        %v801 = vunpack.c.h.b16 %v774
        %v802 = vunpack.c.l.b16 %v775
        %v803 = vunpack.c.h.b16 %v775
        %v804 = vunpack.c.l.b16 %v776
        %v805 = vunpack.c.h.b16 %v776
        %v806 = vunpack.c.l.b16 %v777
        %v807 = vunpack.c.h.b16 %v777
        %v808 = vunpack.c.l.b16 %v778
        %v809 = vunpack.c.h.b16 %v778
        %v810 = vunpack.c.l.b16 %v779
        %v811 = vunpack.c.h.b16 %v779
        %v812 = vunpack.c.l.b16 %v780
        %v813 = vunpack.c.h.b16 %v780
        %v814 = vpack.c.b16 %v792, %v792
        %v815 = vpack.c.b16 %v793, %v793
        %v816 = vpack.c.b16 %v794, %v794
        %v817 = vpack.c.b16 %v795, %v795
        %v818 = vpack.c.b16 %v796, %v796
        %v819 = vpack.c.b16 %v797, %v797
        %v820 = vpack.c.b16 %v798, %v798
        %v821 = vpack.c.b16 %v799, %v799
        %v822 = vpack.c.b16 %v800, %v800
        %v823 = vpack.c.b16 %v801, %v801
        %v824 = vpack.c.b16 %v802, %v802
        %v825 = vpack.c.b16 %v803, %v803
        %v826 = vpack.c.b16 %v804, %v804
        %v827 = vpack.c.b16 %v805, %v805
        %v828 = vpack.c.b16 %v806, %v806
        %v829 = vpack.c.b16 %v807, %v807
        %v830 = vpack.c.b16 %v808, %v808
        %v831 = vpack.c.b16 %v809, %v809
        %v832 = vpack.c.b16 %v810, %v810
        %v833 = vpack.c.b16 %v811, %v811
        %v834 = vpack.c.b16 %v812, %v812
        %v835 = vpack.c.b16 %v813, %v813
        %vm858 = vcmask 257024
        %859 = vst.msk [vmem:[#allocation2] sm:$0xf] %vm858, %v814
        %860 = vst.msk [vmem:[#allocation2 + $0x4] sm:$0xf] %vm858, %v815
        %861 = vst.msk [vmem:[#allocation2 + $0x8] sm:$0xf] %vm858, %v816
        %862 = vst.msk [vmem:[#allocation2 + $0xc] sm:$0xf] %vm858, %v817
        %863 = vst.msk [vmem:[#allocation2 + $0x10] sm:$0xf] %vm858, %v818
        %864 = vst.msk [vmem:[#allocation2 + $0x14] sm:$0xf] %vm858, %v819
        %865 = vst.msk [vmem:[#allocation2 + $0x18] sm:$0xf] %vm858, %v820
        %866 = vst.msk [vmem:[#allocation2 + $0x1c] sm:$0xf] %vm858, %v821
        %867 = vst.msk [vmem:[#allocation2 + $0x20] sm:$0xf] %vm858, %v822
        %868 = vst.msk [vmem:[#allocation2 + $0x24] sm:$0xf] %vm858, %v823
        %869 = vst.msk [vmem:[#allocation2 + $0x28] sm:$0xf] %vm858, %v824
        %870 = vst.msk [vmem:[#allocation2 + $0x2c] sm:$0xf] %vm858, %v825
        %871 = vst.msk [vmem:[#allocation2 + $0x30] sm:$0xf] %vm858, %v826
        %872 = vst.msk [vmem:[#allocation2 + $0x34] sm:$0xf] %vm858, %v827
        %873 = vst.msk [vmem:[#allocation2 + $0x38] sm:$0xf] %vm858, %v828
        %874 = vst.msk [vmem:[#allocation2 + $0x3c] sm:$0xf] %vm858, %v829
        %875 = vst.msk [vmem:[#allocation2 + $0x40] sm:$0xf] %vm858, %v830
        %876 = vst.msk [vmem:[#allocation2 + $0x44] sm:$0xf] %vm858, %v831
        %877 = vst.msk [vmem:[#allocation2 + $0x48] sm:$0xf] %vm858, %v832
        %878 = vst.msk [vmem:[#allocation2 + $0x4c] sm:$0xf] %vm858, %v833
        %879 = vst.msk [vmem:[#allocation2 + $0x50] sm:$0xf] %vm858, %v834
        %vm880 = vcmask 253952
        %vm881 = vsmask.f32 256
        %vm882 = vmand %vm880, %vm881
        %v883 = vld [vmem:[#allocation2 + $0x54] sm:$0x1]
        %v884 = vsel %vm882, %v835, %v883
        %885 = vst [vmem:[#allocation2 + $0x54] sm:$0x1] %v884
        %v886 = vld [vmem:[#allocation2] sm:$0x7]
        %v887 = vld [vmem:[#allocation2] sm:$0x8]
        %v888 = vld [vmem:[#allocation2 + $0x4] sm:$0x7]
        %v889 = vld [vmem:[#allocation2] sm:$0xf]
        %v890 = vld [vmem:[#allocation2 + $0x4] sm:$0xc]
        %v891 = vld [vmem:[#allocation2 + $0x8] sm:$0x3]
        %v892 = vld [vmem:[#allocation2 + $0x8] sm:$0xc]
        %v893 = vld [vmem:[#allocation2 + $0xc] sm:$0x1]
        %v894 = vld [vmem:[#allocation2 + $0x4] sm:$0x8]
        %v895 = vld [vmem:[#allocation2 + $0xc] sm:$0xe]
        %v896 = vld [vmem:[#allocation2 + $0x10] sm:$0xf]
        %v897 = vld [vmem:[#allocation2 + $0x10] sm:$0x1]
        %v900 = vunpack.c.l.b16 %v887
        %v901 = vunpack.c.l.b16 %v888
        %v902 = vpack.c.b16 %v901, %v900
        %v904 = vshrl.u32 %v902, 16
        %v906 = vrot.slane %v904, 3
        %v907 = vshll.u32 %v902, 16
        %v909 = vrot.slane %v907, 4
        %v910 = vor.u32 %v906, %v909
        %911 = vrot.lane.b32.xlu0 %v910, 32
        %v912 = vpop.permute.xlu0 %911
        %v914 = vunpack.c.l.b16 %v889
        %v915 = vpack.c.b16 %v914, %v914
        %v917 = vshrl.u32 %v915, 16
        %v919 = vshll.u32 %v915, 16
        %v921 = vrot.slane %v919, 1
        %v922 = vor.u32 %v917, %v921
        %923 = vrot.lane.b32.xlu0 %v922, 64
        %v924 = vpop.permute.xlu0 %923
        %v927 = vunpack.c.l.b16 %v890
        %v928 = vunpack.c.l.b16 %v891
        %v929 = vpack.c.b16 %v928, %v927
        %v931 = vshrl.u32 %v929, 16
        %v933 = vrot.slane %v931, 2
        %v934 = vshll.u32 %v929, 16
        %v936 = vrot.slane %v934, 3
        %v937 = vor.u32 %v933, %v936
        %938 = vrot.lane.b32.xlu0 %v937, 96
        %v939 = vpop.permute.xlu0 %938
        %v942 = vunpack.c.l.b16 %v892
        %v943 = vunpack.c.l.b16 %v893
        %v944 = vpack.c.b16 %v943, %v942
        %v945 = vrot.slane %v944, 2
        %v947 = vunpack.c.l.b16 %v894
        %v948 = vpack.c.b16 %v928, %v947
        %v949 = vrot.slane %v948, 3
        %950 = vrot.lane.b32.xlu0 %v949, 32
        %v951 = vpop.permute.xlu0 %950
        %v953 = vunpack.c.l.b16 %v895
        %v954 = vpack.c.b16 %v953, %v953
        %v955 = vrot.slane %v954, 1
        %956 = vrot.lane.b32.xlu0 %v955, 64
        %v957 = vpop.permute.xlu0 %956
        %v959 = vunpack.c.l.b16 %v896
        %v960 = vpack.c.b16 %v959, %v959
        %v962 = vshrl.u32 %v960, 16
        %v964 = vshll.u32 %v960, 16
        %v966 = vrot.slane %v964, 1
        %v967 = vor.u32 %v962, %v966
        %968 = vrot.lane.b32.xlu0 %v967, 96
        %v969 = vpop.permute.xlu0 %968
        %v971 = vunpack.c.l.b16 %v897
        %v972 = vpack.c.b16 %v971, %v953
        %v974 = vshrl.u32 %v972, 16
        %v976 = vrot.slane %v974, 1
        %v977 = vshll.u32 %v972, 16
        %v979 = vrot.slane %v977, 2
        %v980 = vor.u32 %v976, %v979
        %vm981 = vcmask 261120
        %v984 = vsel %vm981, %v886, %v912
        %vm985 = vcmask 523264
        %v987 = vsel %vm985, %v984, %v924
        %vm988 = vcmask 785408
        %v990 = vsel %vm988, %v987, %v939
        %v994 = vsel %vm981, %v945, %v951
        %v996 = vsel %vm985, %v994, %v957
        %v998 = vsel %vm988, %v996, %v969
        %v1001 = vlaneseq
        %v1002 = vshrl.u32 %v1001, 7
        %v1003 = vsub.s32 0, %v1002
        %v1004 = vrot.slane %v424, %v1003
        %v1042 = vunpack.c.l.b16 %v388
        %v1043 = vunpack.c.l.b16 %v389
        %v1044 = vunpack.c.l.b16 %v390
        %v1045 = vunpack.c.l.b16 %v391
        %v1046 = vunpack.c.l.b16 %v392
        %v1047 = vunpack.c.l.b16 %v393
        %v1048 = vunpack.c.l.b16 %v394
        %v1049 = vunpack.c.l.b16 %v395
        %v1050 = vunpack.c.l.b16 %v396
        %v1051 = vunpack.c.l.b16 %v397
        %v1052 = vunpack.c.l.b16 %v398
        %v1053 = vunpack.c.l.b16 %v399
        %v1054 = vunpack.c.l.b16 %v400
        %v1055 = vunpack.c.l.b16 %v401
        %v1056 = vunpack.c.l.b16 %v402
        %v1057 = vunpack.c.l.b16 %v403
        %v1058 = vunpack.c.l.b16 %v404
        %v1059 = vunpack.c.l.b16 %v405
        %v1060 = vunpack.c.l.b16 %v406
        %v1061 = vunpack.c.l.b16 %v407
        %v1062 = vunpack.c.l.b16 %v408
        %v1063 = vunpack.c.l.b16 %v409
        %v1064 = vunpack.c.l.b16 %v410
        %v1065 = vunpack.c.l.b16 %v411
        %v1066 = vunpack.c.l.b16 %v412
        %v1067 = vunpack.c.l.b16 %v413
        %v1068 = vunpack.c.l.b16 %v414
        %v1069 = vunpack.c.l.b16 %v415
        %v1070 = vunpack.c.l.b16 %v416
        %v1071 = vunpack.c.l.b16 %v417
        %v1072 = vunpack.c.l.b16 %v418
        %v1073 = vunpack.c.l.b16 %v419
        %v1074 = vunpack.c.l.b16 %v420
        %v1075 = vunpack.c.l.b16 %v421
        %v1076 = vunpack.c.l.b16 %v422
        %v1077 = vunpack.c.l.b16 %v423
        %v1078 = vpack.c.b16 %v1043, %v1042
        %v1079 = vpack.c.b16 %v1045, %v1044
        %v1080 = vpack.c.b16 %v1047, %v1046
        %v1081 = vpack.c.b16 %v1049, %v1048
        %v1082 = vpack.c.b16 %v1051, %v1050
        %v1083 = vpack.c.b16 %v1053, %v1052
        %v1084 = vpack.c.b16 %v1055, %v1054
        %v1085 = vpack.c.b16 %v1057, %v1056
        %v1086 = vpack.c.b16 %v1059, %v1058
        %v1087 = vpack.c.b16 %v1061, %v1060
        %v1088 = vpack.c.b16 %v1063, %v1062
        %v1089 = vpack.c.b16 %v1065, %v1064
        %v1090 = vpack.c.b16 %v1067, %v1066
        %v1091 = vpack.c.b16 %v1069, %v1068
        %v1092 = vpack.c.b16 %v1071, %v1070
        %v1093 = vpack.c.b16 %v1073, %v1072
        %v1094 = vpack.c.b16 %v1075, %v1074
        %v1095 = vpack.c.b16 %v1077, %v1076
        %v1115 = vsel %vm981, %v980, 0
        %1117 = vmatprep.subr.bf16.mxu0 0
        %1118 = vmatpush1.bf16.msra.mxu0 %v1085
        %1119 = vmatprep.subr.bf16.mxu0 0
        %1120 = vmatpush1.bf16.msra.mxu0 %v1084
        %1121 = vmatprep.subr.bf16.mxu0 0
        %1122 = vmatpush1.bf16.msra.mxu0 %v1083
        %1123 = vmatprep.subr.bf16.mxu0 0
        %1124 = vmatpush1.bf16.msra.mxu0 %v1082
        %1125 = vmatprep.subr.bf16.mxu0 0
        %1126 = vmatpush1.bf16.msra.mxu0 %v1081
        %1127 = vmatprep.subr.bf16.mxu0 0
        %1128 = vmatpush1.bf16.msra.mxu0 %v1080
        %1129 = vmatprep.subr.bf16.mxu0 0
        %1130 = vmatpush1.bf16.msra.mxu0 %v1079
        %1131 = vmatprep.subr.bf16.mxu0 0
        %1132 = vmatpush1.bf16.msra.mxu0 %v1078
        %1133 = vmatprep.subr.bf16.mxu0 0
        %1134 = vmatpush2.bf16.msra.mxu0 %v1093
        %1135 = vmatprep.subr.bf16.mxu0 0
        %1136 = vmatpush2.bf16.msra.mxu0 %v1092
        %1137 = vmatprep.subr.bf16.mxu0 0
        %1138 = vmatpush2.bf16.msra.mxu0 %v1091
        %1139 = vmatprep.subr.bf16.mxu0 0
        %1140 = vmatpush2.bf16.msra.mxu0 %v1090
        %1141 = vmatprep.subr.bf16.mxu0 0
        %1142 = vmatpush2.bf16.msra.mxu0 %v1089
        %1143 = vmatprep.subr.bf16.mxu0 0
        %1144 = vmatpush2.bf16.msra.mxu0 %v1088
        %1145 = vmatprep.subr.bf16.mxu0 0
        %1146 = vmatpush2.bf16.msra.mxu0 %v1087
        %1147 = vmatprep.subr.bf16.mxu0 0
        %1148 = vmatpush2.bf16.msra.mxu0 %v1086
        %1149 = vmatprep.mubr.bf16.mxu0 %v998
        %1150 = vmatmul.mubr.bf16.gmra.mxu0 %v990
        %v1151 = vpop.f32.mrf.mxu0
        %v1152 = vadd.f32 %v1004, %v1151
        %v1153 = vpop.f32.mrf.mxu0
        %v1154 = vpop.f32.mrf.mxu0
        %v1155 = vpop.f32.mrf.mxu0
        %1156 = vdwg.mxu0
        %1157 = vmatprep.subr.bf16.mxu0 0
        %1158 = vmatpush1.bf16.msra.mxu0 0
        %1159 = vmatprep.subr.bf16.mxu0 0
        %1160 = vmatpush1.bf16.msra.mxu0 0
        %1161 = vmatprep.subr.bf16.mxu0 0
        %1162 = vmatpush1.bf16.msra.mxu0 0
        %1163 = vmatprep.subr.bf16.mxu0 0
        %1164 = vmatpush1.bf16.msra.mxu0 0
        %1165 = vmatprep.subr.bf16.mxu0 0
        %1166 = vmatpush1.bf16.msra.mxu0 0
        %1167 = vmatprep.subr.bf16.mxu0 0
        %1168 = vmatpush1.bf16.msra.mxu0 0
        %1169 = vmatprep.subr.bf16.mxu0 0
        %1170 = vmatpush1.bf16.msra.mxu0 %v1095
        %1171 = vmatprep.subr.bf16.mxu0 0
        %1172 = vmatpush1.bf16.msra.mxu0 %v1094
        %1173 = vmatprep.subr.bf16.mxu0 0
        %1174 = vmatpush2.bf16.msra.mxu0 0
        %1175 = vmatprep.subr.bf16.mxu0 0
        %1176 = vmatpush2.bf16.msra.mxu0 0
        %1177 = vmatprep.subr.bf16.mxu0 0
        %1178 = vmatpush2.bf16.msra.mxu0 0
        %1179 = vmatprep.subr.bf16.mxu0 0
        %1180 = vmatpush2.bf16.msra.mxu0 0
        %1181 = vmatprep.subr.bf16.mxu0 0
        %1182 = vmatpush2.bf16.msra.mxu0 0
        %1183 = vmatprep.subr.bf16.mxu0 0
        %1184 = vmatpush2.bf16.msra.mxu0 0
        %1185 = vmatprep.subr.bf16.mxu0 0
        %1186 = vmatpush2.bf16.msra.mxu0 0
        %1187 = vmatprep.subr.bf16.mxu0 0
        %1188 = vmatpush2.bf16.msra.mxu0 0
        %1189 = vmatprep.mubr.bf16.mxu0 0
        %1190 = vmatmul.mubr.bf16.gmra.mxu0 %v1115
        %v1191 = vpop.f32.mrf.mxu0
        %v1192 = vadd.f32 %v1152, %v1191
        %v1193 = vpop.f32.mrf.mxu0
        %v1194 = vpop.f32.mrf.mxu0
        %v1195 = vpop.f32.mrf.mxu0
        %1196 = vdwg.mxu0
        %v1197 = vmax.f32 %v1192, 0.0
        %v1198 = vpack.c.bf16 %v1197, %v1197
        %vm1199 = vcmask 518144
        %1200 = vst.msk [vmem:[#allocation3] sm:$0x7] %vm1199, %v1198
        %v1201 = vld [vmem:[#allocation2 + $0xc] sm:$0xe]
        %v1202 = vld [vmem:[#allocation2 + $0x10] sm:$0xf]
        %v1203 = vld [vmem:[#allocation2 + $0x10] sm:$0x1]
        %v1204 = vld [vmem:[#allocation2 + $0x10] sm:$0x8]
        %v1205 = vld [vmem:[#allocation2 + $0x14] sm:$0x7]
        %v1206 = vld [vmem:[#allocation2 + $0x14] sm:$0x8]
        %v1207 = vld [vmem:[#allocation2 + $0x18] sm:$0x3]
        %v1208 = vld [vmem:[#allocation2 + $0x18] sm:$0xc]
        %v1209 = vld [vmem:[#allocation2 + $0x1c] sm:$0x1]
        %v1210 = vld [vmem:[#allocation2 + $0x1c] sm:$0xe]
        %v1211 = vld [vmem:[#allocation2 + $0x20] sm:$0x1]
        %v1212 = vld [vmem:[#allocation2 + $0x1c] sm:$0x3]
        %v1214 = vunpack.c.l.b16 %v1202
        %v1215 = vpack.c.b16 %v1214, %v1214
        %v1217 = vshrl.u32 %v1215, 16
        %v1219 = vrot.slane %v1217, 7
        %v1220 = vshll.u32 %v1215, 16
        %v1222 = vor.u32 %v1219, %v1220
        %1223 = vrot.lane.b32.xlu0 %v1222, 32
        %v1224 = vpop.permute.xlu0 %1223
        %v1227 = vunpack.c.l.b16 %v1201
        %v1228 = vunpack.c.l.b16 %v1203
        %v1229 = vpack.c.b16 %v1228, %v1227
        %v1231 = vshrl.u32 %v1229, 16
        %v1233 = vshll.u32 %v1229, 16
        %v1235 = vrot.slane %v1233, 1
        %v1236 = vor.u32 %v1231, %v1235
        %1237 = vrot.lane.b32.xlu0 %v1236, 64
        %v1238 = vpop.permute.xlu0 %1237
        %v1241 = vunpack.c.l.b16 %v1204
        %v1242 = vunpack.c.l.b16 %v1205
        %v1243 = vpack.c.b16 %v1242, %v1241
        %v1245 = vshrl.u32 %v1243, 16
        %v1247 = vrot.slane %v1245, 2
        %v1248 = vshll.u32 %v1243, 16
        %v1250 = vrot.slane %v1248, 3
        %v1251 = vor.u32 %v1247, %v1250
        %1252 = vrot.lane.b32.xlu0 %v1251, 96
        %v1253 = vpop.permute.xlu0 %1252
        %v1256 = vunpack.c.l.b16 %v1206
        %v1257 = vunpack.c.l.b16 %v1207
        %v1258 = vpack.c.b16 %v1257, %v1256
        %v1259 = vrot.slane %v1258, 2
        %v1260 = vpack.c.b16 %v1242, %v1242
        %v1261 = vrot.slane %v1260, 7
        %1262 = vrot.lane.b32.xlu0 %v1261, 32
        %v1263 = vpop.permute.xlu0 %1262
        %v1266 = vunpack.c.l.b16 %v1208
        %v1267 = vunpack.c.l.b16 %v1209
        %v1268 = vpack.c.b16 %v1267, %v1266
        %v1269 = vrot.slane %v1268, 1
        %1270 = vrot.lane.b32.xlu0 %v1269, 64
        %v1271 = vpop.permute.xlu0 %1270
        %v1274 = vunpack.c.l.b16 %v1210
        %v1275 = vunpack.c.l.b16 %v1211
        %v1276 = vpack.c.b16 %v1275, %v1274
        %v1278 = vshrl.u32 %v1276, 16
        %v1280 = vshll.u32 %v1276, 16
        %v1282 = vrot.slane %v1280, 1
        %v1283 = vor.u32 %v1278, %v1282
        %1284 = vrot.lane.b32.xlu0 %v1283, 96
        %v1285 = vpop.permute.xlu0 %1284
        %v1287 = vunpack.c.l.b16 %v1212
        %v1288 = vpack.c.b16 %v1287, %v1266
        %v1290 = vshrl.u32 %v1288, 16
        %v1292 = vrot.slane %v1290, 1
        %v1293 = vshll.u32 %v1288, 16
        %v1295 = vrot.slane %v1293, 2
        %v1296 = vor.u32 %v1292, %v1295
        %v1299 = vsel %vm981, %v1201, %v1224
        %v1301 = vsel %vm985, %v1299, %v1238
        %v1303 = vsel %vm988, %v1301, %v1253
        %v1306 = vsel %vm981, %v1259, %v1263
        %v1308 = vsel %vm985, %v1306, %v1271
        %v1310 = vsel %vm988, %v1308, %v1285
        %v1313 = vrot.slane %v1303, 1
        %v1314 = vrot.slane %v1310, 1
        %v1315 = vrot.slane %v1296, 1
        %v1319 = vsel %vm981, %v1315, 0
        %1321 = vmatprep.subr.bf16.mxu0 0
        %1322 = vmatpush1.bf16.msra.mxu0 %v1085
        %1323 = vmatprep.subr.bf16.mxu0 0
        %1324 = vmatpush1.bf16.msra.mxu0 %v1084
        %1325 = vmatprep.subr.bf16.mxu0 0
        %1326 = vmatpush1.bf16.msra.mxu0 %v1083
        %1327 = vmatprep.subr.bf16.mxu0 0
        %1328 = vmatpush1.bf16.msra.mxu0 %v1082
        %1329 = vmatprep.subr.bf16.mxu0 0
        %1330 = vmatpush1.bf16.msra.mxu0 %v1081
        %1331 = vmatprep.subr.bf16.mxu0 0
        %1332 = vmatpush1.bf16.msra.mxu0 %v1080
        %1333 = vmatprep.subr.bf16.mxu0 0
        %1334 = vmatpush1.bf16.msra.mxu0 %v1079
        %1335 = vmatprep.subr.bf16.mxu0 0
        %1336 = vmatpush1.bf16.msra.mxu0 %v1078
        %1337 = vmatprep.subr.bf16.mxu0 0
        %1338 = vmatpush2.bf16.msra.mxu0 %v1093
        %1339 = vmatprep.subr.bf16.mxu0 0
        %1340 = vmatpush2.bf16.msra.mxu0 %v1092
        %1341 = vmatprep.subr.bf16.mxu0 0
        %1342 = vmatpush2.bf16.msra.mxu0 %v1091
        %1343 = vmatprep.subr.bf16.mxu0 0
        %1344 = vmatpush2.bf16.msra.mxu0 %v1090
        %1345 = vmatprep.subr.bf16.mxu0 0
        %1346 = vmatpush2.bf16.msra.mxu0 %v1089
        %1347 = vmatprep.subr.bf16.mxu0 0
        %1348 = vmatpush2.bf16.msra.mxu0 %v1088
        %1349 = vmatprep.subr.bf16.mxu0 0
        %1350 = vmatpush2.bf16.msra.mxu0 %v1087
        %1351 = vmatprep.subr.bf16.mxu0 0
        %1352 = vmatpush2.bf16.msra.mxu0 %v1086
        %1353 = vmatprep.mubr.bf16.mxu0 %v1314
        %1354 = vmatmul.mubr.bf16.gmra.mxu0 %v1313
        %v1355 = vpop.f32.mrf.mxu0
        %v1356 = vadd.f32 %v1004, %v1355
        %v1357 = vpop.f32.mrf.mxu0
        %v1358 = vpop.f32.mrf.mxu0
        %v1359 = vpop.f32.mrf.mxu0
        %1360 = vdwg.mxu0
        %1361 = vmatprep.subr.bf16.mxu0 0
        %1362 = vmatpush1.bf16.msra.mxu0 0
        %1363 = vmatprep.subr.bf16.mxu0 0
        %1364 = vmatpush1.bf16.msra.mxu0 0
        %1365 = vmatprep.subr.bf16.mxu0 0
        %1366 = vmatpush1.bf16.msra.mxu0 0
        %1367 = vmatprep.subr.bf16.mxu0 0
        %1368 = vmatpush1.bf16.msra.mxu0 0
        %1369 = vmatprep.subr.bf16.mxu0 0
        %1370 = vmatpush1.bf16.msra.mxu0 0
        %1371 = vmatprep.subr.bf16.mxu0 0
        %1372 = vmatpush1.bf16.msra.mxu0 0
        %1373 = vmatprep.subr.bf16.mxu0 0
        %1374 = vmatpush1.bf16.msra.mxu0 %v1095
        %1375 = vmatprep.subr.bf16.mxu0 0
        %1376 = vmatpush1.bf16.msra.mxu0 %v1094
        %1377 = vmatprep.subr.bf16.mxu0 0
        %1378 = vmatpush2.bf16.msra.mxu0 0
        %1379 = vmatprep.subr.bf16.mxu0 0
        %1380 = vmatpush2.bf16.msra.mxu0 0
        %1381 = vmatprep.subr.bf16.mxu0 0
        %1382 = vmatpush2.bf16.msra.mxu0 0
        %1383 = vmatprep.subr.bf16.mxu0 0
        %1384 = vmatpush2.bf16.msra.mxu0 0
        %1385 = vmatprep.subr.bf16.mxu0 0
        %1386 = vmatpush2.bf16.msra.mxu0 0
        %1387 = vmatprep.subr.bf16.mxu0 0
        %1388 = vmatpush2.bf16.msra.mxu0 0
        %1389 = vmatprep.subr.bf16.mxu0 0
        %1390 = vmatpush2.bf16.msra.mxu0 0
        %1391 = vmatprep.subr.bf16.mxu0 0
        %1392 = vmatpush2.bf16.msra.mxu0 0
        %1393 = vmatprep.mubr.bf16.mxu0 0
        %1394 = vmatmul.mubr.bf16.gmra.mxu0 %v1319
        %v1395 = vpop.f32.mrf.mxu0
        %v1396 = vadd.f32 %v1356, %v1395
        %v1397 = vpop.f32.mrf.mxu0
        %v1398 = vpop.f32.mrf.mxu0
        %v1399 = vpop.f32.mrf.mxu0
        %1400 = vdwg.mxu0
        %v1401 = vmax.f32 %v1396, 0.0
        %v1402 = vpack.c.bf16 %v1401, %v1401
        %v1404 = vunpack.c.l.b16 %v1402
        %v1405 = vpack.c.b16 %v1404, %v1404
        %v1406 = vrot.slane %v1405, 5
        %v1407 = vrot.slane %v1406, 4
        %vm1410 = vcmask 519171
        %1411 = vst.msk [vmem:[#allocation3] sm:$0x8] %vm1410, %v1406
        %vm1412 = vcmask 517120
        %1413 = vst.msk [vmem:[#allocation3 + $0x4] sm:$0x3] %vm1412, %v1407
        %v1414 = vld [vmem:[#allocation2 + $0x18] sm:$0xc]
        %v1415 = vld [vmem:[#allocation2 + $0x1c] sm:$0x1]
        %v1416 = vld [vmem:[#allocation2 + $0x1c] sm:$0xe]
        %v1417 = vld [vmem:[#allocation2 + $0x20] sm:$0x1]
        %v1418 = vld [vmem:[#allocation2 + $0x1c] sm:$0x3]
        %v1419 = vld [vmem:[#allocation2 + $0x20] sm:$0xf]
        %v1420 = vld [vmem:[#allocation2 + $0x24] sm:$0x7]
        %v1421 = vld [vmem:[#allocation2 + $0x20] sm:$0xe]
        %v1422 = vld [vmem:[#allocation2 + $0x24] sm:$0x8]
        %v1423 = vld [vmem:[#allocation2 + $0x28] sm:$0x3]
        %v1424 = vld [vmem:[#allocation2 + $0x28] sm:$0xc]
        %v1425 = vld [vmem:[#allocation2 + $0x2c] sm:$0x3]
        %v1426 = vld [vmem:[#allocation2 + $0x28] sm:$0x7]
        %v1429 = vunpack.c.l.b16 %v1414
        %v1430 = vunpack.c.l.b16 %v1415
        %v1431 = vpack.c.b16 %v1430, %v1429
        %v1434 = vunpack.c.l.b16 %v1416
        %v1435 = vunpack.c.l.b16 %v1417
        %v1436 = vpack.c.b16 %v1435, %v1434
        %v1438 = vshrl.u32 %v1436, 16
        %v1440 = vrot.slane %v1438, 7
        %v1441 = vshll.u32 %v1436, 16
        %v1443 = vor.u32 %v1440, %v1441
        %1444 = vrot.lane.b32.xlu0 %v1443, 32
        %v1445 = vpop.permute.xlu0 %1444
        %v1447 = vunpack.c.l.b16 %v1418
        %v1448 = vpack.c.b16 %v1447, %v1429
        %v1450 = vshrl.u32 %v1448, 16
        %v1452 = vshll.u32 %v1448, 16
        %v1454 = vrot.slane %v1452, 1
        %v1455 = vor.u32 %v1450, %v1454
        %1456 = vrot.lane.b32.xlu0 %v1455, 64
        %v1457 = vpop.permute.xlu0 %1456
        %v1459 = vunpack.c.l.b16 %v1419
        %v1460 = vpack.c.b16 %v1459, %v1459
        %v1462 = vshrl.u32 %v1460, 16
        %v1464 = vrot.slane %v1462, 6
        %v1465 = vshll.u32 %v1460, 16
        %v1467 = vrot.slane %v1465, 7
        %v1468 = vor.u32 %v1464, %v1467
        %1469 = vrot.lane.b32.xlu0 %v1468, 96
        %v1470 = vpop.permute.xlu0 %1469
        %v1472 = vunpack.c.l.b16 %v1420
        %v1473 = vpack.c.b16 %v1472, %v1472
        %v1474 = vrot.slane %v1473, 6
        %v1476 = vunpack.c.l.b16 %v1421
        %v1477 = vpack.c.b16 %v1476, %v1476
        %v1478 = vrot.slane %v1477, 7
        %1479 = vrot.lane.b32.xlu0 %v1478, 32
        %v1480 = vpop.permute.xlu0 %1479
        %v1483 = vunpack.c.l.b16 %v1422
        %v1484 = vunpack.c.l.b16 %v1423
        %v1485 = vpack.c.b16 %v1484, %v1483
        %v1486 = vrot.slane %v1485, 1
        %1487 = vrot.lane.b32.xlu0 %v1486, 64
        %v1488 = vpop.permute.xlu0 %1487
        %v1491 = vunpack.c.l.b16 %v1424
        %v1492 = vunpack.c.l.b16 %v1425
        %v1493 = vpack.c.b16 %v1492, %v1491
        %v1495 = vshrl.u32 %v1493, 16
        %v1497 = vshll.u32 %v1493, 16
        %v1499 = vrot.slane %v1497, 1
        %v1500 = vor.u32 %v1495, %v1499
        %1501 = vrot.lane.b32.xlu0 %v1500, 96
        %v1502 = vpop.permute.xlu0 %1501
        %v1504 = vunpack.c.l.b16 %v1426
        %v1505 = vpack.c.b16 %v1504, %v1483
        %v1507 = vshrl.u32 %v1505, 16
        %v1509 = vrot.slane %v1507, 1
        %v1510 = vshll.u32 %v1505, 16
        %v1512 = vrot.slane %v1510, 2
        %v1513 = vor.u32 %v1509, %v1512
        %v1516 = vsel %vm981, %v1431, %v1445
        %v1518 = vsel %vm985, %v1516, %v1457
        %v1520 = vsel %vm988, %v1518, %v1470
        %v1523 = vsel %vm981, %v1474, %v1480
        %v1525 = vsel %vm985, %v1523, %v1488
        %v1527 = vsel %vm988, %v1525, %v1502
        %v1530 = vrot.slane %v1520, 2
        %v1531 = vrot.slane %v1527, 2
        %v1532 = vrot.slane %v1513, 2
        %v1536 = vsel %vm981, %v1532, 0
        %1538 = vmatprep.subr.bf16.mxu0 0
        %1539 = vmatpush1.bf16.msra.mxu0 %v1085
        %1540 = vmatprep.subr.bf16.mxu0 0
        %1541 = vmatpush1.bf16.msra.mxu0 %v1084
        %1542 = vmatprep.subr.bf16.mxu0 0
        %1543 = vmatpush1.bf16.msra.mxu0 %v1083
        %1544 = vmatprep.subr.bf16.mxu0 0
        %1545 = vmatpush1.bf16.msra.mxu0 %v1082
        %1546 = vmatprep.subr.bf16.mxu0 0
        %1547 = vmatpush1.bf16.msra.mxu0 %v1081
        %1548 = vmatprep.subr.bf16.mxu0 0
        %1549 = vmatpush1.bf16.msra.mxu0 %v1080
        %1550 = vmatprep.subr.bf16.mxu0 0
        %1551 = vmatpush1.bf16.msra.mxu0 %v1079
        %1552 = vmatprep.subr.bf16.mxu0 0
        %1553 = vmatpush1.bf16.msra.mxu0 %v1078
        %1554 = vmatprep.subr.bf16.mxu0 0
        %1555 = vmatpush2.bf16.msra.mxu0 %v1093
        %1556 = vmatprep.subr.bf16.mxu0 0
        %1557 = vmatpush2.bf16.msra.mxu0 %v1092
        %1558 = vmatprep.subr.bf16.mxu0 0
        %1559 = vmatpush2.bf16.msra.mxu0 %v1091
        %1560 = vmatprep.subr.bf16.mxu0 0
        %1561 = vmatpush2.bf16.msra.mxu0 %v1090
        %1562 = vmatprep.subr.bf16.mxu0 0
        %1563 = vmatpush2.bf16.msra.mxu0 %v1089
        %1564 = vmatprep.subr.bf16.mxu0 0
        %1565 = vmatpush2.bf16.msra.mxu0 %v1088
        %1566 = vmatprep.subr.bf16.mxu0 0
        %1567 = vmatpush2.bf16.msra.mxu0 %v1087
        %1568 = vmatprep.subr.bf16.mxu0 0
        %1569 = vmatpush2.bf16.msra.mxu0 %v1086
        %1570 = vmatprep.mubr.bf16.mxu0 %v1531
        %1571 = vmatmul.mubr.bf16.gmra.mxu0 %v1530
        %v1572 = vpop.f32.mrf.mxu0
        %v1573 = vadd.f32 %v1004, %v1572
        %v1574 = vpop.f32.mrf.mxu0
        %v1575 = vpop.f32.mrf.mxu0
        %v1576 = vpop.f32.mrf.mxu0
        %1577 = vdwg.mxu0
        %1578 = vmatprep.subr.bf16.mxu0 0
        %1579 = vmatpush1.bf16.msra.mxu0 0
        %1580 = vmatprep.subr.bf16.mxu0 0
        %1581 = vmatpush1.bf16.msra.mxu0 0
        %1582 = vmatprep.subr.bf16.mxu0 0
        %1583 = vmatpush1.bf16.msra.mxu0 0
        %1584 = vmatprep.subr.bf16.mxu0 0
        %1585 = vmatpush1.bf16.msra.mxu0 0
        %1586 = vmatprep.subr.bf16.mxu0 0
        %1587 = vmatpush1.bf16.msra.mxu0 0
        %1588 = vmatprep.subr.bf16.mxu0 0
        %1589 = vmatpush1.bf16.msra.mxu0 0
        %1590 = vmatprep.subr.bf16.mxu0 0
        %1591 = vmatpush1.bf16.msra.mxu0 %v1095
        %1592 = vmatprep.subr.bf16.mxu0 0
        %1593 = vmatpush1.bf16.msra.mxu0 %v1094
        %1594 = vmatprep.subr.bf16.mxu0 0
        %1595 = vmatpush2.bf16.msra.mxu0 0
        %1596 = vmatprep.subr.bf16.mxu0 0
        %1597 = vmatpush2.bf16.msra.mxu0 0
        %1598 = vmatprep.subr.bf16.mxu0 0
        %1599 = vmatpush2.bf16.msra.mxu0 0
        %1600 = vmatprep.subr.bf16.mxu0 0
        %1601 = vmatpush2.bf16.msra.mxu0 0
        %1602 = vmatprep.subr.bf16.mxu0 0
        %1603 = vmatpush2.bf16.msra.mxu0 0
        %1604 = vmatprep.subr.bf16.mxu0 0
        %1605 = vmatpush2.bf16.msra.mxu0 0
        %1606 = vmatprep.subr.bf16.mxu0 0
        %1607 = vmatpush2.bf16.msra.mxu0 0
        %1608 = vmatprep.subr.bf16.mxu0 0
        %1609 = vmatpush2.bf16.msra.mxu0 0
        %1610 = vmatprep.mubr.bf16.mxu0 0
        %1611 = vmatmul.mubr.bf16.gmra.mxu0 %v1536
        %v1612 = vpop.f32.mrf.mxu0
        %v1613 = vadd.f32 %v1573, %v1612
        %v1614 = vpop.f32.mrf.mxu0
        %v1615 = vpop.f32.mrf.mxu0
        %v1616 = vpop.f32.mrf.mxu0
        %1617 = vdwg.mxu0
        %v1618 = vmax.f32 %v1613, 0.0
        %v1619 = vpack.c.bf16 %v1618, %v1618
        %v1621 = vunpack.c.l.b16 %v1619
        %v1622 = vpack.c.b16 %v1621, %v1621
        %v1623 = vrot.slane %v1622, 6
        %v1624 = vrot.slane %v1623, 4
        %vm1627 = vcmask 519170
        %1628 = vst.msk [vmem:[#allocation3 + $0x4] sm:$0xc] %vm1627, %v1623
        %vm1629 = vcmask 516096
        %1630 = vst.msk [vmem:[#allocation3 + $0x8] sm:$0x1] %vm1629, %v1624
        %v1631 = vld [vmem:[#allocation2 + $0x24] sm:$0x8]
        %v1632 = vld [vmem:[#allocation2 + $0x28] sm:$0x3]
        %v1633 = vld [vmem:[#allocation2 + $0x28] sm:$0xc]
        %v1634 = vld [vmem:[#allocation2 + $0x2c] sm:$0x3]
        %v1635 = vld [vmem:[#allocation2 + $0x28] sm:$0x7]
        %v1636 = vld [vmem:[#allocation2 + $0x2c] sm:$0xe]
        %v1637 = vld [vmem:[#allocation2 + $0x30] sm:$0x1]
        %v1638 = vld [vmem:[#allocation2 + $0x30] sm:$0xe]
        %v1639 = vld [vmem:[#allocation2 + $0x2c] sm:$0xc]
        %v1640 = vld [vmem:[#allocation2 + $0x34] sm:$0x7]
        %v1641 = vld [vmem:[#allocation2 + $0x34] sm:$0x8]
        %v1642 = vld [vmem:[#allocation2 + $0x38] sm:$0x7]
        %v1643 = vld [vmem:[#allocation2 + $0x34] sm:$0xf]
        %v1646 = vunpack.c.l.b16 %v1631
        %v1647 = vunpack.c.l.b16 %v1632
        %v1648 = vpack.c.b16 %v1647, %v1646
        %v1651 = vunpack.c.l.b16 %v1633
        %v1652 = vunpack.c.l.b16 %v1634
        %v1653 = vpack.c.b16 %v1652, %v1651
        %v1655 = vshrl.u32 %v1653, 16
        %v1657 = vrot.slane %v1655, 7
        %v1658 = vshll.u32 %v1653, 16
        %v1660 = vor.u32 %v1657, %v1658
        %1661 = vrot.lane.b32.xlu0 %v1660, 32
        %v1662 = vpop.permute.xlu0 %1661
        %v1664 = vunpack.c.l.b16 %v1635
        %v1665 = vpack.c.b16 %v1664, %v1646
        %v1667 = vshrl.u32 %v1665, 16
        %v1669 = vshll.u32 %v1665, 16
        %v1671 = vrot.slane %v1669, 1
        %v1672 = vor.u32 %v1667, %v1671
        %1673 = vrot.lane.b32.xlu0 %v1672, 64
        %v1674 = vpop.permute.xlu0 %1673
        %v1677 = vunpack.c.l.b16 %v1636
        %v1678 = vunpack.c.l.b16 %v1637
        %v1679 = vpack.c.b16 %v1678, %v1677
        %v1681 = vshrl.u32 %v1679, 16
        %v1683 = vrot.slane %v1681, 6
        %v1684 = vshll.u32 %v1679, 16
        %v1686 = vrot.slane %v1684, 7
        %v1687 = vor.u32 %v1683, %v1686
        %1688 = vrot.lane.b32.xlu0 %v1687, 96
        %v1689 = vpop.permute.xlu0 %1688
        %v1691 = vunpack.c.l.b16 %v1638
        %v1692 = vpack.c.b16 %v1691, %v1691
        %v1693 = vrot.slane %v1692, 6
        %v1695 = vunpack.c.l.b16 %v1639
        %v1696 = vpack.c.b16 %v1678, %v1695
        %v1697 = vrot.slane %v1696, 7
        %1698 = vrot.lane.b32.xlu0 %v1697, 32
        %v1699 = vpop.permute.xlu0 %1698
        %v1701 = vunpack.c.l.b16 %v1640
        %v1702 = vpack.c.b16 %v1701, %v1701
        %v1703 = vrot.slane %v1702, 5
        %1704 = vrot.lane.b32.xlu0 %v1703, 64
        %v1705 = vpop.permute.xlu0 %1704
        %v1708 = vunpack.c.l.b16 %v1641
        %v1709 = vunpack.c.l.b16 %v1642
        %v1710 = vpack.c.b16 %v1709, %v1708
        %v1712 = vshrl.u32 %v1710, 16
        %v1714 = vshll.u32 %v1710, 16
        %v1716 = vrot.slane %v1714, 1
        %v1717 = vor.u32 %v1712, %v1716
        %1718 = vrot.lane.b32.xlu0 %v1717, 96
        %v1719 = vpop.permute.xlu0 %1718
        %v1721 = vunpack.c.l.b16 %v1643
        %v1722 = vpack.c.b16 %v1721, %v1721
        %v1724 = vshrl.u32 %v1722, 16
        %v1726 = vrot.slane %v1724, 5
        %v1727 = vshll.u32 %v1722, 16
        %v1729 = vrot.slane %v1727, 6
        %v1730 = vor.u32 %v1726, %v1729
        %v1733 = vsel %vm981, %v1648, %v1662
        %v1735 = vsel %vm985, %v1733, %v1674
        %v1737 = vsel %vm988, %v1735, %v1689
        %v1740 = vsel %vm981, %v1693, %v1699
        %v1742 = vsel %vm985, %v1740, %v1705
        %v1744 = vsel %vm988, %v1742, %v1719
        %v1747 = vrot.slane %v1737, 3
        %v1748 = vrot.slane %v1744, 3
        %v1749 = vrot.slane %v1730, 3
        %v1753 = vsel %vm981, %v1749, 0
        %1755 = vmatprep.subr.bf16.mxu0 0
        %1756 = vmatpush1.bf16.msra.mxu0 %v1085
        %1757 = vmatprep.subr.bf16.mxu0 0
        %1758 = vmatpush1.bf16.msra.mxu0 %v1084
        %1759 = vmatprep.subr.bf16.mxu0 0
        %1760 = vmatpush1.bf16.msra.mxu0 %v1083
        %1761 = vmatprep.subr.bf16.mxu0 0
        %1762 = vmatpush1.bf16.msra.mxu0 %v1082
        %1763 = vmatprep.subr.bf16.mxu0 0
        %1764 = vmatpush1.bf16.msra.mxu0 %v1081
        %1765 = vmatprep.subr.bf16.mxu0 0
        %1766 = vmatpush1.bf16.msra.mxu0 %v1080
        %1767 = vmatprep.subr.bf16.mxu0 0
        %1768 = vmatpush1.bf16.msra.mxu0 %v1079
        %1769 = vmatprep.subr.bf16.mxu0 0
        %1770 = vmatpush1.bf16.msra.mxu0 %v1078
        %1771 = vmatprep.subr.bf16.mxu0 0
        %1772 = vmatpush2.bf16.msra.mxu0 %v1093
        %1773 = vmatprep.subr.bf16.mxu0 0
        %1774 = vmatpush2.bf16.msra.mxu0 %v1092
        %1775 = vmatprep.subr.bf16.mxu0 0
        %1776 = vmatpush2.bf16.msra.mxu0 %v1091
        %1777 = vmatprep.subr.bf16.mxu0 0
        %1778 = vmatpush2.bf16.msra.mxu0 %v1090
        %1779 = vmatprep.subr.bf16.mxu0 0
        %1780 = vmatpush2.bf16.msra.mxu0 %v1089
        %1781 = vmatprep.subr.bf16.mxu0 0
        %1782 = vmatpush2.bf16.msra.mxu0 %v1088
        %1783 = vmatprep.subr.bf16.mxu0 0
        %1784 = vmatpush2.bf16.msra.mxu0 %v1087
        %1785 = vmatprep.subr.bf16.mxu0 0
        %1786 = vmatpush2.bf16.msra.mxu0 %v1086
        %1787 = vmatprep.mubr.bf16.mxu0 %v1748
        %1788 = vmatmul.mubr.bf16.gmra.mxu0 %v1747
        %v1789 = vpop.f32.mrf.mxu0
        %v1790 = vadd.f32 %v1004, %v1789
        %v1791 = vpop.f32.mrf.mxu0
        %v1792 = vpop.f32.mrf.mxu0
        %v1793 = vpop.f32.mrf.mxu0
        %1794 = vdwg.mxu0
        %1795 = vmatprep.subr.bf16.mxu0 0
        %1796 = vmatpush1.bf16.msra.mxu0 0
        %1797 = vmatprep.subr.bf16.mxu0 0
        %1798 = vmatpush1.bf16.msra.mxu0 0
        %1799 = vmatprep.subr.bf16.mxu0 0
        %1800 = vmatpush1.bf16.msra.mxu0 0
        %1801 = vmatprep.subr.bf16.mxu0 0
        %1802 = vmatpush1.bf16.msra.mxu0 0
        %1803 = vmatprep.subr.bf16.mxu0 0
        %1804 = vmatpush1.bf16.msra.mxu0 0
        %1805 = vmatprep.subr.bf16.mxu0 0
        %1806 = vmatpush1.bf16.msra.mxu0 0
        %1807 = vmatprep.subr.bf16.mxu0 0
        %1808 = vmatpush1.bf16.msra.mxu0 %v1095
        %1809 = vmatprep.subr.bf16.mxu0 0
        %1810 = vmatpush1.bf16.msra.mxu0 %v1094
        %1811 = vmatprep.subr.bf16.mxu0 0
        %1812 = vmatpush2.bf16.msra.mxu0 0
        %1813 = vmatprep.subr.bf16.mxu0 0
        %1814 = vmatpush2.bf16.msra.mxu0 0
        %1815 = vmatprep.subr.bf16.mxu0 0
        %1816 = vmatpush2.bf16.msra.mxu0 0
        %1817 = vmatprep.subr.bf16.mxu0 0
        %1818 = vmatpush2.bf16.msra.mxu0 0
        %1819 = vmatprep.subr.bf16.mxu0 0
        %1820 = vmatpush2.bf16.msra.mxu0 0
        %1821 = vmatprep.subr.bf16.mxu0 0
        %1822 = vmatpush2.bf16.msra.mxu0 0
        %1823 = vmatprep.subr.bf16.mxu0 0
        %1824 = vmatpush2.bf16.msra.mxu0 0
        %1825 = vmatprep.subr.bf16.mxu0 0
        %1826 = vmatpush2.bf16.msra.mxu0 0
        %1827 = vmatprep.mubr.bf16.mxu0 0
        %1828 = vmatmul.mubr.bf16.gmra.mxu0 %v1753
        %v1829 = vpop.f32.mrf.mxu0
        %v1830 = vadd.f32 %v1790, %v1829
        %v1831 = vpop.f32.mrf.mxu0
        %v1832 = vpop.f32.mrf.mxu0
        %v1833 = vpop.f32.mrf.mxu0
        %1834 = vdwg.mxu0
        %v1835 = vmax.f32 %v1830, 0.0
        %v1836 = vpack.c.bf16 %v1835, %v1835
        %v1838 = vunpack.c.l.b16 %v1836
        %v1839 = vpack.c.b16 %v1838, %v1838
        %v1840 = vrot.slane %v1839, 7
        %vm1842 = vcmask 519169
        %1843 = vst.msk [vmem:[#allocation3 + $0x8] sm:$0xe] %vm1842, %v1840
        %v1844 = vld [vmem:[#allocation2 + $0x34] sm:$0x7]
        %v1845 = vld [vmem:[#allocation2 + $0x34] sm:$0x8]
        %v1846 = vld [vmem:[#allocation2 + $0x38] sm:$0x7]
        %v1847 = vld [vmem:[#allocation2 + $0x34] sm:$0xf]
        %v1848 = vld [vmem:[#allocation2 + $0x38] sm:$0xc]
        %v1849 = vld [vmem:[#allocation2 + $0x3c] sm:$0x3]
        %v1850 = vld [vmem:[#allocation2 + $0x3c] sm:$0xc]
        %v1851 = vld [vmem:[#allocation2 + $0x40] sm:$0x1]
        %v1852 = vld [vmem:[#allocation2 + $0x38] sm:$0x8]
        %v1853 = vld [vmem:[#allocation2 + $0x40] sm:$0xe]
        %v1854 = vld [vmem:[#allocation2 + $0x44] sm:$0xf]
        %v1855 = vld [vmem:[#allocation2 + $0x44] sm:$0x1]
        %v1858 = vunpack.c.l.b16 %v1845
        %v1859 = vunpack.c.l.b16 %v1846
        %v1860 = vpack.c.b16 %v1859, %v1858
        %v1862 = vshrl.u32 %v1860, 16
        %v1864 = vrot.slane %v1862, 3
        %v1865 = vshll.u32 %v1860, 16
        %v1867 = vrot.slane %v1865, 4
        %v1868 = vor.u32 %v1864, %v1867
        %1869 = vrot.lane.b32.xlu0 %v1868, 32
        %v1870 = vpop.permute.xlu0 %1869
        %v1872 = vunpack.c.l.b16 %v1847
        %v1873 = vpack.c.b16 %v1872, %v1872
        %v1875 = vshrl.u32 %v1873, 16
        %v1877 = vshll.u32 %v1873, 16
        %v1879 = vrot.slane %v1877, 1
        %v1880 = vor.u32 %v1875, %v1879
        %1881 = vrot.lane.b32.xlu0 %v1880, 64
        %v1882 = vpop.permute.xlu0 %1881
        %v1885 = vunpack.c.l.b16 %v1848
        %v1886 = vunpack.c.l.b16 %v1849
        %v1887 = vpack.c.b16 %v1886, %v1885
        %v1889 = vshrl.u32 %v1887, 16
        %v1891 = vrot.slane %v1889, 2
        %v1892 = vshll.u32 %v1887, 16
        %v1894 = vrot.slane %v1892, 3
        %v1895 = vor.u32 %v1891, %v1894
        %1896 = vrot.lane.b32.xlu0 %v1895, 96
        %v1897 = vpop.permute.xlu0 %1896
        %v1900 = vunpack.c.l.b16 %v1850
        %v1901 = vunpack.c.l.b16 %v1851
        %v1902 = vpack.c.b16 %v1901, %v1900
        %v1903 = vrot.slane %v1902, 2
        %v1905 = vunpack.c.l.b16 %v1852
        %v1906 = vpack.c.b16 %v1886, %v1905
        %v1907 = vrot.slane %v1906, 3
        %1908 = vrot.lane.b32.xlu0 %v1907, 32
        %v1909 = vpop.permute.xlu0 %1908
        %v1911 = vunpack.c.l.b16 %v1853
        %v1912 = vpack.c.b16 %v1911, %v1911
        %v1913 = vrot.slane %v1912, 1
        %1914 = vrot.lane.b32.xlu0 %v1913, 64
        %v1915 = vpop.permute.xlu0 %1914
        %v1917 = vunpack.c.l.b16 %v1854
        %v1918 = vpack.c.b16 %v1917, %v1917
        %v1920 = vshrl.u32 %v1918, 16
        %v1922 = vshll.u32 %v1918, 16
        %v1924 = vrot.slane %v1922, 1
        %v1925 = vor.u32 %v1920, %v1924
        %1926 = vrot.lane.b32.xlu0 %v1925, 96
        %v1927 = vpop.permute.xlu0 %1926
        %v1929 = vunpack.c.l.b16 %v1855
        %v1930 = vpack.c.b16 %v1929, %v1911
        %v1932 = vshrl.u32 %v1930, 16
        %v1934 = vrot.slane %v1932, 1
        %v1935 = vshll.u32 %v1930, 16
        %v1937 = vrot.slane %v1935, 2
        %v1938 = vor.u32 %v1934, %v1937
        %v1941 = vsel %vm981, %v1844, %v1870
        %v1943 = vsel %vm985, %v1941, %v1882
        %v1945 = vsel %vm988, %v1943, %v1897
        %v1949 = vsel %vm981, %v1903, %v1909
        %v1951 = vsel %vm985, %v1949, %v1915
        %v1953 = vsel %vm988, %v1951, %v1927
        %v1956 = vsel %vm981, %v1938, 0
        %1958 = vmatprep.subr.bf16.mxu0 0
        %1959 = vmatpush1.bf16.msra.mxu0 %v1085
        %1960 = vmatprep.subr.bf16.mxu0 0
        %1961 = vmatpush1.bf16.msra.mxu0 %v1084
        %1962 = vmatprep.subr.bf16.mxu0 0
        %1963 = vmatpush1.bf16.msra.mxu0 %v1083
        %1964 = vmatprep.subr.bf16.mxu0 0
        %1965 = vmatpush1.bf16.msra.mxu0 %v1082
        %1966 = vmatprep.subr.bf16.mxu0 0
        %1967 = vmatpush1.bf16.msra.mxu0 %v1081
        %1968 = vmatprep.subr.bf16.mxu0 0
        %1969 = vmatpush1.bf16.msra.mxu0 %v1080
        %1970 = vmatprep.subr.bf16.mxu0 0
        %1971 = vmatpush1.bf16.msra.mxu0 %v1079
        %1972 = vmatprep.subr.bf16.mxu0 0
        %1973 = vmatpush1.bf16.msra.mxu0 %v1078
        %1974 = vmatprep.subr.bf16.mxu0 0
        %1975 = vmatpush2.bf16.msra.mxu0 %v1093
        %1976 = vmatprep.subr.bf16.mxu0 0
        %1977 = vmatpush2.bf16.msra.mxu0 %v1092
        %1978 = vmatprep.subr.bf16.mxu0 0
        %1979 = vmatpush2.bf16.msra.mxu0 %v1091
        %1980 = vmatprep.subr.bf16.mxu0 0
        %1981 = vmatpush2.bf16.msra.mxu0 %v1090
        %1982 = vmatprep.subr.bf16.mxu0 0
        %1983 = vmatpush2.bf16.msra.mxu0 %v1089
        %1984 = vmatprep.subr.bf16.mxu0 0
        %1985 = vmatpush2.bf16.msra.mxu0 %v1088
        %1986 = vmatprep.subr.bf16.mxu0 0
        %1987 = vmatpush2.bf16.msra.mxu0 %v1087
        %1988 = vmatprep.subr.bf16.mxu0 0
        %1989 = vmatpush2.bf16.msra.mxu0 %v1086
        %1990 = vmatprep.mubr.bf16.mxu0 %v1953
        %1991 = vmatmul.mubr.bf16.gmra.mxu0 %v1945
        %v1992 = vpop.f32.mrf.mxu0
        %v1993 = vadd.f32 %v1004, %v1992
        %v1994 = vpop.f32.mrf.mxu0
        %v1995 = vpop.f32.mrf.mxu0
        %v1996 = vpop.f32.mrf.mxu0
        %1997 = vdwg.mxu0
        %1998 = vmatprep.subr.bf16.mxu0 0
        %1999 = vmatpush1.bf16.msra.mxu0 0
        %2000 = vmatprep.subr.bf16.mxu0 0
        %2001 = vmatpush1.bf16.msra.mxu0 0
        %2002 = vmatprep.subr.bf16.mxu0 0
        %2003 = vmatpush1.bf16.msra.mxu0 0
        %2004 = vmatprep.subr.bf16.mxu0 0
        %2005 = vmatpush1.bf16.msra.mxu0 0
        %2006 = vmatprep.subr.bf16.mxu0 0
        %2007 = vmatpush1.bf16.msra.mxu0 0
        %2008 = vmatprep.subr.bf16.mxu0 0
        %2009 = vmatpush1.bf16.msra.mxu0 0
        %2010 = vmatprep.subr.bf16.mxu0 0
        %2011 = vmatpush1.bf16.msra.mxu0 %v1095
        %2012 = vmatprep.subr.bf16.mxu0 0
        %2013 = vmatpush1.bf16.msra.mxu0 %v1094
        %2014 = vmatprep.subr.bf16.mxu0 0
        %2015 = vmatpush2.bf16.msra.mxu0 0
        %2016 = vmatprep.subr.bf16.mxu0 0
        %2017 = vmatpush2.bf16.msra.mxu0 0
        %2018 = vmatprep.subr.bf16.mxu0 0
        %2019 = vmatpush2.bf16.msra.mxu0 0
        %2020 = vmatprep.subr.bf16.mxu0 0
        %2021 = vmatpush2.bf16.msra.mxu0 0
        %2022 = vmatprep.subr.bf16.mxu0 0
        %2023 = vmatpush2.bf16.msra.mxu0 0
        %2024 = vmatprep.subr.bf16.mxu0 0
        %2025 = vmatpush2.bf16.msra.mxu0 0
        %2026 = vmatprep.subr.bf16.mxu0 0
        %2027 = vmatpush2.bf16.msra.mxu0 0
        %2028 = vmatprep.subr.bf16.mxu0 0
        %2029 = vmatpush2.bf16.msra.mxu0 0
        %2030 = vmatprep.mubr.bf16.mxu0 0
        %2031 = vmatmul.mubr.bf16.gmra.mxu0 %v1956
        %v2032 = vpop.f32.mrf.mxu0
        %v2033 = vadd.f32 %v1993, %v2032
        %v2034 = vpop.f32.mrf.mxu0
        %v2035 = vpop.f32.mrf.mxu0
        %v2036 = vpop.f32.mrf.mxu0
        %2037 = vdwg.mxu0
        %v2038 = vmax.f32 %v2033, 0.0
        %v2039 = vpack.c.bf16 %v2038, %v2038
        %2040 = vst.msk [vmem:[#allocation3 + $0xc] sm:$0x7] %vm1199, %v2039
        %v2041 = vld [vmem:[#allocation2 + $0x40] sm:$0xe]
        %v2042 = vld [vmem:[#allocation2 + $0x44] sm:$0xf]
        %v2043 = vld [vmem:[#allocation2 + $0x44] sm:$0x1]
        %v2044 = vld [vmem:[#allocation2 + $0x44] sm:$0x8]
        %v2045 = vld [vmem:[#allocation2 + $0x48] sm:$0x7]
        %v2046 = vld [vmem:[#allocation2 + $0x48] sm:$0x8]
        %v2047 = vld [vmem:[#allocation2 + $0x4c] sm:$0x3]
        %v2048 = vld [vmem:[#allocation2 + $0x4c] sm:$0xc]
        %v2049 = vld [vmem:[#allocation2 + $0x50] sm:$0x1]
        %v2050 = vld [vmem:[#allocation2 + $0x50] sm:$0xe]
        %v2051 = vld [vmem:[#allocation2 + $0x54] sm:$0x1]
        %v2052 = vld [vmem:[#allocation2 + $0x50] sm:$0x3]
        %v2054 = vunpack.c.l.b16 %v2042
        %v2055 = vpack.c.b16 %v2054, %v2054
        %v2057 = vshrl.u32 %v2055, 16
        %v2059 = vrot.slane %v2057, 7
        %v2060 = vshll.u32 %v2055, 16
        %v2062 = vor.u32 %v2059, %v2060
        %2063 = vrot.lane.b32.xlu0 %v2062, 32
        %v2064 = vpop.permute.xlu0 %2063
        %v2067 = vunpack.c.l.b16 %v2041
        %v2068 = vunpack.c.l.b16 %v2043
        %v2069 = vpack.c.b16 %v2068, %v2067
        %v2071 = vshrl.u32 %v2069, 16
        %v2073 = vshll.u32 %v2069, 16
        %v2075 = vrot.slane %v2073, 1
        %v2076 = vor.u32 %v2071, %v2075
        %2077 = vrot.lane.b32.xlu0 %v2076, 64
        %v2078 = vpop.permute.xlu0 %2077
        %v2081 = vunpack.c.l.b16 %v2044
        %v2082 = vunpack.c.l.b16 %v2045
        %v2083 = vpack.c.b16 %v2082, %v2081
        %v2085 = vshrl.u32 %v2083, 16
        %v2087 = vrot.slane %v2085, 2
        %v2088 = vshll.u32 %v2083, 16
        %v2090 = vrot.slane %v2088, 3
        %v2091 = vor.u32 %v2087, %v2090
        %2092 = vrot.lane.b32.xlu0 %v2091, 96
        %v2093 = vpop.permute.xlu0 %2092
        %v2096 = vunpack.c.l.b16 %v2046
        %v2097 = vunpack.c.l.b16 %v2047
        %v2098 = vpack.c.b16 %v2097, %v2096
        %v2099 = vrot.slane %v2098, 2
        %v2100 = vpack.c.b16 %v2082, %v2082
        %v2101 = vrot.slane %v2100, 7
        %2102 = vrot.lane.b32.xlu0 %v2101, 32
        %v2103 = vpop.permute.xlu0 %2102
        %v2106 = vunpack.c.l.b16 %v2048
        %v2107 = vunpack.c.l.b16 %v2049
        %v2108 = vpack.c.b16 %v2107, %v2106
        %v2109 = vrot.slane %v2108, 1
        %2110 = vrot.lane.b32.xlu0 %v2109, 64
        %v2111 = vpop.permute.xlu0 %2110
        %v2114 = vunpack.c.l.b16 %v2050
        %v2115 = vunpack.c.l.b16 %v2051
        %v2116 = vpack.c.b16 %v2115, %v2114
        %v2118 = vshrl.u32 %v2116, 16
        %v2120 = vshll.u32 %v2116, 16
        %v2122 = vrot.slane %v2120, 1
        %v2123 = vor.u32 %v2118, %v2122
        %2124 = vrot.lane.b32.xlu0 %v2123, 96
        %v2125 = vpop.permute.xlu0 %2124
        %v2127 = vunpack.c.l.b16 %v2052
        %v2128 = vpack.c.b16 %v2127, %v2106
        %v2130 = vshrl.u32 %v2128, 16
        %v2132 = vrot.slane %v2130, 1
        %v2133 = vshll.u32 %v2128, 16
        %v2135 = vrot.slane %v2133, 2
        %v2136 = vor.u32 %v2132, %v2135
        %v2139 = vsel %vm981, %v2041, %v2064
        %v2141 = vsel %vm985, %v2139, %v2078
        %v2143 = vsel %vm988, %v2141, %v2093
        %v2146 = vsel %vm981, %v2099, %v2103
        %v2148 = vsel %vm985, %v2146, %v2111
        %v2150 = vsel %vm988, %v2148, %v2125
        %v2153 = vrot.slane %v2143, 1
        %v2154 = vrot.slane %v2150, 1
        %v2155 = vrot.slane %v2136, 1
        %v2159 = vsel %vm981, %v2155, 0
        %2161 = vmatprep.subr.bf16.mxu0 0
        %2162 = vmatpush1.bf16.msra.mxu0 %v1085
        %2163 = vmatprep.subr.bf16.mxu0 0
        %2164 = vmatpush1.bf16.msra.mxu0 %v1084
        %2165 = vmatprep.subr.bf16.mxu0 0
        %2166 = vmatpush1.bf16.msra.mxu0 %v1083
        %2167 = vmatprep.subr.bf16.mxu0 0
        %2168 = vmatpush1.bf16.msra.mxu0 %v1082
        %2169 = vmatprep.subr.bf16.mxu0 0
        %2170 = vmatpush1.bf16.msra.mxu0 %v1081
        %2171 = vmatprep.subr.bf16.mxu0 0
        %2172 = vmatpush1.bf16.msra.mxu0 %v1080
        %2173 = vmatprep.subr.bf16.mxu0 0
        %2174 = vmatpush1.bf16.msra.mxu0 %v1079
        %2175 = vmatprep.subr.bf16.mxu0 0
        %2176 = vmatpush1.bf16.msra.mxu0 %v1078
        %2177 = vmatprep.subr.bf16.mxu0 0
        %2178 = vmatpush2.bf16.msra.mxu0 %v1093
        %2179 = vmatprep.subr.bf16.mxu0 0
        %2180 = vmatpush2.bf16.msra.mxu0 %v1092
        %2181 = vmatprep.subr.bf16.mxu0 0
        %2182 = vmatpush2.bf16.msra.mxu0 %v1091
        %2183 = vmatprep.subr.bf16.mxu0 0
        %2184 = vmatpush2.bf16.msra.mxu0 %v1090
        %2185 = vmatprep.subr.bf16.mxu0 0
        %2186 = vmatpush2.bf16.msra.mxu0 %v1089
        %2187 = vmatprep.subr.bf16.mxu0 0
        %2188 = vmatpush2.bf16.msra.mxu0 %v1088
        %2189 = vmatprep.subr.bf16.mxu0 0
        %2190 = vmatpush2.bf16.msra.mxu0 %v1087
        %2191 = vmatprep.subr.bf16.mxu0 0
        %2192 = vmatpush2.bf16.msra.mxu0 %v1086
        %2193 = vmatprep.mubr.bf16.mxu0 %v2154
        %2194 = vmatmul.mubr.bf16.gmra.mxu0 %v2153
        %v2195 = vpop.f32.mrf.mxu0
        %v2196 = vadd.f32 %v1004, %v2195
        %v2197 = vpop.f32.mrf.mxu0
        %v2198 = vpop.f32.mrf.mxu0
        %v2199 = vpop.f32.mrf.mxu0
        %2200 = vdwg.mxu0
        %2201 = vmatprep.subr.bf16.mxu0 0
        %2202 = vmatpush1.bf16.msra.mxu0 0
        %2203 = vmatprep.subr.bf16.mxu0 0
        %2204 = vmatpush1.bf16.msra.mxu0 0
        %2205 = vmatprep.subr.bf16.mxu0 0
        %2206 = vmatpush1.bf16.msra.mxu0 0
        %2207 = vmatprep.subr.bf16.mxu0 0
        %2208 = vmatpush1.bf16.msra.mxu0 0
        %2209 = vmatprep.subr.bf16.mxu0 0
        %2210 = vmatpush1.bf16.msra.mxu0 0
        %2211 = vmatprep.subr.bf16.mxu0 0
        %2212 = vmatpush1.bf16.msra.mxu0 0
        %2213 = vmatprep.subr.bf16.mxu0 0
        %2214 = vmatpush1.bf16.msra.mxu0 %v1095
        %2215 = vmatprep.subr.bf16.mxu0 0
        %2216 = vmatpush1.bf16.msra.mxu0 %v1094
        %2217 = vmatprep.subr.bf16.mxu0 0
        %2218 = vmatpush2.bf16.msra.mxu0 0
        %2219 = vmatprep.subr.bf16.mxu0 0
        %2220 = vmatpush2.bf16.msra.mxu0 0
        %2221 = vmatprep.subr.bf16.mxu0 0
        %2222 = vmatpush2.bf16.msra.mxu0 0
        %2223 = vmatprep.subr.bf16.mxu0 0
        %2224 = vmatpush2.bf16.msra.mxu0 0
        %2225 = vmatprep.subr.bf16.mxu0 0
        %2226 = vmatpush2.bf16.msra.mxu0 0
        %2227 = vmatprep.subr.bf16.mxu0 0
        %2228 = vmatpush2.bf16.msra.mxu0 0
        %2229 = vmatprep.subr.bf16.mxu0 0
        %2230 = vmatpush2.bf16.msra.mxu0 0
        %2231 = vmatprep.subr.bf16.mxu0 0
        %2232 = vmatpush2.bf16.msra.mxu0 0
        %2233 = vmatprep.mubr.bf16.mxu0 0
        %2234 = vmatmul.mubr.bf16.gmra.mxu0 %v2159
        %v2235 = vpop.f32.mrf.mxu0
        %v2236 = vadd.f32 %v2196, %v2235
        %v2237 = vpop.f32.mrf.mxu0
        %v2238 = vpop.f32.mrf.mxu0
        %v2239 = vpop.f32.mrf.mxu0
        %2240 = vdwg.mxu0
        %v2241 = vmax.f32 %v2236, 0.0
        %v2242 = vpack.c.bf16 %v2241, %v2241
        %v2244 = vunpack.c.l.b16 %v2242
        %v2245 = vpack.c.b16 %v2244, %v2244
        %v2246 = vrot.slane %v2245, 5
        %v2247 = vrot.slane %v2246, 4
        %2250 = vst.msk [vmem:[#allocation3 + $0xc] sm:$0x8] %vm1410, %v2246
        %2251 = vst.msk [vmem:[#allocation3 + $0x10] sm:$0x3] %vm1412, %v2247
        %v2252 = vld [vmem:[#allocation3] sm:$0x1]
        %v2253 = vld [vmem:[#allocation3] sm:$0x2]
        %v2254 = vld [vmem:[#allocation3] sm:$0x8]
        %v2255 = vld [vmem:[#allocation3 + $0x4] sm:$0x1]
        %v2256 = vld [vmem:[#allocation3 + $0x4] sm:$0x4]
        %v2257 = vld [vmem:[#allocation3 + $0x4] sm:$0x8]
        %v2259 = vunpack.c.l.b16 %v2252
        %v2260 = vpack.c.b16 %v2259, %v2259
        %v2262 = vshrl.u32 %v2260, 16
        %2264 = vrot.lane.b32.xlu0 %v2262, 64
        %v2265 = vpop.permute.xlu0 %2264
        %v2267 = vunpack.c.l.b16 %v2253
        %v2268 = vpack.c.b16 %v2267, %v2267
        %v2269 = vrot.slane %v2268, 1
        %v2271 = vunpack.c.l.b16 %v2254
        %v2272 = vpack.c.b16 %v2271, %v2271
        %v2273 = vrot.slane %v2272, 3
        %2274 = vrot.lane.b32.xlu0 %v2273, 64
        %v2275 = vpop.permute.xlu0 %2274
        %v2277 = vshrl.u32 %v2272, 16
        %v2279 = vrot.slane %v2277, 3
        %v2281 = vunpack.c.l.b16 %v2255
        %v2282 = vpack.c.b16 %v2281, %v2281
        %2283 = vrot.lane.b32.xlu0 %v2282, 64
        %v2284 = vpop.permute.xlu0 %2283
        %v2286 = vunpack.c.l.b16 %v2256
        %v2287 = vpack.c.b16 %v2286, %v2286
        %v2288 = vrot.slane %v2287, 2
        %v2290 = vshrl.u32 %v2287, 16
        %v2292 = vrot.slane %v2290, 2
        %2293 = vrot.lane.b32.xlu0 %v2292, 64
        %v2294 = vpop.permute.xlu0 %2293
        %v2296 = vunpack.c.l.b16 %v2257
        %v2297 = vpack.c.b16 %v2296, %v2296
        %v2298 = vrot.slane %v2297, 3
        %v2301 = vsel %vm985, %v2252, %v2265
        %v2305 = vsel %vm985, %v2269, %v2275
        %v2309 = vsel %vm985, %v2279, %v2284
        %v2313 = vsel %vm985, %v2288, %v2294
        %v2387 = vunpack.c.l.b16 %v425
        %v2388 = vunpack.c.l.b16 %v426
        %v2389 = vunpack.c.l.b16 %v427
        %v2390 = vunpack.c.l.b16 %v428
        %v2391 = vunpack.c.l.b16 %v429
        %v2392 = vunpack.c.l.b16 %v430
        %v2393 = vunpack.c.l.b16 %v431
        %v2394 = vunpack.c.l.b16 %v432
        %v2395 = vunpack.c.l.b16 %v433
        %v2396 = vunpack.c.l.b16 %v434
        %v2397 = vunpack.c.l.b16 %v435
        %v2398 = vunpack.c.l.b16 %v436
        %v2399 = vunpack.c.l.b16 %v437
        %v2400 = vunpack.c.l.b16 %v438
        %v2401 = vunpack.c.l.b16 %v439
        %v2402 = vunpack.c.l.b16 %v440
        %v2403 = vunpack.c.l.b16 %v441
        %v2404 = vunpack.c.l.b16 %v442
        %v2405 = vunpack.c.l.b16 %v443
        %v2406 = vunpack.c.l.b16 %v444
        %v2407 = vunpack.c.l.b16 %v445
        %v2408 = vunpack.c.l.b16 %v446
        %v2409 = vunpack.c.l.b16 %v447
        %v2410 = vunpack.c.l.b16 %v448
        %v2411 = vunpack.c.l.b16 %v449
        %v2412 = vunpack.c.l.b16 %v450
        %v2413 = vunpack.c.l.b16 %v451
        %v2414 = vunpack.c.l.b16 %v452
        %v2415 = vunpack.c.l.b16 %v453
        %v2416 = vunpack.c.l.b16 %v454
        %v2417 = vunpack.c.l.b16 %v455
        %v2418 = vunpack.c.l.b16 %v456
        %v2419 = vunpack.c.l.b16 %v457
        %v2420 = vunpack.c.l.b16 %v458
        %v2421 = vunpack.c.l.b16 %v459
        %v2422 = vunpack.c.l.b16 %v460
        %v2423 = vunpack.c.l.b16 %v461
        %v2424 = vunpack.c.l.b16 %v462
        %v2425 = vunpack.c.l.b16 %v463
        %v2426 = vunpack.c.l.b16 %v464
        %v2427 = vunpack.c.l.b16 %v465
        %v2428 = vunpack.c.l.b16 %v466
        %v2429 = vunpack.c.l.b16 %v467
        %v2430 = vunpack.c.l.b16 %v468
        %v2431 = vunpack.c.l.b16 %v469
        %v2432 = vunpack.c.l.b16 %v470
        %v2433 = vunpack.c.l.b16 %v471
        %v2434 = vunpack.c.l.b16 %v472
        %v2435 = vunpack.c.l.b16 %v473
        %v2436 = vunpack.c.l.b16 %v474
        %v2437 = vunpack.c.l.b16 %v475
        %v2438 = vunpack.c.l.b16 %v476
        %v2439 = vunpack.c.l.b16 %v477
        %v2440 = vunpack.c.l.b16 %v478
        %v2441 = vunpack.c.l.b16 %v479
        %v2442 = vunpack.c.l.b16 %v480
        %v2443 = vunpack.c.l.b16 %v481
        %v2444 = vunpack.c.l.b16 %v482
        %v2445 = vunpack.c.l.b16 %v483
        %v2446 = vunpack.c.l.b16 %v484
        %v2447 = vunpack.c.l.b16 %v485
        %v2448 = vunpack.c.l.b16 %v486
        %v2449 = vunpack.c.l.b16 %v487
        %v2450 = vunpack.c.l.b16 %v488
        %v2451 = vunpack.c.l.b16 %v489
        %v2452 = vunpack.c.l.b16 %v490
        %v2453 = vunpack.c.l.b16 %v491
        %v2454 = vunpack.c.l.b16 %v492
        %v2455 = vunpack.c.l.b16 %v493
        %v2456 = vunpack.c.l.b16 %v494
        %v2457 = vunpack.c.l.b16 %v495
        %v2458 = vunpack.c.l.b16 %v496
        %v2459 = vpack.c.b16 %v2388, %v2387
        %v2460 = vpack.c.b16 %v2390, %v2389
        %v2461 = vpack.c.b16 %v2392, %v2391
        %v2462 = vpack.c.b16 %v2394, %v2393
        %v2463 = vpack.c.b16 %v2396, %v2395
        %v2464 = vpack.c.b16 %v2398, %v2397
        %v2465 = vpack.c.b16 %v2400, %v2399
        %v2466 = vpack.c.b16 %v2402, %v2401
        %v2467 = vpack.c.b16 %v2404, %v2403
        %v2468 = vpack.c.b16 %v2406, %v2405
        %v2469 = vpack.c.b16 %v2408, %v2407
        %v2470 = vpack.c.b16 %v2410, %v2409
        %v2471 = vpack.c.b16 %v2412, %v2411
        %v2472 = vpack.c.b16 %v2414, %v2413
        %v2473 = vpack.c.b16 %v2416, %v2415
        %v2474 = vpack.c.b16 %v2418, %v2417
        %v2475 = vpack.c.b16 %v2420, %v2419
        %v2476 = vpack.c.b16 %v2422, %v2421
        %v2477 = vpack.c.b16 %v2424, %v2423
        %v2478 = vpack.c.b16 %v2426, %v2425
        %v2479 = vpack.c.b16 %v2428, %v2427
        %v2480 = vpack.c.b16 %v2430, %v2429
        %v2481 = vpack.c.b16 %v2432, %v2431
        %v2482 = vpack.c.b16 %v2434, %v2433
        %v2483 = vpack.c.b16 %v2436, %v2435
        %v2484 = vpack.c.b16 %v2438, %v2437
        %v2485 = vpack.c.b16 %v2440, %v2439
        %v2486 = vpack.c.b16 %v2442, %v2441
        %v2487 = vpack.c.b16 %v2444, %v2443
        %v2488 = vpack.c.b16 %v2446, %v2445
        %v2489 = vpack.c.b16 %v2448, %v2447
        %v2490 = vpack.c.b16 %v2450, %v2449
        %v2491 = vpack.c.b16 %v2452, %v2451
        %v2492 = vpack.c.b16 %v2454, %v2453
        %v2493 = vpack.c.b16 %v2456, %v2455
        %v2494 = vpack.c.b16 %v2458, %v2457
        %v2532 = vsel %vm985, %v2298, 0
        %2534 = vmatprep.subr.bf16.mxu0 0
        %2535 = vmatpush1.bf16.msra.mxu0 %v2466
        %2536 = vmatprep.subr.bf16.mxu0 0
        %2537 = vmatpush1.bf16.msra.mxu0 %v2465
        %2538 = vmatprep.subr.bf16.mxu0 0
        %2539 = vmatpush1.bf16.msra.mxu0 %v2464
        %2540 = vmatprep.subr.bf16.mxu0 0
        %2541 = vmatpush1.bf16.msra.mxu0 %v2463
        %2542 = vmatprep.subr.bf16.mxu0 0
        %2543 = vmatpush1.bf16.msra.mxu0 %v2462
        %2544 = vmatprep.subr.bf16.mxu0 0
        %2545 = vmatpush1.bf16.msra.mxu0 %v2461
        %2546 = vmatprep.subr.bf16.mxu0 0
        %2547 = vmatpush1.bf16.msra.mxu0 %v2460
        %2548 = vmatprep.subr.bf16.mxu0 0
        %2549 = vmatpush1.bf16.msra.mxu0 %v2459
        %2550 = vmatprep.subr.bf16.mxu0 0
        %2551 = vmatpush2.bf16.msra.mxu0 %v2474
        %2552 = vmatprep.subr.bf16.mxu0 0
        %2553 = vmatpush2.bf16.msra.mxu0 %v2473
        %2554 = vmatprep.subr.bf16.mxu0 0
        %2555 = vmatpush2.bf16.msra.mxu0 %v2472
        %2556 = vmatprep.subr.bf16.mxu0 0
        %2557 = vmatpush2.bf16.msra.mxu0 %v2471
        %2558 = vmatprep.subr.bf16.mxu0 0
        %2559 = vmatpush2.bf16.msra.mxu0 %v2470
        %2560 = vmatprep.subr.bf16.mxu0 0
        %2561 = vmatpush2.bf16.msra.mxu0 %v2469
        %2562 = vmatprep.subr.bf16.mxu0 0
        %2563 = vmatpush2.bf16.msra.mxu0 %v2468
        %2564 = vmatprep.subr.bf16.mxu0 0
        %2565 = vmatpush2.bf16.msra.mxu0 %v2467
        %2566 = vmatprep.mubr.bf16.mxu0 %v2305
        %2567 = vmatmul.mubr.bf16.gmra.mxu0 %v2301
        %v2568 = vpop.f32.mrf.mxu0
        %v2569 = vadd.f32 %v497, %v2568
        %v2570 = vpop.f32.mrf.mxu0
        %v2571 = vpop.f32.mrf.mxu0
        %v2572 = vpop.f32.mrf.mxu0
        %2573 = vdwg.mxu0
        %2574 = vmatprep.subr.bf16.mxu0 0
        %2575 = vmatpush1.bf16.msra.mxu0 %v2482
        %2576 = vmatprep.subr.bf16.mxu0 0
        %2577 = vmatpush1.bf16.msra.mxu0 %v2481
        %2578 = vmatprep.subr.bf16.mxu0 0
        %2579 = vmatpush1.bf16.msra.mxu0 %v2480
        %2580 = vmatprep.subr.bf16.mxu0 0
        %2581 = vmatpush1.bf16.msra.mxu0 %v2479
        %2582 = vmatprep.subr.bf16.mxu0 0
        %2583 = vmatpush1.bf16.msra.mxu0 %v2478
        %2584 = vmatprep.subr.bf16.mxu0 0
        %2585 = vmatpush1.bf16.msra.mxu0 %v2477
        %2586 = vmatprep.subr.bf16.mxu0 0
        %2587 = vmatpush1.bf16.msra.mxu0 %v2476
        %2588 = vmatprep.subr.bf16.mxu0 0
        %2589 = vmatpush1.bf16.msra.mxu0 %v2475
        %2590 = vmatprep.subr.bf16.mxu0 0
        %2591 = vmatpush2.bf16.msra.mxu0 %v2490
        %2592 = vmatprep.subr.bf16.mxu0 0
        %2593 = vmatpush2.bf16.msra.mxu0 %v2489
        %2594 = vmatprep.subr.bf16.mxu0 0
        %2595 = vmatpush2.bf16.msra.mxu0 %v2488
        %2596 = vmatprep.subr.bf16.mxu0 0
        %2597 = vmatpush2.bf16.msra.mxu0 %v2487
        %2598 = vmatprep.subr.bf16.mxu0 0
        %2599 = vmatpush2.bf16.msra.mxu0 %v2486
        %2600 = vmatprep.subr.bf16.mxu0 0
        %2601 = vmatpush2.bf16.msra.mxu0 %v2485
        %2602 = vmatprep.subr.bf16.mxu0 0
        %2603 = vmatpush2.bf16.msra.mxu0 %v2484
        %2604 = vmatprep.subr.bf16.mxu0 0
        %2605 = vmatpush2.bf16.msra.mxu0 %v2483
        %2606 = vmatprep.mubr.bf16.mxu0 %v2313
        %2607 = vmatmul.mubr.bf16.gmra.mxu0 %v2309
        %v2608 = vpop.f32.mrf.mxu0
        %v2609 = vadd.f32 %v2569, %v2608
        %v2610 = vpop.f32.mrf.mxu0
        %v2611 = vpop.f32.mrf.mxu0
        %v2612 = vpop.f32.mrf.mxu0
        %2613 = vdwg.mxu0
        %2614 = vmatprep.subr.bf16.mxu0 0
        %2615 = vmatpush1.bf16.msra.mxu0 0
        %2616 = vmatprep.subr.bf16.mxu0 0
        %2617 = vmatpush1.bf16.msra.mxu0 0
        %2618 = vmatprep.subr.bf16.mxu0 0
        %2619 = vmatpush1.bf16.msra.mxu0 0
        %2620 = vmatprep.subr.bf16.mxu0 0
        %2621 = vmatpush1.bf16.msra.mxu0 0
        %2622 = vmatprep.subr.bf16.mxu0 0
        %2623 = vmatpush1.bf16.msra.mxu0 %v2494
        %2624 = vmatprep.subr.bf16.mxu0 0
        %2625 = vmatpush1.bf16.msra.mxu0 %v2493
        %2626 = vmatprep.subr.bf16.mxu0 0
        %2627 = vmatpush1.bf16.msra.mxu0 %v2492
        %2628 = vmatprep.subr.bf16.mxu0 0
        %2629 = vmatpush1.bf16.msra.mxu0 %v2491
        %2630 = vmatprep.subr.bf16.mxu0 0
        %2631 = vmatpush2.bf16.msra.mxu0 0
        %2632 = vmatprep.subr.bf16.mxu0 0
        %2633 = vmatpush2.bf16.msra.mxu0 0
        %2634 = vmatprep.subr.bf16.mxu0 0
        %2635 = vmatpush2.bf16.msra.mxu0 0
        %2636 = vmatprep.subr.bf16.mxu0 0
        %2637 = vmatpush2.bf16.msra.mxu0 0
        %2638 = vmatprep.subr.bf16.mxu0 0
        %2639 = vmatpush2.bf16.msra.mxu0 0
        %2640 = vmatprep.subr.bf16.mxu0 0
        %2641 = vmatpush2.bf16.msra.mxu0 0
        %2642 = vmatprep.subr.bf16.mxu0 0
        %2643 = vmatpush2.bf16.msra.mxu0 0
        %2644 = vmatprep.subr.bf16.mxu0 0
        %2645 = vmatpush2.bf16.msra.mxu0 0
        %2646 = vmatprep.mubr.bf16.mxu0 0
        %2647 = vmatmul.mubr.bf16.gmra.mxu0 %v2532
        %v2648 = vpop.f32.mrf.mxu0
        %v2649 = vadd.f32 %v2609, %v2648
        %v2650 = vpop.f32.mrf.mxu0
        %v2651 = vpop.f32.mrf.mxu0
        %v2652 = vpop.f32.mrf.mxu0
        %2653 = vdwg.mxu0
        %v2654 = vmax.f32 %v2649, 0.0
        %v2655 = vld [vmem:[#allocation3] sm:$0x4]
        %v2656 = vld [vmem:[#allocation3 + $0x4] sm:$0x2]
        %v2657 = vld [vmem:[#allocation3 + $0x8] sm:$0x1]
        %v2659 = vshrl.u32 %v2268, 16
        %2661 = vrot.lane.b32.xlu0 %v2659, 64
        %v2662 = vpop.permute.xlu0 %2661
        %v2664 = vunpack.c.l.b16 %v2655
        %v2665 = vpack.c.b16 %v2664, %v2664
        %v2666 = vrot.slane %v2665, 1
        %v2667 = vrot.slane %v2282, 7
        %2668 = vrot.lane.b32.xlu0 %v2667, 64
        %v2669 = vpop.permute.xlu0 %2668
        %v2671 = vshrl.u32 %v2282, 16
        %v2673 = vrot.slane %v2671, 7
        %v2675 = vunpack.c.l.b16 %v2656
        %v2676 = vpack.c.b16 %v2675, %v2675
        %2677 = vrot.lane.b32.xlu0 %v2676, 64
        %v2678 = vpop.permute.xlu0 %2677
        %v2679 = vrot.slane %v2297, 2
        %v2681 = vshrl.u32 %v2297, 16
        %v2683 = vrot.slane %v2681, 2
        %2684 = vrot.lane.b32.xlu0 %v2683, 64
        %v2685 = vpop.permute.xlu0 %2684
        %v2687 = vunpack.c.l.b16 %v2657
        %v2688 = vpack.c.b16 %v2687, %v2687
        %v2689 = vrot.slane %v2688, 7
        %v2692 = vsel %vm985, %v2253, %v2662
        %v2695 = vsel %vm985, %v2666, %v2669
        %v2698 = vsel %vm985, %v2673, %v2678
        %v2701 = vsel %vm985, %v2679, %v2685
        %v2706 = vrot.slane %v2692, 1
        %v2707 = vrot.slane %v2695, 1
        %v2708 = vrot.slane %v2698, 1
        %v2709 = vrot.slane %v2701, 1
        %v2710 = vrot.slane %v2689, 1
        %v2716 = vsel %vm985, %v2710, 0
        %2718 = vmatprep.subr.bf16.mxu0 0
        %2719 = vmatpush1.bf16.msra.mxu0 %v2466
        %2720 = vmatprep.subr.bf16.mxu0 0
        %2721 = vmatpush1.bf16.msra.mxu0 %v2465
        %2722 = vmatprep.subr.bf16.mxu0 0
        %2723 = vmatpush1.bf16.msra.mxu0 %v2464
        %2724 = vmatprep.subr.bf16.mxu0 0
        %2725 = vmatpush1.bf16.msra.mxu0 %v2463
        %2726 = vmatprep.subr.bf16.mxu0 0
        %2727 = vmatpush1.bf16.msra.mxu0 %v2462
        %2728 = vmatprep.subr.bf16.mxu0 0
        %2729 = vmatpush1.bf16.msra.mxu0 %v2461
        %2730 = vmatprep.subr.bf16.mxu0 0
        %2731 = vmatpush1.bf16.msra.mxu0 %v2460
        %2732 = vmatprep.subr.bf16.mxu0 0
        %2733 = vmatpush1.bf16.msra.mxu0 %v2459
        %2734 = vmatprep.subr.bf16.mxu0 0
        %2735 = vmatpush2.bf16.msra.mxu0 %v2474
        %2736 = vmatprep.subr.bf16.mxu0 0
        %2737 = vmatpush2.bf16.msra.mxu0 %v2473
        %2738 = vmatprep.subr.bf16.mxu0 0
        %2739 = vmatpush2.bf16.msra.mxu0 %v2472
        %2740 = vmatprep.subr.bf16.mxu0 0
        %2741 = vmatpush2.bf16.msra.mxu0 %v2471
        %2742 = vmatprep.subr.bf16.mxu0 0
        %2743 = vmatpush2.bf16.msra.mxu0 %v2470
        %2744 = vmatprep.subr.bf16.mxu0 0
        %2745 = vmatpush2.bf16.msra.mxu0 %v2469
        %2746 = vmatprep.subr.bf16.mxu0 0
        %2747 = vmatpush2.bf16.msra.mxu0 %v2468
        %2748 = vmatprep.subr.bf16.mxu0 0
        %2749 = vmatpush2.bf16.msra.mxu0 %v2467
        %2750 = vmatprep.mubr.bf16.mxu0 %v2707
        %2751 = vmatmul.mubr.bf16.gmra.mxu0 %v2706
        %v2752 = vpop.f32.mrf.mxu0
        %v2753 = vadd.f32 %v497, %v2752
        %v2754 = vpop.f32.mrf.mxu0
        %v2755 = vpop.f32.mrf.mxu0
        %v2756 = vpop.f32.mrf.mxu0
        %2757 = vdwg.mxu0
        %2758 = vmatprep.subr.bf16.mxu0 0
        %2759 = vmatpush1.bf16.msra.mxu0 %v2482
        %2760 = vmatprep.subr.bf16.mxu0 0
        %2761 = vmatpush1.bf16.msra.mxu0 %v2481
        %2762 = vmatprep.subr.bf16.mxu0 0
        %2763 = vmatpush1.bf16.msra.mxu0 %v2480
        %2764 = vmatprep.subr.bf16.mxu0 0
        %2765 = vmatpush1.bf16.msra.mxu0 %v2479
        %2766 = vmatprep.subr.bf16.mxu0 0
        %2767 = vmatpush1.bf16.msra.mxu0 %v2478
        %2768 = vmatprep.subr.bf16.mxu0 0
        %2769 = vmatpush1.bf16.msra.mxu0 %v2477
        %2770 = vmatprep.subr.bf16.mxu0 0
        %2771 = vmatpush1.bf16.msra.mxu0 %v2476
        %2772 = vmatprep.subr.bf16.mxu0 0
        %2773 = vmatpush1.bf16.msra.mxu0 %v2475
        %2774 = vmatprep.subr.bf16.mxu0 0
        %2775 = vmatpush2.bf16.msra.mxu0 %v2490
        %2776 = vmatprep.subr.bf16.mxu0 0
        %2777 = vmatpush2.bf16.msra.mxu0 %v2489
        %2778 = vmatprep.subr.bf16.mxu0 0
        %2779 = vmatpush2.bf16.msra.mxu0 %v2488
        %2780 = vmatprep.subr.bf16.mxu0 0
        %2781 = vmatpush2.bf16.msra.mxu0 %v2487
        %2782 = vmatprep.subr.bf16.mxu0 0
        %2783 = vmatpush2.bf16.msra.mxu0 %v2486
        %2784 = vmatprep.subr.bf16.mxu0 0
        %2785 = vmatpush2.bf16.msra.mxu0 %v2485
        %2786 = vmatprep.subr.bf16.mxu0 0
        %2787 = vmatpush2.bf16.msra.mxu0 %v2484
        %2788 = vmatprep.subr.bf16.mxu0 0
        %2789 = vmatpush2.bf16.msra.mxu0 %v2483
        %2790 = vmatprep.mubr.bf16.mxu0 %v2709
        %2791 = vmatmul.mubr.bf16.gmra.mxu0 %v2708
        %v2792 = vpop.f32.mrf.mxu0
        %v2793 = vadd.f32 %v2753, %v2792
        %v2794 = vpop.f32.mrf.mxu0
        %v2795 = vpop.f32.mrf.mxu0
        %v2796 = vpop.f32.mrf.mxu0
        %2797 = vdwg.mxu0
        %2798 = vmatprep.subr.bf16.mxu0 0
        %2799 = vmatpush1.bf16.msra.mxu0 0
        %2800 = vmatprep.subr.bf16.mxu0 0
        %2801 = vmatpush1.bf16.msra.mxu0 0
        %2802 = vmatprep.subr.bf16.mxu0 0
        %2803 = vmatpush1.bf16.msra.mxu0 0
        %2804 = vmatprep.subr.bf16.mxu0 0
        %2805 = vmatpush1.bf16.msra.mxu0 0
        %2806 = vmatprep.subr.bf16.mxu0 0
        %2807 = vmatpush1.bf16.msra.mxu0 %v2494
        %2808 = vmatprep.subr.bf16.mxu0 0
        %2809 = vmatpush1.bf16.msra.mxu0 %v2493
        %2810 = vmatprep.subr.bf16.mxu0 0
        %2811 = vmatpush1.bf16.msra.mxu0 %v2492
        %2812 = vmatprep.subr.bf16.mxu0 0
        %2813 = vmatpush1.bf16.msra.mxu0 %v2491
        %2814 = vmatprep.subr.bf16.mxu0 0
        %2815 = vmatpush2.bf16.msra.mxu0 0
        %2816 = vmatprep.subr.bf16.mxu0 0
        %2817 = vmatpush2.bf16.msra.mxu0 0
        %2818 = vmatprep.subr.bf16.mxu0 0
        %2819 = vmatpush2.bf16.msra.mxu0 0
        %2820 = vmatprep.subr.bf16.mxu0 0
        %2821 = vmatpush2.bf16.msra.mxu0 0
        %2822 = vmatprep.subr.bf16.mxu0 0
        %2823 = vmatpush2.bf16.msra.mxu0 0
        %2824 = vmatprep.subr.bf16.mxu0 0
        %2825 = vmatpush2.bf16.msra.mxu0 0
        %2826 = vmatprep.subr.bf16.mxu0 0
        %2827 = vmatpush2.bf16.msra.mxu0 0
        %2828 = vmatprep.subr.bf16.mxu0 0
        %2829 = vmatpush2.bf16.msra.mxu0 0
        %2830 = vmatprep.mubr.bf16.mxu0 0
        %2831 = vmatmul.mubr.bf16.gmra.mxu0 %v2716
        %v2832 = vpop.f32.mrf.mxu0
        %v2833 = vadd.f32 %v2793, %v2832
        %v2834 = vpop.f32.mrf.mxu0
        %v2835 = vpop.f32.mrf.mxu0
        %v2836 = vpop.f32.mrf.mxu0
        %2837 = vdwg.mxu0
        %v2838 = vmax.f32 %v2833, 0.0
        %v2839 = vld [vmem:[#allocation3 + $0x8] sm:$0x2]
        %v2840 = vld [vmem:[#allocation3 + $0x8] sm:$0x4]
        %v2841 = vld [vmem:[#allocation3 + $0xc] sm:$0x1]
        %v2842 = vld [vmem:[#allocation3 + $0xc] sm:$0x2]
        %2843 = vrot.lane.b32.xlu0 %v2290, 64
        %v2844 = vpop.permute.xlu0 %2843
        %v2845 = vrot.slane %v2297, 1
        %v2847 = vunpack.c.l.b16 %v2839
        %v2848 = vpack.c.b16 %v2847, %v2847
        %v2849 = vrot.slane %v2848, 7
        %2850 = vrot.lane.b32.xlu0 %v2849, 64
        %v2851 = vpop.permute.xlu0 %2850
        %v2853 = vshrl.u32 %v2848, 16
        %v2855 = vrot.slane %v2853, 7
        %v2857 = vunpack.c.l.b16 %v2840
        %v2858 = vpack.c.b16 %v2857, %v2857
        %2859 = vrot.lane.b32.xlu0 %v2858, 64
        %v2860 = vpop.permute.xlu0 %2859
        %v2862 = vunpack.c.l.b16 %v2841
        %v2863 = vpack.c.b16 %v2862, %v2862
        %v2864 = vrot.slane %v2863, 6
        %v2866 = vshrl.u32 %v2863, 16
        %v2868 = vrot.slane %v2866, 6
        %2869 = vrot.lane.b32.xlu0 %v2868, 64
        %v2870 = vpop.permute.xlu0 %2869
        %v2872 = vunpack.c.l.b16 %v2842
        %v2873 = vpack.c.b16 %v2872, %v2872
        %v2874 = vrot.slane %v2873, 7
        %v2877 = vsel %vm985, %v2256, %v2844
        %v2880 = vsel %vm985, %v2845, %v2851
        %v2883 = vsel %vm985, %v2855, %v2860
        %v2886 = vsel %vm985, %v2864, %v2870
        %v2891 = vrot.slane %v2877, 2
        %v2892 = vrot.slane %v2880, 2
        %v2893 = vrot.slane %v2883, 2
        %v2894 = vrot.slane %v2886, 2
        %v2895 = vrot.slane %v2874, 2
        %v2901 = vsel %vm985, %v2895, 0
        %2903 = vmatprep.subr.bf16.mxu0 0
        %2904 = vmatpush1.bf16.msra.mxu0 %v2466
        %2905 = vmatprep.subr.bf16.mxu0 0
        %2906 = vmatpush1.bf16.msra.mxu0 %v2465
        %2907 = vmatprep.subr.bf16.mxu0 0
        %2908 = vmatpush1.bf16.msra.mxu0 %v2464
        %2909 = vmatprep.subr.bf16.mxu0 0
        %2910 = vmatpush1.bf16.msra.mxu0 %v2463
        %2911 = vmatprep.subr.bf16.mxu0 0
        %2912 = vmatpush1.bf16.msra.mxu0 %v2462
        %2913 = vmatprep.subr.bf16.mxu0 0
        %2914 = vmatpush1.bf16.msra.mxu0 %v2461
        %2915 = vmatprep.subr.bf16.mxu0 0
        %2916 = vmatpush1.bf16.msra.mxu0 %v2460
        %2917 = vmatprep.subr.bf16.mxu0 0
        %2918 = vmatpush1.bf16.msra.mxu0 %v2459
        %2919 = vmatprep.subr.bf16.mxu0 0
        %2920 = vmatpush2.bf16.msra.mxu0 %v2474
        %2921 = vmatprep.subr.bf16.mxu0 0
        %2922 = vmatpush2.bf16.msra.mxu0 %v2473
        %2923 = vmatprep.subr.bf16.mxu0 0
        %2924 = vmatpush2.bf16.msra.mxu0 %v2472
        %2925 = vmatprep.subr.bf16.mxu0 0
        %2926 = vmatpush2.bf16.msra.mxu0 %v2471
        %2927 = vmatprep.subr.bf16.mxu0 0
        %2928 = vmatpush2.bf16.msra.mxu0 %v2470
        %2929 = vmatprep.subr.bf16.mxu0 0
        %2930 = vmatpush2.bf16.msra.mxu0 %v2469
        %2931 = vmatprep.subr.bf16.mxu0 0
        %2932 = vmatpush2.bf16.msra.mxu0 %v2468
        %2933 = vmatprep.subr.bf16.mxu0 0
        %2934 = vmatpush2.bf16.msra.mxu0 %v2467
        %2935 = vmatprep.mubr.bf16.mxu0 %v2892
        %2936 = vmatmul.mubr.bf16.gmra.mxu0 %v2891
        %v2937 = vpop.f32.mrf.mxu0
        %v2938 = vadd.f32 %v497, %v2937
        %v2939 = vpop.f32.mrf.mxu0
        %v2940 = vpop.f32.mrf.mxu0
        %v2941 = vpop.f32.mrf.mxu0
        %2942 = vdwg.mxu0
        %2943 = vmatprep.subr.bf16.mxu0 0
        %2944 = vmatpush1.bf16.msra.mxu0 %v2482
        %2945 = vmatprep.subr.bf16.mxu0 0
        %2946 = vmatpush1.bf16.msra.mxu0 %v2481
        %2947 = vmatprep.subr.bf16.mxu0 0
        %2948 = vmatpush1.bf16.msra.mxu0 %v2480
        %2949 = vmatprep.subr.bf16.mxu0 0
        %2950 = vmatpush1.bf16.msra.mxu0 %v2479
        %2951 = vmatprep.subr.bf16.mxu0 0
        %2952 = vmatpush1.bf16.msra.mxu0 %v2478
        %2953 = vmatprep.subr.bf16.mxu0 0
        %2954 = vmatpush1.bf16.msra.mxu0 %v2477
        %2955 = vmatprep.subr.bf16.mxu0 0
        %2956 = vmatpush1.bf16.msra.mxu0 %v2476
        %2957 = vmatprep.subr.bf16.mxu0 0
        %2958 = vmatpush1.bf16.msra.mxu0 %v2475
        %2959 = vmatprep.subr.bf16.mxu0 0
        %2960 = vmatpush2.bf16.msra.mxu0 %v2490
        %2961 = vmatprep.subr.bf16.mxu0 0
        %2962 = vmatpush2.bf16.msra.mxu0 %v2489
        %2963 = vmatprep.subr.bf16.mxu0 0
        %2964 = vmatpush2.bf16.msra.mxu0 %v2488
        %2965 = vmatprep.subr.bf16.mxu0 0
        %2966 = vmatpush2.bf16.msra.mxu0 %v2487
        %2967 = vmatprep.subr.bf16.mxu0 0
        %2968 = vmatpush2.bf16.msra.mxu0 %v2486
        %2969 = vmatprep.subr.bf16.mxu0 0
        %2970 = vmatpush2.bf16.msra.mxu0 %v2485
        %2971 = vmatprep.subr.bf16.mxu0 0
        %2972 = vmatpush2.bf16.msra.mxu0 %v2484
        %2973 = vmatprep.subr.bf16.mxu0 0
        %2974 = vmatpush2.bf16.msra.mxu0 %v2483
        %2975 = vmatprep.mubr.bf16.mxu0 %v2894
        %2976 = vmatmul.mubr.bf16.gmra.mxu0 %v2893
        %v2977 = vpop.f32.mrf.mxu0
        %v2978 = vadd.f32 %v2938, %v2977
        %v2979 = vpop.f32.mrf.mxu0
        %v2980 = vpop.f32.mrf.mxu0
        %v2981 = vpop.f32.mrf.mxu0
        %2982 = vdwg.mxu0
        %2983 = vmatprep.subr.bf16.mxu0 0
        %2984 = vmatpush1.bf16.msra.mxu0 0
        %2985 = vmatprep.subr.bf16.mxu0 0
        %2986 = vmatpush1.bf16.msra.mxu0 0
        %2987 = vmatprep.subr.bf16.mxu0 0
        %2988 = vmatpush1.bf16.msra.mxu0 0
        %2989 = vmatprep.subr.bf16.mxu0 0
        %2990 = vmatpush1.bf16.msra.mxu0 0
        %2991 = vmatprep.subr.bf16.mxu0 0
        %2992 = vmatpush1.bf16.msra.mxu0 %v2494
        %2993 = vmatprep.subr.bf16.mxu0 0
        %2994 = vmatpush1.bf16.msra.mxu0 %v2493
        %2995 = vmatprep.subr.bf16.mxu0 0
        %2996 = vmatpush1.bf16.msra.mxu0 %v2492
        %2997 = vmatprep.subr.bf16.mxu0 0
        %2998 = vmatpush1.bf16.msra.mxu0 %v2491
        %2999 = vmatprep.subr.bf16.mxu0 0
        %3000 = vmatpush2.bf16.msra.mxu0 0
        %3001 = vmatprep.subr.bf16.mxu0 0
        %3002 = vmatpush2.bf16.msra.mxu0 0
        %3003 = vmatprep.subr.bf16.mxu0 0
        %3004 = vmatpush2.bf16.msra.mxu0 0
        %3005 = vmatprep.subr.bf16.mxu0 0
        %3006 = vmatpush2.bf16.msra.mxu0 0
        %3007 = vmatprep.subr.bf16.mxu0 0
        %3008 = vmatpush2.bf16.msra.mxu0 0
        %3009 = vmatprep.subr.bf16.mxu0 0
        %3010 = vmatpush2.bf16.msra.mxu0 0
        %3011 = vmatprep.subr.bf16.mxu0 0
        %3012 = vmatpush2.bf16.msra.mxu0 0
        %3013 = vmatprep.subr.bf16.mxu0 0
        %3014 = vmatpush2.bf16.msra.mxu0 0
        %3015 = vmatprep.mubr.bf16.mxu0 0
        %3016 = vmatmul.mubr.bf16.gmra.mxu0 %v2901
        %v3017 = vpop.f32.mrf.mxu0
        %v3018 = vadd.f32 %v2978, %v3017
        %v3019 = vpop.f32.mrf.mxu0
        %v3020 = vpop.f32.mrf.mxu0
        %v3021 = vpop.f32.mrf.mxu0
        %3022 = vdwg.mxu0
        %v3023 = vmax.f32 %v3018, 0.0
        %v3024 = vld [vmem:[#allocation3 + $0x8] sm:$0x8]
        %v3025 = vld [vmem:[#allocation3 + $0xc] sm:$0x4]
        %3026 = vrot.lane.b32.xlu0 %v2681, 64
        %v3027 = vpop.permute.xlu0 %3026
        %v3028 = vrot.slane %v2688, 5
        %v3029 = vrot.slane %v2858, 7
        %3030 = vrot.lane.b32.xlu0 %v3029, 64
        %v3031 = vpop.permute.xlu0 %3030
        %v3033 = vshrl.u32 %v2858, 16
        %v3035 = vrot.slane %v3033, 7
        %v3037 = vunpack.c.l.b16 %v3024
        %v3038 = vpack.c.b16 %v3037, %v3037
        %3039 = vrot.lane.b32.xlu0 %v3038, 64
        %v3040 = vpop.permute.xlu0 %3039
        %v3041 = vrot.slane %v2873, 6
        %v3043 = vshrl.u32 %v2873, 16
        %v3045 = vrot.slane %v3043, 6
        %3046 = vrot.lane.b32.xlu0 %v3045, 64
        %v3047 = vpop.permute.xlu0 %3046
        %v3049 = vunpack.c.l.b16 %v3025
        %v3050 = vpack.c.b16 %v3049, %v3049
        %v3051 = vrot.slane %v3050, 7
        %v3054 = vsel %vm985, %v2257, %v3027
        %v3057 = vsel %vm985, %v3028, %v3031
        %v3060 = vsel %vm985, %v3035, %v3040
        %v3063 = vsel %vm985, %v3041, %v3047
        %v3068 = vrot.slane %v3054, 3
        %v3069 = vrot.slane %v3057, 3
        %v3070 = vrot.slane %v3060, 3
        %v3071 = vrot.slane %v3063, 3
        %v3072 = vrot.slane %v3051, 3
        %v3078 = vsel %vm985, %v3072, 0
        %3080 = vmatprep.subr.bf16.mxu0 0
        %3081 = vmatpush1.bf16.msra.mxu0 %v2466
        %3082 = vmatprep.subr.bf16.mxu0 0
        %3083 = vmatpush1.bf16.msra.mxu0 %v2465
        %3084 = vmatprep.subr.bf16.mxu0 0
        %3085 = vmatpush1.bf16.msra.mxu0 %v2464
        %3086 = vmatprep.subr.bf16.mxu0 0
        %3087 = vmatpush1.bf16.msra.mxu0 %v2463
        %3088 = vmatprep.subr.bf16.mxu0 0
        %3089 = vmatpush1.bf16.msra.mxu0 %v2462
        %3090 = vmatprep.subr.bf16.mxu0 0
        %3091 = vmatpush1.bf16.msra.mxu0 %v2461
        %3092 = vmatprep.subr.bf16.mxu0 0
        %3093 = vmatpush1.bf16.msra.mxu0 %v2460
        %3094 = vmatprep.subr.bf16.mxu0 0
        %3095 = vmatpush1.bf16.msra.mxu0 %v2459
        %3096 = vmatprep.subr.bf16.mxu0 0
        %3097 = vmatpush2.bf16.msra.mxu0 %v2474
        %3098 = vmatprep.subr.bf16.mxu0 0
        %3099 = vmatpush2.bf16.msra.mxu0 %v2473
        %3100 = vmatprep.subr.bf16.mxu0 0
        %3101 = vmatpush2.bf16.msra.mxu0 %v2472
        %3102 = vmatprep.subr.bf16.mxu0 0
        %3103 = vmatpush2.bf16.msra.mxu0 %v2471
        %3104 = vmatprep.subr.bf16.mxu0 0
        %3105 = vmatpush2.bf16.msra.mxu0 %v2470
        %3106 = vmatprep.subr.bf16.mxu0 0
        %3107 = vmatpush2.bf16.msra.mxu0 %v2469
        %3108 = vmatprep.subr.bf16.mxu0 0
        %3109 = vmatpush2.bf16.msra.mxu0 %v2468
        %3110 = vmatprep.subr.bf16.mxu0 0
        %3111 = vmatpush2.bf16.msra.mxu0 %v2467
        %3112 = vmatprep.mubr.bf16.mxu0 %v3069
        %3113 = vmatmul.mubr.bf16.gmra.mxu0 %v3068
        %v3114 = vpop.f32.mrf.mxu0
        %v3115 = vadd.f32 %v497, %v3114
        %v3116 = vpop.f32.mrf.mxu0
        %v3117 = vpop.f32.mrf.mxu0
        %v3118 = vpop.f32.mrf.mxu0
        %3119 = vdwg.mxu0
        %3120 = vmatprep.subr.bf16.mxu0 0
        %3121 = vmatpush1.bf16.msra.mxu0 %v2482
        %3122 = vmatprep.subr.bf16.mxu0 0
        %3123 = vmatpush1.bf16.msra.mxu0 %v2481
        %3124 = vmatprep.subr.bf16.mxu0 0
        %3125 = vmatpush1.bf16.msra.mxu0 %v2480
        %3126 = vmatprep.subr.bf16.mxu0 0
        %3127 = vmatpush1.bf16.msra.mxu0 %v2479
        %3128 = vmatprep.subr.bf16.mxu0 0
        %3129 = vmatpush1.bf16.msra.mxu0 %v2478
        %3130 = vmatprep.subr.bf16.mxu0 0
        %3131 = vmatpush1.bf16.msra.mxu0 %v2477
        %3132 = vmatprep.subr.bf16.mxu0 0
        %3133 = vmatpush1.bf16.msra.mxu0 %v2476
        %3134 = vmatprep.subr.bf16.mxu0 0
        %3135 = vmatpush1.bf16.msra.mxu0 %v2475
        %3136 = vmatprep.subr.bf16.mxu0 0
        %3137 = vmatpush2.bf16.msra.mxu0 %v2490
        %3138 = vmatprep.subr.bf16.mxu0 0
        %3139 = vmatpush2.bf16.msra.mxu0 %v2489
        %3140 = vmatprep.subr.bf16.mxu0 0
        %3141 = vmatpush2.bf16.msra.mxu0 %v2488
        %3142 = vmatprep.subr.bf16.mxu0 0
        %3143 = vmatpush2.bf16.msra.mxu0 %v2487
        %3144 = vmatprep.subr.bf16.mxu0 0
        %3145 = vmatpush2.bf16.msra.mxu0 %v2486
        %3146 = vmatprep.subr.bf16.mxu0 0
        %3147 = vmatpush2.bf16.msra.mxu0 %v2485
        %3148 = vmatprep.subr.bf16.mxu0 0
        %3149 = vmatpush2.bf16.msra.mxu0 %v2484
        %3150 = vmatprep.subr.bf16.mxu0 0
        %3151 = vmatpush2.bf16.msra.mxu0 %v2483
        %3152 = vmatprep.mubr.bf16.mxu0 %v3071
        %3153 = vmatmul.mubr.bf16.gmra.mxu0 %v3070
        %v3154 = vpop.f32.mrf.mxu0
        %v3155 = vadd.f32 %v3115, %v3154
        %v3156 = vpop.f32.mrf.mxu0
        %v3157 = vpop.f32.mrf.mxu0
        %v3158 = vpop.f32.mrf.mxu0
        %3159 = vdwg.mxu0
        %3160 = vmatprep.subr.bf16.mxu0 0
        %3161 = vmatpush1.bf16.msra.mxu0 0
        %3162 = vmatprep.subr.bf16.mxu0 0
        %3163 = vmatpush1.bf16.msra.mxu0 0
        %3164 = vmatprep.subr.bf16.mxu0 0
        %3165 = vmatpush1.bf16.msra.mxu0 0
        %3166 = vmatprep.subr.bf16.mxu0 0
        %3167 = vmatpush1.bf16.msra.mxu0 0
        %3168 = vmatprep.subr.bf16.mxu0 0
        %3169 = vmatpush1.bf16.msra.mxu0 %v2494
        %3170 = vmatprep.subr.bf16.mxu0 0
        %3171 = vmatpush1.bf16.msra.mxu0 %v2493
        %3172 = vmatprep.subr.bf16.mxu0 0
        %3173 = vmatpush1.bf16.msra.mxu0 %v2492
        %3174 = vmatprep.subr.bf16.mxu0 0
        %3175 = vmatpush1.bf16.msra.mxu0 %v2491
        %3176 = vmatprep.subr.bf16.mxu0 0
        %3177 = vmatpush2.bf16.msra.mxu0 0
        %3178 = vmatprep.subr.bf16.mxu0 0
        %3179 = vmatpush2.bf16.msra.mxu0 0
        %3180 = vmatprep.subr.bf16.mxu0 0
        %3181 = vmatpush2.bf16.msra.mxu0 0
        %3182 = vmatprep.subr.bf16.mxu0 0
        %3183 = vmatpush2.bf16.msra.mxu0 0
        %3184 = vmatprep.subr.bf16.mxu0 0
        %3185 = vmatpush2.bf16.msra.mxu0 0
        %3186 = vmatprep.subr.bf16.mxu0 0
        %3187 = vmatpush2.bf16.msra.mxu0 0
        %3188 = vmatprep.subr.bf16.mxu0 0
        %3189 = vmatpush2.bf16.msra.mxu0 0
        %3190 = vmatprep.subr.bf16.mxu0 0
        %3191 = vmatpush2.bf16.msra.mxu0 0
        %3192 = vmatprep.mubr.bf16.mxu0 0
        %3193 = vmatmul.mubr.bf16.gmra.mxu0 %v3078
        %v3194 = vpop.f32.mrf.mxu0
        %v3195 = vadd.f32 %v3155, %v3194
        %v3196 = vpop.f32.mrf.mxu0
        %v3197 = vpop.f32.mrf.mxu0
        %v3198 = vpop.f32.mrf.mxu0
        %3199 = vdwg.mxu0
        %v3200 = vmax.f32 %v3195, 0.0
        %v3201 = vpack.c.bf16 %v2654, %v2654
        %v3202 = vpack.c.bf16 %v2838, %v2838
        %v3203 = vpack.c.bf16 %v3023, %v3023
        %v3204 = vpack.c.bf16 %v3200, %v3200
        %v3209 = vcombine.low %v3201, %v3202
        %v3210 = vcombine.low %v3203, %v3204
        %v3212 = vunpack.c.l.s4 1966171168
        %v3213 = vunpack.c.0.s8 %v3212
        %v3214 = vlaneseq
        %v3215 = vshrl.u32 %v3214, 7
        %v3216 = vsub.s32 %v3213, %v3215
        %v3217 = vrot.slane %v3209, %v3216
        %v3219 = vunpack.c.l.s4 1966171168
        %v3220 = vunpack.c.0.s8 %v3219
        %v3221 = vlaneseq
        %v3222 = vshrl.u32 %v3221, 7
        %v3223 = vsub.s32 %v3220, %v3222
        %v3224 = vrot.slane %v3210, %v3223
        %v3225 = vcombine.low %v3217, %v3224
        %v3227 = vunpack.c.l.s4 1966171168
        %v3228 = vunpack.c.0.s8 %v3227
        %v3229 = vlaneseq
        %v3230 = vshrl.u32 %v3229, 7
        %v3231 = vsub.s32 %v3228, %v3230
        %v3232 = vrot.slane %v3225, %v3231
        %vm3234 = vcmask 1040384
        %vm3235 = vmand %vm3234, %vm881
        %vm3236 = vcmask 1041409
        %vm3237 = vsmask.f32 1280
        %vm3238 = vmand %vm3236, %vm3237
        %vm3239 = vmor %vm3238, %vm3235
        %vm3240 = vcmask 1042434
        %vm3241 = vsmask.f32 2304
        %vm3242 = vmand %vm3240, %vm3241
        %vm3243 = vmor %vm3242, %vm3239
        %vm3244 = vcmask 1043459
        %vm3245 = vsmask.f32 3328
        %vm3246 = vmand %vm3244, %vm3245
        %vm3247 = vmor %vm3246, %vm3243
        %v3248 = vld [vmem:[#allocation4] sm:$0xf]
        %v3249 = vsel %vm3247, %v3232, %v3248
        %3250 = vst [vmem:[#allocation4] sm:$0xf] %v3249
        %v3251 = vld [vmem:[#allocation4] sm:$0xf]
        %v3252 = vld [vmem:[%s7] sm:$0xff]
        %v3253 = vld [vmem:[%s7 + $0x8] sm:$0xff]
        %v3254 = vld [vmem:[%s7 + $0x10] sm:$0xff]
        %v3255 = vld [vmem:[%s7 + $0x18] sm:$0xff]
        %v3256 = vld [vmem:[%s7 + $0x20] sm:$0xff]
        %v3257 = vld [vmem:[%s7 + $0x28] sm:$0xff]
        %v3258 = vld [vmem:[%s7 + $0x30] sm:$0xff]
        %v3259 = vld [vmem:[%s7 + $0x38] sm:$0xff]
        %v3260 = vld [vmem:[%s7 + $0x40] sm:$0xff]
        %v3261 = vld [vmem:[%s7 + $0x48] sm:$0xff]
        %v3262 = vld [vmem:[%s7 + $0x50] sm:$0xff]
        %v3263 = vld [vmem:[%s7 + $0x58] sm:$0xff]
        %v3264 = vld [vmem:[%s7 + $0x60] sm:$0xff]
        %v3265 = vld [vmem:[%s7 + $0x68] sm:$0xff]
        %v3266 = vld [vmem:[%s7 + $0x70] sm:$0xff]
        %v3267 = vld [vmem:[%s7 + $0x78] sm:$0xff]
        %v3268 = vld [vmem:[%s7 + $0x80] sm:$0xff]
        %v3269 = vld [vmem:[%s7 + $0x88] sm:$0xff]
        %v3270 = vld [vmem:[%s7 + $0x90] sm:$0xff]
        %v3271 = vld [vmem:[%s7 + $0x98] sm:$0xff]
        %v3272 = vld [vmem:[%s7 + $0xa0] sm:$0xff]
        %v3273 = vld [vmem:[%s7 + $0xa8] sm:$0xff]
        %v3274 = vld [vmem:[%s7 + $0xb0] sm:$0xff]
        %v3275 = vld [vmem:[%s7 + $0xb8] sm:$0xff]
        %v3276 = vld [vmem:[%s7 + $0xc0] sm:$0xff]
        %v3277 = vld [vmem:[%s7 + $0xc8] sm:$0xff]
        %v3278 = vld [vmem:[%s7 + $0xd0] sm:$0xff]
        %v3279 = vld [vmem:[%s7 + $0xd8] sm:$0xff]
        %v3280 = vld [vmem:[%s7 + $0xe0] sm:$0xff]
        %v3281 = vld [vmem:[%s7 + $0xe8] sm:$0xff]
        %v3282 = vld [vmem:[%s7 + $0xf0] sm:$0xff]
        %v3283 = vld [vmem:[%s7 + $0xf8] sm:$0xff]
        %v3284 = vld [vmem:[%s7 + $0x100] sm:$0xff]
        %v3285 = vld [vmem:[%s7 + $0x108] sm:$0xff]
        %v3286 = vld [vmem:[%s7 + $0x110] sm:$0xff]
        %v3287 = vld [vmem:[%s7 + $0x118] sm:$0xff]
        %v3288 = vld [vmem:[%s7 + $0x120] sm:$0xff]
        %v3289 = vld [vmem:[%s7 + $0x128] sm:$0xff]
        %v3290 = vld [vmem:[%s7 + $0x130] sm:$0xff]
        %v3291 = vld [vmem:[%s7 + $0x138] sm:$0xff]
        %v3292 = vld [vmem:[%s7 + $0x140] sm:$0xff]
        %v3293 = vld [vmem:[%s7 + $0x148] sm:$0xff]
        %v3294 = vld [vmem:[%s7 + $0x150] sm:$0xff]
        %v3295 = vld [vmem:[%s7 + $0x158] sm:$0xff]
        %v3296 = vld [vmem:[%s7 + $0x160] sm:$0xff]
        %v3297 = vld [vmem:[%s7 + $0x168] sm:$0xff]
        %v3298 = vld [vmem:[%s7 + $0x170] sm:$0xff]
        %v3299 = vld [vmem:[%s7 + $0x178] sm:$0xff]
        %v3300 = vld [vmem:[%s7 + $0x180] sm:$0xff]
        %v3301 = vld [vmem:[%s7 + $0x188] sm:$0xff]
        %v3302 = vld [vmem:[%s7 + $0x190] sm:$0xff]
        %v3303 = vld [vmem:[%s7 + $0x198] sm:$0xff]
        %v3304 = vld [vmem:[%s7 + $0x1a0] sm:$0xff]
        %v3305 = vld [vmem:[%s7 + $0x1a8] sm:$0xff]
        %v3306 = vld [vmem:[%s7 + $0x1b0] sm:$0xff]
        %v3307 = vld [vmem:[%s7 + $0x1b8] sm:$0xff]
        %v3308 = vld [vmem:[%s7 + $0x1c0] sm:$0xff]
        %v3309 = vld [vmem:[%s7 + $0x1c8] sm:$0xff]
        %v3310 = vld [vmem:[%s7 + $0x1d0] sm:$0xff]
        %v3311 = vld [vmem:[%s7 + $0x1d8] sm:$0xff]
        %v3312 = vld [vmem:[%s7 + $0x1e0] sm:$0xff]
        %v3313 = vld [vmem:[%s7 + $0x1e8] sm:$0xff]
        %v3314 = vld [vmem:[%s7 + $0x1f0] sm:$0xff]
        %v3315 = vld [vmem:[%s7 + $0x1f8] sm:$0xff]
        %v3316 = vld [vmem:[%s7 + $0x200] sm:$0xff]
        %v3317 = vld [vmem:[%s7 + $0x208] sm:$0xff]
        %v3318 = vld [vmem:[%s7 + $0x210] sm:$0xff]
        %v3319 = vld [vmem:[%s7 + $0x218] sm:$0xff]
        %v3320 = vld [vmem:[%s7 + $0x220] sm:$0xff]
        %v3321 = vld [vmem:[%s7 + $0x228] sm:$0xff]
        %v3322 = vld [vmem:[%s7 + $0x230] sm:$0xff]
        %v3323 = vld [vmem:[%s7 + $0x238] sm:$0xff]
        %v3324 = vld [vmem:[%s7 + $0x240] sm:$0xff]
        %v3325 = vld [vmem:[%s7 + $0x248] sm:$0xff]
        %v3326 = vld [vmem:[%s7 + $0x250] sm:$0xff]
        %v3327 = vld [vmem:[%s7 + $0x258] sm:$0xff]
        %v3328 = vld [vmem:[%s7 + $0x260] sm:$0xff]
        %v3329 = vld [vmem:[%s7 + $0x268] sm:$0xff]
        %v3330 = vld [vmem:[%s7 + $0x270] sm:$0xff]
        %v3331 = vld [vmem:[%s7 + $0x278] sm:$0xff]
        %v3332 = vld [vmem:[%s7 + $0x280] sm:$0xff]
        %v3333 = vld [vmem:[%s7 + $0x288] sm:$0xff]
        %v3334 = vld [vmem:[%s7 + $0x290] sm:$0xff]
        %v3335 = vld [vmem:[%s7 + $0x298] sm:$0xff]
        %v3336 = vld [vmem:[%s7 + $0x2a0] sm:$0xff]
        %v3337 = vld [vmem:[%s7 + $0x2a8] sm:$0xff]
        %v3338 = vld [vmem:[%s7 + $0x2b0] sm:$0xff]
        %v3339 = vld [vmem:[%s7 + $0x2b8] sm:$0xff]
        %v3340 = vld [vmem:[%s7 + $0x2c0] sm:$0xff]
        %v3341 = vld [vmem:[%s7 + $0x2c8] sm:$0xff]
        %v3342 = vld [vmem:[%s7 + $0x2d0] sm:$0xff]
        %v3343 = vld [vmem:[%s7 + $0x2d8] sm:$0xff]
        %v3344 = vld [vmem:[%s7 + $0x2e0] sm:$0xff]
        %v3345 = vld [vmem:[%s7 + $0x2e8] sm:$0xff]
        %v3346 = vld [vmem:[%s7 + $0x2f0] sm:$0xff]
        %v3347 = vld [vmem:[%s7 + $0x2f8] sm:$0xff]
        %v3348 = vld [vmem:[%s7 + $0x300] sm:$0xff]
        %v3349 = vld [vmem:[%s7 + $0x308] sm:$0xff]
        %v3350 = vld [vmem:[%s7 + $0x310] sm:$0xff]
        %v3351 = vld [vmem:[%s7 + $0x318] sm:$0xff]
        %v3352 = vld [vmem:[%s7 + $0x320] sm:$0xff]
        %v3353 = vld [vmem:[%s7 + $0x328] sm:$0xff]
        %v3354 = vld [vmem:[%s7 + $0x330] sm:$0xff]
        %v3355 = vld [vmem:[%s7 + $0x338] sm:$0xff]
        %v3356 = vld [vmem:[%s7 + $0x340] sm:$0xff]
        %v3357 = vld [vmem:[%s7 + $0x348] sm:$0xff]
        %v3358 = vld [vmem:[%s7 + $0x350] sm:$0xff]
        %v3359 = vld [vmem:[%s7 + $0x358] sm:$0xff]
        %v3360 = vld [vmem:[%s7 + $0x360] sm:$0xff]
        %v3361 = vld [vmem:[%s7 + $0x368] sm:$0xff]
        %v3362 = vld [vmem:[%s7 + $0x370] sm:$0xff]
        %v3363 = vld [vmem:[%s7 + $0x378] sm:$0xff]
        %v3364 = vld [vmem:[%s7 + $0x380] sm:$0xff]
        %v3365 = vld [vmem:[%s7 + $0x388] sm:$0xff]
        %v3366 = vld [vmem:[%s7 + $0x390] sm:$0xff]
        %v3367 = vld [vmem:[%s7 + $0x398] sm:$0xff]
        %v3368 = vld [vmem:[%s7 + $0x3a0] sm:$0xff]
        %v3369 = vld [vmem:[%s7 + $0x3a8] sm:$0xff]
        %v3370 = vld [vmem:[%s7 + $0x3b0] sm:$0xff]
        %v3371 = vld [vmem:[%s7 + $0x3b8] sm:$0xff]
        %v3372 = vld [vmem:[%s7 + $0x3c0] sm:$0xff]
        %v3373 = vld [vmem:[%s7 + $0x3c8] sm:$0xff]
        %v3374 = vld [vmem:[%s7 + $0x3d0] sm:$0xff]
        %v3375 = vld [vmem:[%s7 + $0x3d8] sm:$0xff]
        %v3376 = vld [vmem:[%s7 + $0x3e0] sm:$0xff]
        %v3377 = vld [vmem:[%s7 + $0x3e8] sm:$0xff]
        %v3378 = vld [vmem:[%s7 + $0x3f0] sm:$0xff]
        %v3379 = vld [vmem:[%s7 + $0x3f8] sm:$0xff]
        %v3380 = vld [vmem:[%s8] sm:$0xf]
        %v3383 = vunpack.c.l.s4 1966171168
        %v3384 = vunpack.c.0.s8 %v3383
        %v3385 = vlaneseq
        %v3386 = vshrl.u32 %v3385, 7
        %v3387 = vsub.s32 %v3384, %v3386
        %v3388 = vrot.slane %v3251, %v3387
        %v3389 = vcombine.high %v3388, %v3388
        %v3391 = vunpack.c.l.s4 1966171168
        %v3392 = vunpack.c.0.s8 %v3391
        %v3393 = vlaneseq
        %v3394 = vshrl.u32 %v3393, 7
        %v3395 = vsub.s32 %v3392, %v3394
        %v3396 = vrot.slane %v3388, %v3395
        %v3398 = vunpack.c.l.s4 1966171168
        %v3399 = vunpack.c.0.s8 %v3398
        %v3400 = vlaneseq
        %v3401 = vshrl.u32 %v3400, 7
        %v3402 = vsub.s32 %v3399, %v3401
        %v3403 = vrot.slane %v3389, %v3402
        %v3404 = vcombine.high %v3396, %v3396
        %v3405 = vcombine.high %v3403, %v3403
        %v3538 = vunpack.c.l.b16 %v3252
        %v3539 = vunpack.c.h.b16 %v3252
        %v3540 = vunpack.c.l.b16 %v3253
        %v3541 = vunpack.c.h.b16 %v3253
        %v3542 = vunpack.c.l.b16 %v3254
        %v3543 = vunpack.c.h.b16 %v3254
        %v3544 = vunpack.c.l.b16 %v3255
        %v3545 = vunpack.c.h.b16 %v3255
        %v3546 = vunpack.c.l.b16 %v3256
        %v3547 = vunpack.c.h.b16 %v3256
        %v3548 = vunpack.c.l.b16 %v3257
        %v3549 = vunpack.c.h.b16 %v3257
        %v3550 = vunpack.c.l.b16 %v3258
        %v3551 = vunpack.c.h.b16 %v3258
        %v3552 = vunpack.c.l.b16 %v3259
        %v3553 = vunpack.c.h.b16 %v3259
        %v3554 = vunpack.c.l.b16 %v3260
        %v3555 = vunpack.c.h.b16 %v3260
        %v3556 = vunpack.c.l.b16 %v3261
        %v3557 = vunpack.c.h.b16 %v3261
        %v3558 = vunpack.c.l.b16 %v3262
        %v3559 = vunpack.c.h.b16 %v3262
        %v3560 = vunpack.c.l.b16 %v3263
        %v3561 = vunpack.c.h.b16 %v3263
        %v3562 = vunpack.c.l.b16 %v3264
        %v3563 = vunpack.c.h.b16 %v3264
        %v3564 = vunpack.c.l.b16 %v3265
        %v3565 = vunpack.c.h.b16 %v3265
        %v3566 = vunpack.c.l.b16 %v3266
        %v3567 = vunpack.c.h.b16 %v3266
        %v3568 = vunpack.c.l.b16 %v3267
        %v3569 = vunpack.c.h.b16 %v3267
        %v3570 = vunpack.c.l.b16 %v3268
        %v3571 = vunpack.c.h.b16 %v3268
        %v3572 = vunpack.c.l.b16 %v3269
        %v3573 = vunpack.c.h.b16 %v3269
        %v3574 = vunpack.c.l.b16 %v3270
        %v3575 = vunpack.c.h.b16 %v3270
        %v3576 = vunpack.c.l.b16 %v3271
        %v3577 = vunpack.c.h.b16 %v3271
        %v3578 = vunpack.c.l.b16 %v3272
        %v3579 = vunpack.c.h.b16 %v3272
        %v3580 = vunpack.c.l.b16 %v3273
        %v3581 = vunpack.c.h.b16 %v3273
        %v3582 = vunpack.c.l.b16 %v3274
        %v3583 = vunpack.c.h.b16 %v3274
        %v3584 = vunpack.c.l.b16 %v3275
        %v3585 = vunpack.c.h.b16 %v3275
        %v3586 = vunpack.c.l.b16 %v3276
        %v3587 = vunpack.c.h.b16 %v3276
        %v3588 = vunpack.c.l.b16 %v3277
        %v3589 = vunpack.c.h.b16 %v3277
        %v3590 = vunpack.c.l.b16 %v3278
        %v3591 = vunpack.c.h.b16 %v3278
        %v3592 = vunpack.c.l.b16 %v3279
        %v3593 = vunpack.c.h.b16 %v3279
        %v3594 = vunpack.c.l.b16 %v3280
        %v3595 = vunpack.c.h.b16 %v3280
        %v3596 = vunpack.c.l.b16 %v3281
        %v3597 = vunpack.c.h.b16 %v3281
        %v3598 = vunpack.c.l.b16 %v3282
        %v3599 = vunpack.c.h.b16 %v3282
        %v3600 = vunpack.c.l.b16 %v3283
        %v3601 = vunpack.c.h.b16 %v3283
        %v3602 = vunpack.c.l.b16 %v3284
        %v3603 = vunpack.c.h.b16 %v3284
        %v3604 = vunpack.c.l.b16 %v3285
        %v3605 = vunpack.c.h.b16 %v3285
        %v3606 = vunpack.c.l.b16 %v3286
        %v3607 = vunpack.c.h.b16 %v3286
        %v3608 = vunpack.c.l.b16 %v3287
        %v3609 = vunpack.c.h.b16 %v3287
        %v3610 = vunpack.c.l.b16 %v3288
        %v3611 = vunpack.c.h.b16 %v3288
        %v3612 = vunpack.c.l.b16 %v3289
        %v3613 = vunpack.c.h.b16 %v3289
        %v3614 = vunpack.c.l.b16 %v3290
        %v3615 = vunpack.c.h.b16 %v3290
        %v3616 = vunpack.c.l.b16 %v3291
        %v3617 = vunpack.c.h.b16 %v3291
        %v3618 = vunpack.c.l.b16 %v3292
        %v3619 = vunpack.c.h.b16 %v3292
        %v3620 = vunpack.c.l.b16 %v3293
        %v3621 = vunpack.c.h.b16 %v3293
        %v3622 = vunpack.c.l.b16 %v3294
        %v3623 = vunpack.c.h.b16 %v3294
        %v3624 = vunpack.c.l.b16 %v3295
        %v3625 = vunpack.c.h.b16 %v3295
        %v3626 = vunpack.c.l.b16 %v3296
        %v3627 = vunpack.c.h.b16 %v3296
        %v3628 = vunpack.c.l.b16 %v3297
        %v3629 = vunpack.c.h.b16 %v3297
        %v3630 = vunpack.c.l.b16 %v3298
        %v3631 = vunpack.c.h.b16 %v3298
        %v3632 = vunpack.c.l.b16 %v3299
        %v3633 = vunpack.c.h.b16 %v3299
        %v3634 = vunpack.c.l.b16 %v3300
        %v3635 = vunpack.c.h.b16 %v3300
        %v3636 = vunpack.c.l.b16 %v3301
        %v3637 = vunpack.c.h.b16 %v3301
        %v3638 = vunpack.c.l.b16 %v3302
        %v3639 = vunpack.c.h.b16 %v3302
        %v3640 = vunpack.c.l.b16 %v3303
        %v3641 = vunpack.c.h.b16 %v3303
        %v3642 = vunpack.c.l.b16 %v3304
        %v3643 = vunpack.c.h.b16 %v3304
        %v3644 = vunpack.c.l.b16 %v3305
        %v3645 = vunpack.c.h.b16 %v3305
        %v3646 = vunpack.c.l.b16 %v3306
        %v3647 = vunpack.c.h.b16 %v3306
        %v3648 = vunpack.c.l.b16 %v3307
        %v3649 = vunpack.c.h.b16 %v3307
        %v3650 = vunpack.c.l.b16 %v3308
        %v3651 = vunpack.c.h.b16 %v3308
        %v3652 = vunpack.c.l.b16 %v3309
        %v3653 = vunpack.c.h.b16 %v3309
        %v3654 = vunpack.c.l.b16 %v3310
        %v3655 = vunpack.c.h.b16 %v3310
        %v3656 = vunpack.c.l.b16 %v3311
        %v3657 = vunpack.c.h.b16 %v3311
        %v3658 = vunpack.c.l.b16 %v3312
        %v3659 = vunpack.c.h.b16 %v3312
        %v3660 = vunpack.c.l.b16 %v3313
        %v3661 = vunpack.c.h.b16 %v3313
        %v3662 = vunpack.c.l.b16 %v3314
        %v3663 = vunpack.c.h.b16 %v3314
        %v3664 = vunpack.c.l.b16 %v3315
        %v3665 = vunpack.c.h.b16 %v3315
        %v3666 = vunpack.c.l.b16 %v3316
        %v3667 = vunpack.c.h.b16 %v3316
        %v3668 = vunpack.c.l.b16 %v3317
        %v3669 = vunpack.c.h.b16 %v3317
        %v3670 = vunpack.c.l.b16 %v3318
        %v3671 = vunpack.c.h.b16 %v3318
        %v3672 = vunpack.c.l.b16 %v3319
        %v3673 = vunpack.c.h.b16 %v3319
        %v3674 = vunpack.c.l.b16 %v3320
        %v3675 = vunpack.c.h.b16 %v3320
        %v3676 = vunpack.c.l.b16 %v3321
        %v3677 = vunpack.c.h.b16 %v3321
        %v3678 = vunpack.c.l.b16 %v3322
        %v3679 = vunpack.c.h.b16 %v3322
        %v3680 = vunpack.c.l.b16 %v3323
        %v3681 = vunpack.c.h.b16 %v3323
        %v3682 = vunpack.c.l.b16 %v3324
        %v3683 = vunpack.c.h.b16 %v3324
        %v3684 = vunpack.c.l.b16 %v3325
        %v3685 = vunpack.c.h.b16 %v3325
        %v3686 = vunpack.c.l.b16 %v3326
        %v3687 = vunpack.c.h.b16 %v3326
        %v3688 = vunpack.c.l.b16 %v3327
        %v3689 = vunpack.c.h.b16 %v3327
        %v3690 = vunpack.c.l.b16 %v3328
        %v3691 = vunpack.c.h.b16 %v3328
        %v3692 = vunpack.c.l.b16 %v3329
        %v3693 = vunpack.c.h.b16 %v3329
        %v3694 = vunpack.c.l.b16 %v3330
        %v3695 = vunpack.c.h.b16 %v3330
        %v3696 = vunpack.c.l.b16 %v3331
        %v3697 = vunpack.c.h.b16 %v3331
        %v3698 = vunpack.c.l.b16 %v3332
        %v3699 = vunpack.c.h.b16 %v3332
        %v3700 = vunpack.c.l.b16 %v3333
        %v3701 = vunpack.c.h.b16 %v3333
        %v3702 = vunpack.c.l.b16 %v3334
        %v3703 = vunpack.c.h.b16 %v3334
        %v3704 = vunpack.c.l.b16 %v3335
        %v3705 = vunpack.c.h.b16 %v3335
        %v3706 = vunpack.c.l.b16 %v3336
        %v3707 = vunpack.c.h.b16 %v3336
        %v3708 = vunpack.c.l.b16 %v3337
        %v3709 = vunpack.c.h.b16 %v3337
        %v3710 = vunpack.c.l.b16 %v3338
        %v3711 = vunpack.c.h.b16 %v3338
        %v3712 = vunpack.c.l.b16 %v3339
        %v3713 = vunpack.c.h.b16 %v3339
        %v3714 = vunpack.c.l.b16 %v3340
        %v3715 = vunpack.c.h.b16 %v3340
        %v3716 = vunpack.c.l.b16 %v3341
        %v3717 = vunpack.c.h.b16 %v3341
        %v3718 = vunpack.c.l.b16 %v3342
        %v3719 = vunpack.c.h.b16 %v3342
        %v3720 = vunpack.c.l.b16 %v3343
        %v3721 = vunpack.c.h.b16 %v3343
        %v3722 = vunpack.c.l.b16 %v3344
        %v3723 = vunpack.c.h.b16 %v3344
        %v3724 = vunpack.c.l.b16 %v3345
        %v3725 = vunpack.c.h.b16 %v3345
        %v3726 = vunpack.c.l.b16 %v3346
        %v3727 = vunpack.c.h.b16 %v3346
        %v3728 = vunpack.c.l.b16 %v3347
        %v3729 = vunpack.c.h.b16 %v3347
        %v3730 = vunpack.c.l.b16 %v3348
        %v3731 = vunpack.c.h.b16 %v3348
        %v3732 = vunpack.c.l.b16 %v3349
        %v3733 = vunpack.c.h.b16 %v3349
        %v3734 = vunpack.c.l.b16 %v3350
        %v3735 = vunpack.c.h.b16 %v3350
        %v3736 = vunpack.c.l.b16 %v3351
        %v3737 = vunpack.c.h.b16 %v3351
        %v3738 = vunpack.c.l.b16 %v3352
        %v3739 = vunpack.c.h.b16 %v3352
        %v3740 = vunpack.c.l.b16 %v3353
        %v3741 = vunpack.c.h.b16 %v3353
        %v3742 = vunpack.c.l.b16 %v3354
        %v3743 = vunpack.c.h.b16 %v3354
        %v3744 = vunpack.c.l.b16 %v3355
        %v3745 = vunpack.c.h.b16 %v3355
        %v3746 = vunpack.c.l.b16 %v3356
        %v3747 = vunpack.c.h.b16 %v3356
        %v3748 = vunpack.c.l.b16 %v3357
        %v3749 = vunpack.c.h.b16 %v3357
        %v3750 = vunpack.c.l.b16 %v3358
        %v3751 = vunpack.c.h.b16 %v3358
        %v3752 = vunpack.c.l.b16 %v3359
        %v3753 = vunpack.c.h.b16 %v3359
        %v3754 = vunpack.c.l.b16 %v3360
        %v3755 = vunpack.c.h.b16 %v3360
        %v3756 = vunpack.c.l.b16 %v3361
        %v3757 = vunpack.c.h.b16 %v3361
        %v3758 = vunpack.c.l.b16 %v3362
        %v3759 = vunpack.c.h.b16 %v3362
        %v3760 = vunpack.c.l.b16 %v3363
        %v3761 = vunpack.c.h.b16 %v3363
        %v3762 = vunpack.c.l.b16 %v3364
        %v3763 = vunpack.c.h.b16 %v3364
        %v3764 = vunpack.c.l.b16 %v3365
        %v3765 = vunpack.c.h.b16 %v3365
        %v3766 = vunpack.c.l.b16 %v3366
        %v3767 = vunpack.c.h.b16 %v3366
        %v3768 = vunpack.c.l.b16 %v3367
        %v3769 = vunpack.c.h.b16 %v3367
        %v3770 = vunpack.c.l.b16 %v3368
        %v3771 = vunpack.c.h.b16 %v3368
        %v3772 = vunpack.c.l.b16 %v3369
        %v3773 = vunpack.c.h.b16 %v3369
        %v3774 = vunpack.c.l.b16 %v3370
        %v3775 = vunpack.c.h.b16 %v3370
        %v3776 = vunpack.c.l.b16 %v3371
        %v3777 = vunpack.c.h.b16 %v3371
        %v3778 = vunpack.c.l.b16 %v3372
        %v3779 = vunpack.c.h.b16 %v3372
        %v3780 = vunpack.c.l.b16 %v3373
        %v3781 = vunpack.c.h.b16 %v3373
        %v3782 = vunpack.c.l.b16 %v3374
        %v3783 = vunpack.c.h.b16 %v3374
        %v3784 = vunpack.c.l.b16 %v3375
        %v3785 = vunpack.c.h.b16 %v3375
        %v3786 = vunpack.c.l.b16 %v3376
        %v3787 = vunpack.c.h.b16 %v3376
        %v3788 = vunpack.c.l.b16 %v3377
        %v3789 = vunpack.c.h.b16 %v3377
        %v3790 = vunpack.c.l.b16 %v3378
        %v3791 = vunpack.c.h.b16 %v3378
        %v3792 = vunpack.c.l.b16 %v3379
        %v3793 = vunpack.c.h.b16 %v3379
        %v3794 = vpack.c.b16 %v3542, %v3538
        %v3795 = vpack.c.b16 %v3543, %v3539
        %v3796 = vpack.c.b16 %v3544, %v3540
        %v3797 = vpack.c.b16 %v3545, %v3541
        %v3798 = vpack.c.b16 %v3550, %v3546
        %v3799 = vpack.c.b16 %v3551, %v3547
        %v3800 = vpack.c.b16 %v3552, %v3548
        %v3801 = vpack.c.b16 %v3553, %v3549
        %v3802 = vpack.c.b16 %v3558, %v3554
        %v3803 = vpack.c.b16 %v3559, %v3555
        %v3804 = vpack.c.b16 %v3560, %v3556
        %v3805 = vpack.c.b16 %v3561, %v3557
        %v3806 = vpack.c.b16 %v3566, %v3562
        %v3807 = vpack.c.b16 %v3567, %v3563
        %v3808 = vpack.c.b16 %v3568, %v3564
        %v3809 = vpack.c.b16 %v3569, %v3565
        %v3810 = vpack.c.b16 %v3574, %v3570
        %v3811 = vpack.c.b16 %v3575, %v3571
        %v3812 = vpack.c.b16 %v3576, %v3572
        %v3813 = vpack.c.b16 %v3577, %v3573
        %v3814 = vpack.c.b16 %v3582, %v3578
        %v3815 = vpack.c.b16 %v3583, %v3579
        %v3816 = vpack.c.b16 %v3584, %v3580
        %v3817 = vpack.c.b16 %v3585, %v3581
        %v3818 = vpack.c.b16 %v3590, %v3586
        %v3819 = vpack.c.b16 %v3591, %v3587
        %v3820 = vpack.c.b16 %v3592, %v3588
        %v3821 = vpack.c.b16 %v3593, %v3589
        %v3822 = vpack.c.b16 %v3598, %v3594
        %v3823 = vpack.c.b16 %v3599, %v3595
        %v3824 = vpack.c.b16 %v3600, %v3596
        %v3825 = vpack.c.b16 %v3601, %v3597
        %v3826 = vpack.c.b16 %v3606, %v3602
        %v3827 = vpack.c.b16 %v3607, %v3603
        %v3828 = vpack.c.b16 %v3608, %v3604
        %v3829 = vpack.c.b16 %v3609, %v3605
        %v3830 = vpack.c.b16 %v3614, %v3610
        %v3831 = vpack.c.b16 %v3615, %v3611
        %v3832 = vpack.c.b16 %v3616, %v3612
        %v3833 = vpack.c.b16 %v3617, %v3613
        %v3834 = vpack.c.b16 %v3622, %v3618
        %v3835 = vpack.c.b16 %v3623, %v3619
        %v3836 = vpack.c.b16 %v3624, %v3620
        %v3837 = vpack.c.b16 %v3625, %v3621
        %v3838 = vpack.c.b16 %v3630, %v3626
        %v3839 = vpack.c.b16 %v3631, %v3627
        %v3840 = vpack.c.b16 %v3632, %v3628
        %v3841 = vpack.c.b16 %v3633, %v3629
        %v3842 = vpack.c.b16 %v3638, %v3634
        %v3843 = vpack.c.b16 %v3639, %v3635
        %v3844 = vpack.c.b16 %v3640, %v3636
        %v3845 = vpack.c.b16 %v3641, %v3637
        %v3846 = vpack.c.b16 %v3646, %v3642
        %v3847 = vpack.c.b16 %v3647, %v3643
        %v3848 = vpack.c.b16 %v3648, %v3644
        %v3849 = vpack.c.b16 %v3649, %v3645
        %v3850 = vpack.c.b16 %v3654, %v3650
        %v3851 = vpack.c.b16 %v3655, %v3651
        %v3852 = vpack.c.b16 %v3656, %v3652
        %v3853 = vpack.c.b16 %v3657, %v3653
        %v3854 = vpack.c.b16 %v3662, %v3658
        %v3855 = vpack.c.b16 %v3663, %v3659
        %v3856 = vpack.c.b16 %v3664, %v3660
        %v3857 = vpack.c.b16 %v3665, %v3661
        %v3858 = vpack.c.b16 %v3670, %v3666
        %v3859 = vpack.c.b16 %v3671, %v3667
        %v3860 = vpack.c.b16 %v3672, %v3668
        %v3861 = vpack.c.b16 %v3673, %v3669
        %v3862 = vpack.c.b16 %v3678, %v3674
        %v3863 = vpack.c.b16 %v3679, %v3675
        %v3864 = vpack.c.b16 %v3680, %v3676
        %v3865 = vpack.c.b16 %v3681, %v3677
        %v3866 = vpack.c.b16 %v3686, %v3682
        %v3867 = vpack.c.b16 %v3687, %v3683
        %v3868 = vpack.c.b16 %v3688, %v3684
        %v3869 = vpack.c.b16 %v3689, %v3685
        %v3870 = vpack.c.b16 %v3694, %v3690
        %v3871 = vpack.c.b16 %v3695, %v3691
        %v3872 = vpack.c.b16 %v3696, %v3692
        %v3873 = vpack.c.b16 %v3697, %v3693
        %v3874 = vpack.c.b16 %v3702, %v3698
        %v3875 = vpack.c.b16 %v3703, %v3699
        %v3876 = vpack.c.b16 %v3704, %v3700
        %v3877 = vpack.c.b16 %v3705, %v3701
        %v3878 = vpack.c.b16 %v3710, %v3706
        %v3879 = vpack.c.b16 %v3711, %v3707
        %v3880 = vpack.c.b16 %v3712, %v3708
        %v3881 = vpack.c.b16 %v3713, %v3709
        %v3882 = vpack.c.b16 %v3718, %v3714
        %v3883 = vpack.c.b16 %v3719, %v3715
        %v3884 = vpack.c.b16 %v3720, %v3716
        %v3885 = vpack.c.b16 %v3721, %v3717
        %v3886 = vpack.c.b16 %v3726, %v3722
        %v3887 = vpack.c.b16 %v3727, %v3723
        %v3888 = vpack.c.b16 %v3728, %v3724
        %v3889 = vpack.c.b16 %v3729, %v3725
        %v3890 = vpack.c.b16 %v3734, %v3730
        %v3891 = vpack.c.b16 %v3735, %v3731
        %v3892 = vpack.c.b16 %v3736, %v3732
        %v3893 = vpack.c.b16 %v3737, %v3733
        %v3894 = vpack.c.b16 %v3742, %v3738
        %v3895 = vpack.c.b16 %v3743, %v3739
        %v3896 = vpack.c.b16 %v3744, %v3740
        %v3897 = vpack.c.b16 %v3745, %v3741
        %v3898 = vpack.c.b16 %v3750, %v3746
        %v3899 = vpack.c.b16 %v3751, %v3747
        %v3900 = vpack.c.b16 %v3752, %v3748
        %v3901 = vpack.c.b16 %v3753, %v3749
        %v3902 = vpack.c.b16 %v3758, %v3754
        %v3903 = vpack.c.b16 %v3759, %v3755
        %v3904 = vpack.c.b16 %v3760, %v3756
        %v3905 = vpack.c.b16 %v3761, %v3757
        %v3906 = vpack.c.b16 %v3766, %v3762
        %v3907 = vpack.c.b16 %v3767, %v3763
        %v3908 = vpack.c.b16 %v3768, %v3764
        %v3909 = vpack.c.b16 %v3769, %v3765
        %v3910 = vpack.c.b16 %v3774, %v3770
        %v3911 = vpack.c.b16 %v3775, %v3771
        %v3912 = vpack.c.b16 %v3776, %v3772
        %v3913 = vpack.c.b16 %v3777, %v3773
        %v3914 = vpack.c.b16 %v3782, %v3778
        %v3915 = vpack.c.b16 %v3783, %v3779
        %v3916 = vpack.c.b16 %v3784, %v3780
        %v3917 = vpack.c.b16 %v3785, %v3781
        %v3918 = vpack.c.b16 %v3790, %v3786
        %v3919 = vpack.c.b16 %v3791, %v3787
        %v3920 = vpack.c.b16 %v3792, %v3788
        %v3921 = vpack.c.b16 %v3793, %v3789
        %v4051 = vlaneseq
        %v4052 = vshrl.u32 %v4051, 7
        %v4053 = vsub.s32 0, %v4052
        %v4054 = vrot.slane %v3380, %v4053
        %v4055 = vlaneseq
        %v4056 = vshrl.u32 %v4055, 7
        %v4057 = vsub.s32 1, %v4056
        %v4058 = vrot.slane %v3380, %v4057
        %v4059 = vlaneseq
        %v4060 = vshrl.u32 %v4059, 7
        %v4061 = vsub.s32 2, %v4060
        %v4062 = vrot.slane %v3380, %v4061
        %v4063 = vlaneseq
        %v4064 = vshrl.u32 %v4063, 7
        %v4065 = vsub.s32 3, %v4064
        %v4066 = vrot.slane %v3380, %v4065
        %4071 = vmatprep.subr.bf16.mxu0 %v3823
        %4072 = vmatpush1.bf16.msra.mxu0 %v3822
        %4073 = vmatprep.subr.bf16.mxu0 %v3819
        %4074 = vmatpush1.bf16.msra.mxu0 %v3818
        %4075 = vmatprep.subr.bf16.mxu0 %v3815
        %4076 = vmatpush1.bf16.msra.mxu0 %v3814
        %4077 = vmatprep.subr.bf16.mxu0 %v3811
        %4078 = vmatpush1.bf16.msra.mxu0 %v3810
        %4079 = vmatprep.subr.bf16.mxu0 %v3807
        %4080 = vmatpush1.bf16.msra.mxu0 %v3806
        %4081 = vmatprep.subr.bf16.mxu0 %v3803
        %4082 = vmatpush1.bf16.msra.mxu0 %v3802
        %4083 = vmatprep.subr.bf16.mxu0 %v3799
        %4084 = vmatpush1.bf16.msra.mxu0 %v3798
        %4085 = vmatprep.subr.bf16.mxu0 %v3795
        %4086 = vmatpush1.bf16.msra.mxu0 %v3794
        %4087 = vmatprep.subr.bf16.mxu0 %v3855
        %4088 = vmatpush2.bf16.msra.mxu0 %v3854
        %4089 = vmatprep.subr.bf16.mxu0 %v3851
        %4090 = vmatpush2.bf16.msra.mxu0 %v3850
        %4091 = vmatprep.subr.bf16.mxu0 %v3847
        %4092 = vmatpush2.bf16.msra.mxu0 %v3846
        %4093 = vmatprep.subr.bf16.mxu0 %v3843
        %4094 = vmatpush2.bf16.msra.mxu0 %v3842
        %4095 = vmatprep.subr.bf16.mxu0 %v3839
        %4096 = vmatpush2.bf16.msra.mxu0 %v3838
        %4097 = vmatprep.subr.bf16.mxu0 %v3835
        %4098 = vmatpush2.bf16.msra.mxu0 %v3834
        %4099 = vmatprep.subr.bf16.mxu0 %v3831
        %4100 = vmatpush2.bf16.msra.mxu0 %v3830
        %4101 = vmatprep.subr.bf16.mxu0 %v3827
        %4102 = vmatpush2.bf16.msra.mxu0 %v3826
        %4103 = vmatprep.mubr.bf16.mxu0 %v3403
        %4104 = vmatmul.mubr.bf16.gmra.mxu0 %v3396
        %v4105 = vpop.f32.mrf.mxu0
        %v4106 = vadd.f32 %v4054, %v4105
        %v4107 = vpop.f32.mrf.mxu0
        %v4108 = vadd.f32 %v4058, %v4107
        %v4109 = vpop.f32.mrf.mxu0
        %v4110 = vpop.f32.mrf.mxu0
        %4111 = vdwg.mxu0
        %4112 = vmatprep.subr.bf16.mxu0 %v3887
        %4113 = vmatpush1.bf16.msra.mxu0 %v3886
        %4114 = vmatprep.subr.bf16.mxu0 %v3883
        %4115 = vmatpush1.bf16.msra.mxu0 %v3882
        %4116 = vmatprep.subr.bf16.mxu0 %v3879
        %4117 = vmatpush1.bf16.msra.mxu0 %v3878
        %4118 = vmatprep.subr.bf16.mxu0 %v3875
        %4119 = vmatpush1.bf16.msra.mxu0 %v3874
        %4120 = vmatprep.subr.bf16.mxu0 %v3871
        %4121 = vmatpush1.bf16.msra.mxu0 %v3870
        %4122 = vmatprep.subr.bf16.mxu0 %v3867
        %4123 = vmatpush1.bf16.msra.mxu0 %v3866
        %4124 = vmatprep.subr.bf16.mxu0 %v3863
        %4125 = vmatpush1.bf16.msra.mxu0 %v3862
        %4126 = vmatprep.subr.bf16.mxu0 %v3859
        %4127 = vmatpush1.bf16.msra.mxu0 %v3858
        %4128 = vmatprep.subr.bf16.mxu0 %v3919
        %4129 = vmatpush2.bf16.msra.mxu0 %v3918
        %4130 = vmatprep.subr.bf16.mxu0 %v3915
        %4131 = vmatpush2.bf16.msra.mxu0 %v3914
        %4132 = vmatprep.subr.bf16.mxu0 %v3911
        %4133 = vmatpush2.bf16.msra.mxu0 %v3910
        %4134 = vmatprep.subr.bf16.mxu0 %v3907
        %4135 = vmatpush2.bf16.msra.mxu0 %v3906
        %4136 = vmatprep.subr.bf16.mxu0 %v3903
        %4137 = vmatpush2.bf16.msra.mxu0 %v3902
        %4138 = vmatprep.subr.bf16.mxu0 %v3899
        %4139 = vmatpush2.bf16.msra.mxu0 %v3898
        %4140 = vmatprep.subr.bf16.mxu0 %v3895
        %4141 = vmatpush2.bf16.msra.mxu0 %v3894
        %4142 = vmatprep.subr.bf16.mxu0 %v3891
        %4143 = vmatpush2.bf16.msra.mxu0 %v3890
        %4144 = vmatprep.mubr.bf16.mxu0 %v3405
        %4145 = vmatmul.mubr.bf16.gmra.mxu0 %v3404
        %v4146 = vpop.f32.mrf.mxu0
        %v4147 = vadd.f32 %v4106, %v4146
        %v4148 = vpop.f32.mrf.mxu0
        %v4149 = vadd.f32 %v4108, %v4148
        %v4150 = vpop.f32.mrf.mxu0
        %v4151 = vpop.f32.mrf.mxu0
        %4152 = vdwg.mxu0
        %4153 = vmatprep.subr.bf16.mxu0 %v3825
        %4154 = vmatpush1.bf16.msra.mxu0 %v3824
        %4155 = vmatprep.subr.bf16.mxu0 %v3821
        %4156 = vmatpush1.bf16.msra.mxu0 %v3820
        %4157 = vmatprep.subr.bf16.mxu0 %v3817
        %4158 = vmatpush1.bf16.msra.mxu0 %v3816
        %4159 = vmatprep.subr.bf16.mxu0 %v3813
        %4160 = vmatpush1.bf16.msra.mxu0 %v3812
        %4161 = vmatprep.subr.bf16.mxu0 %v3809
        %4162 = vmatpush1.bf16.msra.mxu0 %v3808
        %4163 = vmatprep.subr.bf16.mxu0 %v3805
        %4164 = vmatpush1.bf16.msra.mxu0 %v3804
        %4165 = vmatprep.subr.bf16.mxu0 %v3801
        %4166 = vmatpush1.bf16.msra.mxu0 %v3800
        %4167 = vmatprep.subr.bf16.mxu0 %v3797
        %4168 = vmatpush1.bf16.msra.mxu0 %v3796
        %4169 = vmatprep.subr.bf16.mxu0 %v3857
        %4170 = vmatpush2.bf16.msra.mxu0 %v3856
        %4171 = vmatprep.subr.bf16.mxu0 %v3853
        %4172 = vmatpush2.bf16.msra.mxu0 %v3852
        %4173 = vmatprep.subr.bf16.mxu0 %v3849
        %4174 = vmatpush2.bf16.msra.mxu0 %v3848
        %4175 = vmatprep.subr.bf16.mxu0 %v3845
        %4176 = vmatpush2.bf16.msra.mxu0 %v3844
        %4177 = vmatprep.subr.bf16.mxu0 %v3841
        %4178 = vmatpush2.bf16.msra.mxu0 %v3840
        %4179 = vmatprep.subr.bf16.mxu0 %v3837
        %4180 = vmatpush2.bf16.msra.mxu0 %v3836
        %4181 = vmatprep.subr.bf16.mxu0 %v3833
        %4182 = vmatpush2.bf16.msra.mxu0 %v3832
        %4183 = vmatprep.subr.bf16.mxu0 %v3829
        %4184 = vmatpush2.bf16.msra.mxu0 %v3828
        %4185 = vmatprep.mubr.bf16.mxu0 %v3403
        %4186 = vmatmul.mubr.bf16.gmra.mxu0 %v3396
        %v4187 = vpop.f32.mrf.mxu0
        %v4188 = vadd.f32 %v4062, %v4187
        %v4189 = vpop.f32.mrf.mxu0
        %v4190 = vadd.f32 %v4066, %v4189
        %v4191 = vpop.f32.mrf.mxu0
        %v4192 = vpop.f32.mrf.mxu0
        %4193 = vdwg.mxu0
        %4194 = vmatprep.subr.bf16.mxu0 %v3889
        %4195 = vmatpush1.bf16.msra.mxu0 %v3888
        %4196 = vmatprep.subr.bf16.mxu0 %v3885
        %4197 = vmatpush1.bf16.msra.mxu0 %v3884
        %4198 = vmatprep.subr.bf16.mxu0 %v3881
        %4199 = vmatpush1.bf16.msra.mxu0 %v3880
        %4200 = vmatprep.subr.bf16.mxu0 %v3877
        %4201 = vmatpush1.bf16.msra.mxu0 %v3876
        %4202 = vmatprep.subr.bf16.mxu0 %v3873
        %4203 = vmatpush1.bf16.msra.mxu0 %v3872
        %4204 = vmatprep.subr.bf16.mxu0 %v3869
        %4205 = vmatpush1.bf16.msra.mxu0 %v3868
        %4206 = vmatprep.subr.bf16.mxu0 %v3865
        %4207 = vmatpush1.bf16.msra.mxu0 %v3864
        %4208 = vmatprep.subr.bf16.mxu0 %v3861
        %4209 = vmatpush1.bf16.msra.mxu0 %v3860
        %4210 = vmatprep.subr.bf16.mxu0 %v3921
        %4211 = vmatpush2.bf16.msra.mxu0 %v3920
        %4212 = vmatprep.subr.bf16.mxu0 %v3917
        %4213 = vmatpush2.bf16.msra.mxu0 %v3916
        %4214 = vmatprep.subr.bf16.mxu0 %v3913
        %4215 = vmatpush2.bf16.msra.mxu0 %v3912
        %4216 = vmatprep.subr.bf16.mxu0 %v3909
        %4217 = vmatpush2.bf16.msra.mxu0 %v3908
        %4218 = vmatprep.subr.bf16.mxu0 %v3905
        %4219 = vmatpush2.bf16.msra.mxu0 %v3904
        %4220 = vmatprep.subr.bf16.mxu0 %v3901
        %4221 = vmatpush2.bf16.msra.mxu0 %v3900
        %4222 = vmatprep.subr.bf16.mxu0 %v3897
        %4223 = vmatpush2.bf16.msra.mxu0 %v3896
        %4224 = vmatprep.subr.bf16.mxu0 %v3893
        %4225 = vmatpush2.bf16.msra.mxu0 %v3892
        %4226 = vmatprep.mubr.bf16.mxu0 %v3405
        %4227 = vmatmul.mubr.bf16.gmra.mxu0 %v3404
        %v4228 = vpop.f32.mrf.mxu0
        %v4229 = vadd.f32 %v4188, %v4228
        %v4230 = vpop.f32.mrf.mxu0
        %v4231 = vadd.f32 %v4190, %v4230
        %v4232 = vpop.f32.mrf.mxu0
        %v4233 = vpop.f32.mrf.mxu0
        %4234 = vdwg.mxu0
        %v4235 = vmax.f32 %v4147, 0.0
        %v4236 = vmax.f32 %v4149, 0.0
        %v4237 = vmax.f32 %v4229, 0.0
        %v4238 = vmax.f32 %v4231, 0.0
        %v4239 = vpack.c.bf16 %v4235, %v4235
        %v4240 = vpack.c.bf16 %v4236, %v4236
        %v4241 = vpack.c.bf16 %v4237, %v4237
        %v4242 = vpack.c.bf16 %v4238, %v4238
        %v4243 = vld [vmem:[%s9] sm:$0xf]
        %v4244 = vld [vmem:[%s9 + $0x4] sm:$0xf]
        %v4245 = vld [vmem:[%s9 + $0x8] sm:$0xf]
        %v4246 = vld [vmem:[%s9 + $0xc] sm:$0xf]
        %v4247 = vld [vmem:[%s9 + $0x10] sm:$0xf]
        %v4248 = vld [vmem:[%s9 + $0x14] sm:$0xf]
        %v4249 = vld [vmem:[%s9 + $0x18] sm:$0xf]
        %v4250 = vld [vmem:[%s9 + $0x1c] sm:$0xf]
        %v4251 = vld [vmem:[%s9 + $0x20] sm:$0xf]
        %v4252 = vld [vmem:[%s9 + $0x24] sm:$0xf]
        %v4253 = vld [vmem:[%s9 + $0x28] sm:$0xf]
        %v4254 = vld [vmem:[%s9 + $0x2c] sm:$0xf]
        %v4255 = vld [vmem:[%s9 + $0x30] sm:$0xf]
        %v4256 = vld [vmem:[%s9 + $0x34] sm:$0xf]
        %v4257 = vld [vmem:[%s9 + $0x38] sm:$0xf]
        %v4258 = vld [vmem:[%s9 + $0x3c] sm:$0xf]
        %v4259 = vld [vmem:[%s9 + $0x40] sm:$0xf]
        %v4260 = vld [vmem:[%s9 + $0x44] sm:$0xf]
        %v4261 = vld [vmem:[%s9 + $0x48] sm:$0xf]
        %v4262 = vld [vmem:[%s9 + $0x4c] sm:$0xf]
        %v4263 = vld [vmem:[%s9 + $0x50] sm:$0xf]
        %v4264 = vld [vmem:[%s9 + $0x54] sm:$0xf]
        %v4265 = vld [vmem:[%s9 + $0x58] sm:$0xf]
        %v4266 = vld [vmem:[%s9 + $0x5c] sm:$0xf]
        %v4267 = vld [vmem:[%s9 + $0x60] sm:$0xf]
        %v4268 = vld [vmem:[%s9 + $0x64] sm:$0xf]
        %v4269 = vld [vmem:[%s9 + $0x68] sm:$0xf]
        %v4270 = vld [vmem:[%s9 + $0x6c] sm:$0xf]
        %v4271 = vld [vmem:[%s9 + $0x70] sm:$0xf]
        %v4272 = vld [vmem:[%s9 + $0x74] sm:$0xf]
        %v4273 = vld [vmem:[%s9 + $0x78] sm:$0xf]
        %v4274 = vld [vmem:[%s9 + $0x7c] sm:$0xf]
        %v4275 = vld [vmem:[%s9 + $0x80] sm:$0xf]
        %v4276 = vld [vmem:[%s9 + $0x84] sm:$0xf]
        %v4277 = vld [vmem:[%s9 + $0x88] sm:$0xf]
        %v4278 = vld [vmem:[%s9 + $0x8c] sm:$0xf]
        %v4279 = vld [vmem:[%s9 + $0x90] sm:$0xf]
        %v4280 = vld [vmem:[%s9 + $0x94] sm:$0xf]
        %v4281 = vld [vmem:[%s9 + $0x98] sm:$0xf]
        %v4282 = vld [vmem:[%s9 + $0x9c] sm:$0xf]
        %v4283 = vld [vmem:[%s9 + $0xa0] sm:$0xf]
        %v4284 = vld [vmem:[%s9 + $0xa4] sm:$0xf]
        %v4285 = vld [vmem:[%s9 + $0xa8] sm:$0xf]
        %v4286 = vld [vmem:[%s9 + $0xac] sm:$0xf]
        %v4287 = vld [vmem:[%s9 + $0xb0] sm:$0xf]
        %v4288 = vld [vmem:[%s9 + $0xb4] sm:$0xf]
        %v4289 = vld [vmem:[%s9 + $0xb8] sm:$0xf]
        %v4290 = vld [vmem:[%s9 + $0xbc] sm:$0xf]
        %v4291 = vld [vmem:[%s9 + $0xc0] sm:$0xf]
        %v4292 = vld [vmem:[%s9 + $0xc4] sm:$0xf]
        %v4293 = vld [vmem:[%s9 + $0xc8] sm:$0xf]
        %v4294 = vld [vmem:[%s9 + $0xcc] sm:$0xf]
        %v4295 = vld [vmem:[%s9 + $0xd0] sm:$0xf]
        %v4296 = vld [vmem:[%s9 + $0xd4] sm:$0xf]
        %v4297 = vld [vmem:[%s9 + $0xd8] sm:$0xf]
        %v4298 = vld [vmem:[%s9 + $0xdc] sm:$0xf]
        %v4299 = vld [vmem:[%s9 + $0xe0] sm:$0xf]
        %v4300 = vld [vmem:[%s9 + $0xe4] sm:$0xf]
        %v4301 = vld [vmem:[%s9 + $0xe8] sm:$0xf]
        %v4302 = vld [vmem:[%s9 + $0xec] sm:$0xf]
        %v4303 = vld [vmem:[%s9 + $0xf0] sm:$0xf]
        %v4304 = vld [vmem:[%s9 + $0xf4] sm:$0xf]
        %v4305 = vld [vmem:[%s9 + $0xf8] sm:$0xf]
        %v4306 = vld [vmem:[%s9 + $0xfc] sm:$0xf]
        %v4307 = vld [vmem:[%s10] sm:$0x1]
        %v4372 = vunpack.c.l.b16 %v4243
        %v4373 = vunpack.c.l.b16 %v4244
        %v4374 = vunpack.c.l.b16 %v4245
        %v4375 = vunpack.c.l.b16 %v4246
        %v4376 = vunpack.c.l.b16 %v4247
        %v4377 = vunpack.c.l.b16 %v4248
        %v4378 = vunpack.c.l.b16 %v4249
        %v4379 = vunpack.c.l.b16 %v4250
        %v4380 = vunpack.c.l.b16 %v4251
        %v4381 = vunpack.c.l.b16 %v4252
        %v4382 = vunpack.c.l.b16 %v4253
        %v4383 = vunpack.c.l.b16 %v4254
        %v4384 = vunpack.c.l.b16 %v4255
        %v4385 = vunpack.c.l.b16 %v4256
        %v4386 = vunpack.c.l.b16 %v4257
        %v4387 = vunpack.c.l.b16 %v4258
        %v4388 = vunpack.c.l.b16 %v4259
        %v4389 = vunpack.c.l.b16 %v4260
        %v4390 = vunpack.c.l.b16 %v4261
        %v4391 = vunpack.c.l.b16 %v4262
        %v4392 = vunpack.c.l.b16 %v4263
        %v4393 = vunpack.c.l.b16 %v4264
        %v4394 = vunpack.c.l.b16 %v4265
        %v4395 = vunpack.c.l.b16 %v4266
        %v4396 = vunpack.c.l.b16 %v4267
        %v4397 = vunpack.c.l.b16 %v4268
        %v4398 = vunpack.c.l.b16 %v4269
        %v4399 = vunpack.c.l.b16 %v4270
        %v4400 = vunpack.c.l.b16 %v4271
        %v4401 = vunpack.c.l.b16 %v4272
        %v4402 = vunpack.c.l.b16 %v4273
        %v4403 = vunpack.c.l.b16 %v4274
        %v4404 = vunpack.c.l.b16 %v4275
        %v4405 = vunpack.c.l.b16 %v4276
        %v4406 = vunpack.c.l.b16 %v4277
        %v4407 = vunpack.c.l.b16 %v4278
        %v4408 = vunpack.c.l.b16 %v4279
        %v4409 = vunpack.c.l.b16 %v4280
        %v4410 = vunpack.c.l.b16 %v4281
        %v4411 = vunpack.c.l.b16 %v4282
        %v4412 = vunpack.c.l.b16 %v4283
        %v4413 = vunpack.c.l.b16 %v4284
        %v4414 = vunpack.c.l.b16 %v4285
        %v4415 = vunpack.c.l.b16 %v4286
        %v4416 = vunpack.c.l.b16 %v4287
        %v4417 = vunpack.c.l.b16 %v4288
        %v4418 = vunpack.c.l.b16 %v4289
        %v4419 = vunpack.c.l.b16 %v4290
        %v4420 = vunpack.c.l.b16 %v4291
        %v4421 = vunpack.c.l.b16 %v4292
        %v4422 = vunpack.c.l.b16 %v4293
        %v4423 = vunpack.c.l.b16 %v4294
        %v4424 = vunpack.c.l.b16 %v4295
        %v4425 = vunpack.c.l.b16 %v4296
        %v4426 = vunpack.c.l.b16 %v4297
        %v4427 = vunpack.c.l.b16 %v4298
        %v4428 = vunpack.c.l.b16 %v4299
        %v4429 = vunpack.c.l.b16 %v4300
        %v4430 = vunpack.c.l.b16 %v4301
        %v4431 = vunpack.c.l.b16 %v4302
        %v4432 = vunpack.c.l.b16 %v4303
        %v4433 = vunpack.c.l.b16 %v4304
        %v4434 = vunpack.c.l.b16 %v4305
        %v4435 = vunpack.c.l.b16 %v4306
        %v4436 = vpack.c.b16 %v4373, %v4372
        %v4437 = vpack.c.b16 %v4375, %v4374
        %v4438 = vpack.c.b16 %v4377, %v4376
        %v4439 = vpack.c.b16 %v4379, %v4378
        %v4440 = vpack.c.b16 %v4381, %v4380
        %v4441 = vpack.c.b16 %v4383, %v4382
        %v4442 = vpack.c.b16 %v4385, %v4384
        %v4443 = vpack.c.b16 %v4387, %v4386
        %v4444 = vpack.c.b16 %v4389, %v4388
        %v4445 = vpack.c.b16 %v4391, %v4390
        %v4446 = vpack.c.b16 %v4393, %v4392
        %v4447 = vpack.c.b16 %v4395, %v4394
        %v4448 = vpack.c.b16 %v4397, %v4396
        %v4449 = vpack.c.b16 %v4399, %v4398
        %v4450 = vpack.c.b16 %v4401, %v4400
        %v4451 = vpack.c.b16 %v4403, %v4402
        %v4452 = vpack.c.b16 %v4405, %v4404
        %v4453 = vpack.c.b16 %v4407, %v4406
        %v4454 = vpack.c.b16 %v4409, %v4408
        %v4455 = vpack.c.b16 %v4411, %v4410
        %v4456 = vpack.c.b16 %v4413, %v4412
        %v4457 = vpack.c.b16 %v4415, %v4414
        %v4458 = vpack.c.b16 %v4417, %v4416
        %v4459 = vpack.c.b16 %v4419, %v4418
        %v4460 = vpack.c.b16 %v4421, %v4420
        %v4461 = vpack.c.b16 %v4423, %v4422
        %v4462 = vpack.c.b16 %v4425, %v4424
        %v4463 = vpack.c.b16 %v4427, %v4426
        %v4464 = vpack.c.b16 %v4429, %v4428
        %v4465 = vpack.c.b16 %v4431, %v4430
        %v4466 = vpack.c.b16 %v4433, %v4432
        %v4467 = vpack.c.b16 %v4435, %v4434
        %4500 = vmatprep.subr.bf16.mxu0 0
        %4501 = vmatpush1.bf16.msra.mxu0 %v4443
        %4502 = vmatprep.subr.bf16.mxu0 0
        %4503 = vmatpush1.bf16.msra.mxu0 %v4442
        %4504 = vmatprep.subr.bf16.mxu0 0
        %4505 = vmatpush1.bf16.msra.mxu0 %v4441
        %4506 = vmatprep.subr.bf16.mxu0 0
        %4507 = vmatpush1.bf16.msra.mxu0 %v4440
        %4508 = vmatprep.subr.bf16.mxu0 0
        %4509 = vmatpush1.bf16.msra.mxu0 %v4439
        %4510 = vmatprep.subr.bf16.mxu0 0
        %4511 = vmatpush1.bf16.msra.mxu0 %v4438
        %4512 = vmatprep.subr.bf16.mxu0 0
        %4513 = vmatpush1.bf16.msra.mxu0 %v4437
        %4514 = vmatprep.subr.bf16.mxu0 0
        %4515 = vmatpush1.bf16.msra.mxu0 %v4436
        %4516 = vmatprep.subr.bf16.mxu0 0
        %4517 = vmatpush2.bf16.msra.mxu0 %v4451
        %4518 = vmatprep.subr.bf16.mxu0 0
        %4519 = vmatpush2.bf16.msra.mxu0 %v4450
        %4520 = vmatprep.subr.bf16.mxu0 0
        %4521 = vmatpush2.bf16.msra.mxu0 %v4449
        %4522 = vmatprep.subr.bf16.mxu0 0
        %4523 = vmatpush2.bf16.msra.mxu0 %v4448
        %4524 = vmatprep.subr.bf16.mxu0 0
        %4525 = vmatpush2.bf16.msra.mxu0 %v4447
        %4526 = vmatprep.subr.bf16.mxu0 0
        %4527 = vmatpush2.bf16.msra.mxu0 %v4446
        %4528 = vmatprep.subr.bf16.mxu0 0
        %4529 = vmatpush2.bf16.msra.mxu0 %v4445
        %4530 = vmatprep.subr.bf16.mxu0 0
        %4531 = vmatpush2.bf16.msra.mxu0 %v4444
        %4532 = vmatprep.mubr.bf16.mxu0 %v4240
        %4533 = vmatmul.mubr.bf16.gmra.mxu0 %v4239
        %v4534 = vpop.f32.mrf.mxu0
        %v4535 = vadd.f32 %v4307, %v4534
        %v4536 = vpop.f32.mrf.mxu0
        %v4537 = vpop.f32.mrf.mxu0
        %v4538 = vpop.f32.mrf.mxu0
        %4539 = vdwg.mxu0
        %4540 = vmatprep.subr.bf16.mxu0 0
        %4541 = vmatpush1.bf16.msra.mxu0 %v4459
        %4542 = vmatprep.subr.bf16.mxu0 0
        %4543 = vmatpush1.bf16.msra.mxu0 %v4458
        %4544 = vmatprep.subr.bf16.mxu0 0
        %4545 = vmatpush1.bf16.msra.mxu0 %v4457
        %4546 = vmatprep.subr.bf16.mxu0 0
        %4547 = vmatpush1.bf16.msra.mxu0 %v4456
        %4548 = vmatprep.subr.bf16.mxu0 0
        %4549 = vmatpush1.bf16.msra.mxu0 %v4455
        %4550 = vmatprep.subr.bf16.mxu0 0
        %4551 = vmatpush1.bf16.msra.mxu0 %v4454
        %4552 = vmatprep.subr.bf16.mxu0 0
        %4553 = vmatpush1.bf16.msra.mxu0 %v4453
        %4554 = vmatprep.subr.bf16.mxu0 0
        %4555 = vmatpush1.bf16.msra.mxu0 %v4452
        %4556 = vmatprep.subr.bf16.mxu0 0
        %4557 = vmatpush2.bf16.msra.mxu0 %v4467
        %4558 = vmatprep.subr.bf16.mxu0 0
        %4559 = vmatpush2.bf16.msra.mxu0 %v4466
        %4560 = vmatprep.subr.bf16.mxu0 0
        %4561 = vmatpush2.bf16.msra.mxu0 %v4465
        %4562 = vmatprep.subr.bf16.mxu0 0
        %4563 = vmatpush2.bf16.msra.mxu0 %v4464
        %4564 = vmatprep.subr.bf16.mxu0 0
        %4565 = vmatpush2.bf16.msra.mxu0 %v4463
        %4566 = vmatprep.subr.bf16.mxu0 0
        %4567 = vmatpush2.bf16.msra.mxu0 %v4462
        %4568 = vmatprep.subr.bf16.mxu0 0
        %4569 = vmatpush2.bf16.msra.mxu0 %v4461
        %4570 = vmatprep.subr.bf16.mxu0 0
        %4571 = vmatpush2.bf16.msra.mxu0 %v4460
        %4572 = vmatprep.mubr.bf16.mxu0 %v4242
        %4573 = vmatmul.mubr.bf16.gmra.mxu0 %v4241
        %v4574 = vpop.f32.mrf.mxu0
        %v4575 = vadd.f32 %v4535, %v4574
        %v4576 = vpop.f32.mrf.mxu0
        %v4577 = vpop.f32.mrf.mxu0
        %v4578 = vpop.f32.mrf.mxu0
        %4579 = vdwg.mxu0
        %vm4580 = vcmask 73728
        %4581 = vst.msk [vmem:[%s378] sm:$0x1] %vm4580, %v4575
        %s4582 = sand.u32 %s269, 1
        %s4583 = scalar_lea.sflag [#allocation6], %s4582
        %s4584 = sand.u32 %s269, 1
        %s4585 = scalar_lea.vmem [#allocation5], %s4584
        // Predicated region
        $region65: #{cnn_forward.1} parent=63 // pred_check
          %p4586 = pneg %p279
        $region66: #{cnn_forward.1} parent=63 // pred_check_branch
          %4588 = sbr.rel (%p4586) target = $region68
        $region67: #{cnn_forward.1} parent=63 // pred_region
          %s4590 = ssub.s32 16, 16
          %4591 = vsyncadd %s4583, %s4590
          %s4592 = smul.addr %s25, 16
          %s4593 = scalar_lea.hbm %s11, %s4592
          %s4595 = sshll.u32 %s4585, 4
          %s4596 = int_to_ptr.vmem [resolvable:$true] %s4595
          %4598 = dma.vmem_to_hbm [thread:$0]  %s4596, 16, %s4593, %s4583
        $region68: #{cnn_forward.1} parent=63 // pred_fallthru
          _
      $region64: #{cnn_forward.1} parent=5 // pred_fallthru
        _
      %p4599 = scmp.le.s32.totalorder 2, %s20
      // Predicated region
      $region69: #{cnn_forward.1} parent=5 // pred_check
        %p4600 = pneg %p4599
      $region70: #{cnn_forward.1} parent=5 // pred_check_branch
        %4602 = sbr.rel (%p4600) target = $region72
      $region71: #{cnn_forward.1} parent=5 // pred_region
        %s4603 = ssub.s32 %s20, 2
        // Predicated region
        $region73: #{cnn_forward.1} parent=71 // pred_check
          %p4604 = pneg %p285
        $region74: #{cnn_forward.1} parent=71 // pred_check_branch
          %4606 = sbr.rel (%p4604) target = $region76
        $region75: #{cnn_forward.1} parent=71 // pred_region
          %s4607 = sand.u32 %s270, 1
          %s4608 = scalar_lea.sflag [#allocation6], %s4607
          %s4609 = sand.u32 %s270, 1
          %s4610 = scalar_lea.vmem [#allocation5], %s4609
          %4611 = dma.done %s4608, 16
        $region76: #{cnn_forward.1} parent=71 // pred_fallthru
          _
      $region72: #{cnn_forward.1} parent=5 // pred_fallthru
        _
    $region6: #{cnn_forward.1} parent=1 // loop_footer
      %s24 = sadd.s32 1, %s20
    $region7: #{cnn_forward.1} parent=1 // loop_footer_branch
      %19 = sbr.rel target = $region3
    $region8: #{cnn_forward.1} parent=1 // loop_exit
      _
    %4612 = vsyncpa [#allocation6], 1
    %s4613 = scalar_lea.sflag [#allocation6], 1
    %4614 = vsyncpa %s4613, 1

</llo_original>
